<compile_context>
chip_gen: v7x
topology: tpu7x:2x2x1
jax: 0.10.0
libtpu: 0.0.40
codegen_flags: <defaults>
</compile_context>

<pallas_src>
import functools

import jax
import jax.numpy as jnp
from jax.experimental import pallas as pl
from jax.experimental.pallas import tpu as pltpu

NEG_SLOPE = 0.01  # torch.nn.LeakyReLU() default negative_slope


def _round_up(x, m):
    return -(-x // m) * m


def _leaky_relu(v):
    return jnp.where(v > 0, v, NEG_SLOPE * v)


def _mlp_kernel(x_ref,
                w1_ref, b1_ref, w2_ref, b2_ref, w3_ref, b3_ref,
                w4_ref, b4_ref, w5_ref, b5_ref,
                out_ref, *, n_classes):
    def dense(h, w_ref, b_ref):
        # bf16 operands into the MXU, f32 accumulation; bias add in f32 on the VPU.
        y = jnp.dot(h.astype(w_ref.dtype), w_ref[...],
                    preferred_element_type=jnp.float32)
        return y + b_ref[...]

    h = x_ref[...].astype(jnp.float32)
    h = _leaky_relu(dense(h, w1_ref, b1_ref))
    h = _leaky_relu(dense(h, w2_ref, b2_ref))
    h = _leaky_relu(dense(h, w3_ref, b3_ref))
    h = _leaky_relu(dense(h, w4_ref, b4_ref))
    logits = dense(h, w5_ref, b5_ref)                     # (TB, CPAD) lane-dense

    # Mask the padded class columns out of the softmax (exp(-inf) == 0).
    col = jax.lax.broadcasted_iota(jnp.int32, logits.shape, 1)
    logits = jnp.where(col < n_classes, logits, -jnp.inf)

    m = jnp.max(logits, axis=-1, keepdims=True)
    e = jnp.exp(logits - m)
    out = e / jnp.sum(e, axis=-1, keepdims=True)
    out_ref[...] = out.astype(out_ref.dtype)              # unmasked 128-lane store


def mlp_forward(x, params, n_classes, *, batch_tile=128):
    """x: (B, indim) float32. params: pre-transposed (in, out) bf16 weights + f32 biases."""
    w1, b1, w2, b2, w3, b3, w4, b4, w5, b5 = params
    B, indim = x.shape
    cpad = w5.shape[1]                                     # classes padded to >=128

    tb = min(batch_tile, B)
    b_pad = _round_up(B, tb)
    if b_pad != B:
        x = jnp.pad(x, ((0, b_pad - B), (0, 0)))
    grid = (b_pad // tb,)

    def resident(a):  # whole array, same block every grid step -> loaded once
        return pl.BlockSpec(a.shape, lambda i: (0,) * a.ndim)

    flops = 2 * b_pad * (indim * 1024 + 1024 * 512 + 512 * 256
                         + 256 * 128 + 128 * cpad)
    bytes_accessed = (x.size * x.dtype.itemsize
                      + sum(p.size * p.dtype.itemsize for p in params)
                      + b_pad * cpad * 4)

    kernel = functools.partial(_mlp_kernel, n_classes=n_classes)

    out = pl.pallas_call(
        kernel,
        out_shape=jax.ShapeDtypeStruct((b_pad, cpad), jnp.float32),
        grid=grid,
        in_specs=[pl.BlockSpec((tb, indim), lambda i: (i, 0)),
                  resident(w1), resident(b1),
                  resident(w2), resident(b2),
                  resident(w3), resident(b3),
                  resident(w4), resident(b4),
                  resident(w5), resident(b5)],
        out_specs=pl.BlockSpec((tb, cpad), lambda i: (i, 0)),
        compiler_params=pltpu.CompilerParams(
            dimension_semantics=("parallel",)),          # 2 TCs on v7x
        cost_estimate=pl.CostEstimate(flops=flops,
                                      transcendentals=b_pad * cpad,
                                      bytes_accessed=bytes_accessed),
    )(x, *params)

    return out[:B, :n_classes]


def init_params(key, indim, n_classes, cpad):
    """Deterministic synthetic params. Weights stored (in, out) in bf16; biases f32."""
    dims = [(indim, 1024), (1024, 512), (512, 256), (256, 128), (128, n_classes)]
    ks = jax.random.split(key, 2 * len(dims))
    params = []
    for li, (fi, fo) in enumerate(dims):
        bound = float(fi) ** -0.5
        w = jax.random.uniform(ks[2 * li], (fi, fo), jnp.float32, -bound, bound)
        b = jax.random.uniform(ks[2 * li + 1], (1, fo), jnp.float32, -bound, bound)
        if li == len(dims) - 1 and cpad > fo:              # pad classes to 128 lanes
            w = jnp.pad(w, ((0, 0), (0, cpad - fo)))
            b = jnp.pad(b, ((0, 0), (0, cpad - fo)))
        params += [w.astype(jnp.bfloat16), b.astype(jnp.float32)]
    return tuple(params)


def reference_forward(x, params, n_classes):
    """Pure-JAX reference with the same bf16-weight / f32-accumulate numerics."""
    w1, b1, w2, b2, w3, b3, w4, b4, w5, b5 = params

    def dense(h, w, b):
        return jnp.dot(h.astype(w.dtype), w,
                       preferred_element_type=jnp.float32) + b

    lrelu = lambda v: jnp.where(v > 0, v, NEG_SLOPE * v)
    h = lrelu(dense(x, w1, b1))
    h = lrelu(dense(h, w2, b2))
    h = lrelu(dense(h, w3, b3))
    h = lrelu(dense(h, w4, b4))
    logits = dense(h, w5, b5)[:, :n_classes]
    return jax.nn.softmax(logits, axis=-1)


if __name__ == "__main__":
    key = jax.random.PRNGKey(0)
    k_x, k_p = jax.random.split(key)

    # Small but pipeline-exercising shapes: 2 batch tiles of 128.
    B, indim, n_classes = 256, 256, 10
    cpad = max(128, _round_up(n_classes, 128))

    x = jax.random.normal(k_x, (B, indim), dtype=jnp.float32)
    params = init_params(k_p, indim, n_classes, cpad)

    out = mlp_forward(x, params, n_classes)
    out = jax.block_until_ready(out)

    ref = reference_forward(x, params, n_classes)

    assert out.shape == (B, n_classes)
    assert bool(jnp.allclose(jnp.sum(out, axis=-1), 1.0, atol=1e-3))
    assert bool(jnp.allclose(out, ref, atol=1e-3, rtol=1e-3)), \
        float(jnp.max(jnp.abs(out - ref)))

    print("KERNEL_OK")
</pallas_src>

<mosaic_0001>
module attributes {stable_mosaic.version = 11 : i64} {
  func.func @_mlp_kernel(%arg0: i32, %arg1: memref<128x256xf32, #tpu.memory_space<vmem>>, %arg2: memref<256x1024xbf16, #tpu.memory_space<vmem>>, %arg3: memref<1x1024xf32, #tpu.memory_space<vmem>>, %arg4: memref<1024x512xbf16, #tpu.memory_space<vmem>>, %arg5: memref<1x512xf32, #tpu.memory_space<vmem>>, %arg6: memref<512x256xbf16, #tpu.memory_space<vmem>>, %arg7: memref<1x256xf32, #tpu.memory_space<vmem>>, %arg8: memref<256x128xbf16, #tpu.memory_space<vmem>>, %arg9: memref<1x128xf32, #tpu.memory_space<vmem>>, %arg10: memref<128x128xbf16, #tpu.memory_space<vmem>>, %arg11: memref<1x128xf32, #tpu.memory_space<vmem>>, %arg12: memref<128x128xf32, #tpu.memory_space<vmem>>) attributes {dimension_semantics = [#tpu.dimension_semantics<parallel>], iteration_bounds = array<i64: 2>, scalar_prefetch = 0 : i64, scratch_operands = 0 : i64, tpu.core_type = #tpu.core_type<tc>, window_params = [{transform_indices = @transform_0, window_bounds = array<i64: 128, 256>}, {pipeline_mode = #tpu.pipeline_mode<synchronous>, transform_indices = @transform_1, window_bounds = array<i64: 256, 1024>}, {pipeline_mode = #tpu.pipeline_mode<synchronous>, transform_indices = @transform_2, window_bounds = array<i64: 1, 1024>}, {pipeline_mode = #tpu.pipeline_mode<synchronous>, transform_indices = @transform_3, window_bounds = array<i64: 1024, 512>}, {pipeline_mode = #tpu.pipeline_mode<synchronous>, transform_indices = @transform_4, window_bounds = array<i64: 1, 512>}, {pipeline_mode = #tpu.pipeline_mode<synchronous>, transform_indices = @transform_5, window_bounds = array<i64: 512, 256>}, {pipeline_mode = #tpu.pipeline_mode<synchronous>, transform_indices = @transform_6, window_bounds = array<i64: 1, 256>}, {pipeline_mode = #tpu.pipeline_mode<synchronous>, transform_indices = @transform_7, window_bounds = array<i64: 256, 128>}, {pipeline_mode = #tpu.pipeline_mode<synchronous>, transform_indices = @transform_8, window_bounds = array<i64: 1, 128>}, {pipeline_mode = #tpu.pipeline_mode<synchronous>, transform_indices = @transform_9, window_bounds = array<i64: 128, 128>}, {pipeline_mode = #tpu.pipeline_mode<synchronous>, transform_indices = @transform_10, window_bounds = array<i64: 1, 128>}, {transform_indices = @transform_11, window_bounds = array<i64: 128, 128>}]} {
    %c0 = arith.constant 0 : index
    %c0_0 = arith.constant 0 : index
    %0 = vector.load %arg1[%c0, %c0_0] : memref<128x256xf32, #tpu.memory_space<vmem>>, vector<128x256xf32>
    %1 = arith.truncf %0 : vector<128x256xf32> to vector<128x256xbf16>
    %c0_1 = arith.constant 0 : index
    %c0_2 = arith.constant 0 : index
    %2 = vector.load %arg2[%c0_1, %c0_2] : memref<256x1024xbf16, #tpu.memory_space<vmem>>, vector<256x1024xbf16>
    %cst = arith.constant dense<0.000000e+00> : vector<128x1024xf32>
    %3 = tpu.matmul %1, %2, %cst {dimension_numbers = #tpu.dot_dimension_numbers<[1], [0], [0], [1], [0, 0, 1, 1], [], []>} : vector<128x256xbf16>, vector<256x1024xbf16>, vector<128x1024xf32> -> vector<128x1024xf32>
    %c0_3 = arith.constant 0 : index
    %c0_4 = arith.constant 0 : index
    %4 = vector.load %arg3[%c0_3, %c0_4] : memref<1x1024xf32, #tpu.memory_space<vmem>>, vector<1x1024xf32>
    %5 = vector.broadcast %4 : vector<1x1024xf32> to vector<128x1024xf32>
    %6 = arith.addf %3, %5 : vector<128x1024xf32>
    %cst_5 = arith.constant 0.000000e+00 : f32
    %7 = vector.broadcast %cst_5 : f32 to vector<128x1024xf32>
    %8 = arith.cmpf ogt, %6, %7 : vector<128x1024xf32>
    %cst_6 = arith.constant 0.00999999977 : f32
    %9 = vector.broadcast %cst_6 : f32 to vector<128x1024xf32>
    %10 = arith.mulf %9, %6 : vector<128x1024xf32>
    %11 = arith.select %8, %6, %10 : vector<128x1024xi1>, vector<128x1024xf32>
    %12 = arith.truncf %11 : vector<128x1024xf32> to vector<128x1024xbf16>
    %c0_7 = arith.constant 0 : index
    %c0_8 = arith.constant 0 : index
    %13 = vector.load %arg4[%c0_7, %c0_8] : memref<1024x512xbf16, #tpu.memory_space<vmem>>, vector<1024x512xbf16>
    %cst_9 = arith.constant dense<0.000000e+00> : vector<128x512xf32>
    %14 = tpu.matmul %12, %13, %cst_9 {dimension_numbers = #tpu.dot_dimension_numbers<[1], [0], [0], [1], [0, 0, 1, 1], [], []>} : vector<128x1024xbf16>, vector<1024x512xbf16>, vector<128x512xf32> -> vector<128x512xf32>
    %c0_10 = arith.constant 0 : index
    %c0_11 = arith.constant 0 : index
    %15 = vector.load %arg5[%c0_10, %c0_11] : memref<1x512xf32, #tpu.memory_space<vmem>>, vector<1x512xf32>
    %16 = vector.broadcast %15 : vector<1x512xf32> to vector<128x512xf32>
    %17 = arith.addf %14, %16 : vector<128x512xf32>
    %cst_12 = arith.constant 0.000000e+00 : f32
    %18 = vector.broadcast %cst_12 : f32 to vector<128x512xf32>
    %19 = arith.cmpf ogt, %17, %18 : vector<128x512xf32>
    %cst_13 = arith.constant 0.00999999977 : f32
    %20 = vector.broadcast %cst_13 : f32 to vector<128x512xf32>
    %21 = arith.mulf %20, %17 : vector<128x512xf32>
    %22 = arith.select %19, %17, %21 : vector<128x512xi1>, vector<128x512xf32>
    %23 = arith.truncf %22 : vector<128x512xf32> to vector<128x512xbf16>
    %c0_14 = arith.constant 0 : index
    %c0_15 = arith.constant 0 : index
    %24 = vector.load %arg6[%c0_14, %c0_15] : memref<512x256xbf16, #tpu.memory_space<vmem>>, vector<512x256xbf16>
    %cst_16 = arith.constant dense<0.000000e+00> : vector<128x256xf32>
    %25 = tpu.matmul %23, %24, %cst_16 {dimension_numbers = #tpu.dot_dimension_numbers<[1], [0], [0], [1], [0, 0, 1, 1], [], []>} : vector<128x512xbf16>, vector<512x256xbf16>, vector<128x256xf32> -> vector<128x256xf32>
    %c0_17 = arith.constant 0 : index
    %c0_18 = arith.constant 0 : index
    %26 = vector.load %arg7[%c0_17, %c0_18] : memref<1x256xf32, #tpu.memory_space<vmem>>, vector<1x256xf32>
    %27 = vector.broadcast %26 : vector<1x256xf32> to vector<128x256xf32>
    %28 = arith.addf %25, %27 : vector<128x256xf32>
    %cst_19 = arith.constant 0.000000e+00 : f32
    %29 = vector.broadcast %cst_19 : f32 to vector<128x256xf32>
    %30 = arith.cmpf ogt, %28, %29 : vector<128x256xf32>
    %cst_20 = arith.constant 0.00999999977 : f32
    %31 = vector.broadcast %cst_20 : f32 to vector<128x256xf32>
    %32 = arith.mulf %31, %28 : vector<128x256xf32>
    %33 = arith.select %30, %28, %32 : vector<128x256xi1>, vector<128x256xf32>
    %34 = arith.truncf %33 : vector<128x256xf32> to vector<128x256xbf16>
    %c0_21 = arith.constant 0 : index
    %c0_22 = arith.constant 0 : index
    %35 = vector.load %arg8[%c0_21, %c0_22] : memref<256x128xbf16, #tpu.memory_space<vmem>>, vector<256x128xbf16>
    %cst_23 = arith.constant dense<0.000000e+00> : vector<128x128xf32>
    %36 = tpu.matmul %34, %35, %cst_23 {dimension_numbers = #tpu.dot_dimension_numbers<[1], [0], [0], [1], [0, 0, 1, 1], [], []>} : vector<128x256xbf16>, vector<256x128xbf16>, vector<128x128xf32> -> vector<128x128xf32>
    %c0_24 = arith.constant 0 : index
    %c0_25 = arith.constant 0 : index
    %37 = vector.load %arg9[%c0_24, %c0_25] : memref<1x128xf32, #tpu.memory_space<vmem>>, vector<1x128xf32>
    %38 = vector.broadcast %37 : vector<1x128xf32> to vector<128x128xf32>
    %39 = arith.addf %36, %38 : vector<128x128xf32>
    %cst_26 = arith.constant 0.000000e+00 : f32
    %40 = vector.broadcast %cst_26 : f32 to vector<128x128xf32>
    %41 = arith.cmpf ogt, %39, %40 : vector<128x128xf32>
    %cst_27 = arith.constant 0.00999999977 : f32
    %42 = vector.broadcast %cst_27 : f32 to vector<128x128xf32>
    %43 = arith.mulf %42, %39 : vector<128x128xf32>
    %44 = arith.select %41, %39, %43 : vector<128x128xi1>, vector<128x128xf32>
    %45 = arith.truncf %44 : vector<128x128xf32> to vector<128x128xbf16>
    %c0_28 = arith.constant 0 : index
    %c0_29 = arith.constant 0 : index
    %46 = vector.load %arg10[%c0_28, %c0_29] : memref<128x128xbf16, #tpu.memory_space<vmem>>, vector<128x128xbf16>
    %cst_30 = arith.constant dense<0.000000e+00> : vector<128x128xf32>
    %47 = tpu.matmul %45, %46, %cst_30 {dimension_numbers = #tpu.dot_dimension_numbers<[1], [0], [0], [1], [0, 0, 1, 1], [], []>} : vector<128x128xbf16>, vector<128x128xbf16>, vector<128x128xf32> -> vector<128x128xf32>
    %c0_31 = arith.constant 0 : index
    %c0_32 = arith.constant 0 : index
    %48 = vector.load %arg11[%c0_31, %c0_32] : memref<1x128xf32, #tpu.memory_space<vmem>>, vector<1x128xf32>
    %49 = vector.broadcast %48 : vector<1x128xf32> to vector<128x128xf32>
    %50 = arith.addf %47, %49 : vector<128x128xf32>
    %51 = tpu.iota {dimensions = array<i32: 1>} : vector<128x128xi32>
    %c10_i32 = arith.constant 10 : i32
    %52 = vector.broadcast %c10_i32 : i32 to vector<128x128xi32>
    %53 = arith.cmpi slt, %51, %52 : vector<128x128xi32>
    %cst_33 = arith.constant 0xFF800000 : f32
    %54 = vector.broadcast %cst_33 : f32 to vector<128x128xf32>
    %55 = arith.select %53, %50, %54 : vector<128x128xi1>, vector<128x128xf32>
    %cst_34 = arith.constant dense<0xFF800000> : vector<128xf32>
    %56 = vector.multi_reduction <maximumf>, %55, %cst_34 [1] : vector<128x128xf32> to vector<128xf32>
    %57 = vector.shape_cast %56 : vector<128xf32> to vector<128x1xf32>
    %58 = vector.broadcast %57 : vector<128x1xf32> to vector<128x128xf32>
    %59 = arith.subf %55, %58 : vector<128x128xf32>
    %60 = math.exp %59 : vector<128x128xf32>
    %cst_35 = arith.constant dense<0.000000e+00> : vector<128xf32>
    %61 = vector.multi_reduction <add>, %60, %cst_35 [1] : vector<128x128xf32> to vector<128xf32>
    %62 = vector.shape_cast %61 : vector<128xf32> to vector<128x1xf32>
    %63 = vector.broadcast %62 : vector<128x1xf32> to vector<128x128xf32>
    %64 = arith.divf %60, %63 : vector<128x128xf32>
    %c0_36 = arith.constant 0 : index
    %c0_37 = arith.constant 0 : index
    %65 = vector.load %arg12[%c0_36, %c0_37] : memref<128x128xf32, #tpu.memory_space<vmem>>, vector<128x128xf32>
    tpu.vector_store %arg12[%c0_36, %c0_37], %64 {strides = array<i32>} : memref<128x128xf32, #tpu.memory_space<vmem>>, vector<128x128xf32>,
    return
  }
  func.func @transform_0(%arg0: i32) -> (i32, i32) {
    %c0_i32 = arith.constant 0 : i32
    %c0_i32_0 = arith.constant 0 : i32
    return %arg0, %c0_i32 : i32, i32
  }
  func.func @transform_1(%arg0: i32) -> (i32, i32) {
    %c0_i32 = arith.constant 0 : i32
    %c0_i32_0 = arith.constant 0 : i32
    %c0_i32_1 = arith.constant 0 : i32
    return %c0_i32, %c0_i32_0 : i32, i32
  }
  func.func @transform_2(%arg0: i32) -> (i32, i32) {
    %c0_i32 = arith.constant 0 : i32
    %c0_i32_0 = arith.constant 0 : i32
    %c0_i32_1 = arith.constant 0 : i32
    return %c0_i32, %c0_i32_0 : i32, i32
  }
  func.func @transform_3(%arg0: i32) -> (i32, i32) {
    %c0_i32 = arith.constant 0 : i32
    %c0_i32_0 = arith.constant 0 : i32
    %c0_i32_1 = arith.constant 0 : i32
    return %c0_i32, %c0_i32_0 : i32, i32
  }
  func.func @transform_4(%arg0: i32) -> (i32, i32) {
    %c0_i32 = arith.constant 0 : i32
    %c0_i32_0 = arith.constant 0 : i32
    %c0_i32_1 = arith.constant 0 : i32
    return %c0_i32, %c0_i32_0 : i32, i32
  }
  func.func @transform_5(%arg0: i32) -> (i32, i32) {
    %c0_i32 = arith.constant 0 : i32
    %c0_i32_0 = arith.constant 0 : i32
    %c0_i32_1 = arith.constant 0 : i32
    return %c0_i32, %c0_i32_0 : i32, i32
  }
  func.func @transform_6(%arg0: i32) -> (i32, i32) {
    %c0_i32 = arith.constant 0 : i32
    %c0_i32_0 = arith.constant 0 : i32
    %c0_i32_1 = arith.constant 0 : i32
    return %c0_i32, %c0_i32_0 : i32, i32
  }
  func.func @transform_7(%arg0: i32) -> (i32, i32) {
    %c0_i32 = arith.constant 0 : i32
    %c0_i32_0 = arith.constant 0 : i32
    %c0_i32_1 = arith.constant 0 : i32
    return %c0_i32, %c0_i32_0 : i32, i32
  }
  func.func @transform_8(%arg0: i32) -> (i32, i32) {
    %c0_i32 = arith.constant 0 : i32
    %c0_i32_0 = arith.constant 0 : i32
    %c0_i32_1 = arith.constant 0 : i32
    return %c0_i32, %c0_i32_0 : i32, i32
  }
  func.func @transform_9(%arg0: i32) -> (i32, i32) {
    %c0_i32 = arith.constant 0 : i32
    %c0_i32_0 = arith.constant 0 : i32
    %c0_i32_1 = arith.constant 0 : i32
    return %c0_i32, %c0_i32_0 : i32, i32
  }
  func.func @transform_10(%arg0: i32) -> (i32, i32) {
    %c0_i32 = arith.constant 0 : i32
    %c0_i32_0 = arith.constant 0 : i32
    %c0_i32_1 = arith.constant 0 : i32
    return %c0_i32, %c0_i32_0 : i32, i32
  }
  func.func @transform_11(%arg0: i32) -> (i32, i32) {
    %c0_i32 = arith.constant 0 : i32
    %c0_i32_0 = arith.constant 0 : i32
    return %arg0, %c0_i32 : i32, i32
  }
}

</mosaic_0001>

<llo_original>
// kernel: tpu_custom_call.1
$region0: #{tpu_custom_call.1}
  #allocation0 [shape = 'u32[]', space=smem, size = 0x4, offset = 0x4, fixed_abs, tag = 'smem constant byte address 0x4 - core index']
  #allocation1 [shape = 'u32[144,128]{1,0:T(1,128)}', space=vmem, size = 0x12000, scoped, tag = 'internal scratch']
  %s0 = inlined_call_operand.hbm [shape: f32[256,256], index: 0, kind: input, shape index: {}]
  %s1 = inlined_call_operand.hbm [shape: bf16[256,1024], index: 1, kind: input, shape index: {}]
  %s2 = inlined_call_operand.hbm [shape: f32[1,1024], index: 2, kind: input, shape index: {}]
  %s3 = inlined_call_operand.hbm [shape: bf16[1024,512], index: 3, kind: input, shape index: {}]
  %s4 = inlined_call_operand.vmem [shape: f32[1,512], index: 4, kind: input, shape index: {}]
  %s5 = inlined_call_operand.hbm [shape: bf16[512,256], index: 5, kind: input, shape index: {}]
  %s6 = inlined_call_operand.vmem [shape: f32[1,256], index: 6, kind: input, shape index: {}]
  %s7 = inlined_call_operand.hbm [shape: bf16[256,128], index: 7, kind: input, shape index: {}]
  %s8 = inlined_call_operand.vmem [shape: f32[1,128], index: 8, kind: input, shape index: {}]
  %s9 = inlined_call_operand.hbm [shape: bf16[128,128], index: 9, kind: input, shape index: {}]
  %s10 = inlined_call_operand.vmem [shape: f32[1,128], index: 10, kind: input, shape index: {}]
  %s11 = inlined_call_operand.hbm [shape: f32[256,128], index: 11, kind: output, shape index: {}]
  %s12 = sld [smem:[#allocation0]]
  $region105: #{tpu_custom_call.1} parent=0
    _
  %s14 = ssub.s32 1, %s12
  %s15 = scalar_select 0, %s14, %s12
  $region1: #{tpu_custom_call.1} parent=0
    #allocation2 [shape = 'u8[262144]{0}', space=vmem, size = 0x40000, scoped, tag = 'input window, operand 0']
    #allocation3 [shape = 's32[2]{0}', space=sflag, size = 0x8, scoped, tag = 'scoped memory for tpu_custom_call.1']
    #allocation4 [shape = 's32[2]{0}', space=sflag, size = 0x8, scoped, tag = 'scoped memory for tpu_custom_call.1']
    #allocation5 [shape = 'u8[524288]{0}', space=vmem, size = 0x80000, scoped, tag = 'input window, operand 1, single buffered']
    #allocation6 [shape = 's32[1]{0}', space=sflag, size = 0x4, scoped, tag = 'scoped memory for tpu_custom_call.1']
    #allocation7 [shape = 'u8[4096]{0}', space=vmem, size = 0x1000, scoped, tag = 'input window, operand 2, single buffered']
    #allocation8 [shape = 'u8[1048576]{0}', space=vmem, size = 0x100000, scoped, tag = 'input window, operand 3, single buffered']
    #allocation9 [shape = 's32[1]{0}', space=sflag, size = 0x4, scoped, tag = 'scoped memory for tpu_custom_call.1']
    #allocation10 [shape = 'u8[262144]{0}', space=vmem, size = 0x40000, scoped, tag = 'input window, operand 5, single buffered']
    #allocation11 [shape = 'u8[65536]{0}', space=vmem, size = 0x10000, scoped, tag = 'input window, operand 7, single buffered']
    #allocation12 [shape = 's32[1]{0}', space=sflag, size = 0x4, scoped, tag = 'scoped memory for tpu_custom_call.1']
    #allocation13 [shape = 'u8[32768]{0}', space=vmem, size = 0x8000, scoped, tag = 'input window, operand 9, single buffered']
    #allocation14 [shape = 'u8[131072]{0}', space=vmem, size = 0x20000, scoped, tag = 'output window, operand 0']
    %16 = vsyncpa [#allocation3], 0
    %s17 = scalar_lea.sflag [#allocation3], 1
    %18 = vsyncpa %s17, 0
    %19 = vsyncpa [#allocation6], 0
    %20 = vsyncpa [#allocation9], 0
    %21 = vsyncpa [#allocation12], 0
    %22 = vsyncpa [#allocation4], 0
    %s23 = scalar_lea.sflag [#allocation4], 1
    %24 = vsyncpa %s23, 0
    loop: start=0, step=1, limit=4
    $region2: #{tpu_custom_call.1} parent=1 // loop_pre_header
      _
    $region3: #{tpu_custom_call.1} parent=1 // loop_header
      %s26 = sphi 0, %s30
      %p27 = scmp.ge.s32.totalorder %s26, 4
      %s36 = sphi 0, %s38
      %s39 = sphi 0, %s36
      %s40 = sphi 0, %s39
      %s56 = sphi 0, %s40
      %s60 = sphi 0, %s60
      %s62 = sphi 0, %s60
      %s63 = sphi 0, %s62
      %s77 = sphi 0, %s63
      %s81 = sphi 0, %s81
      %s83 = sphi 0, %s81
      %s84 = sphi 0, %s83
      %s98 = sphi 0, %s84
      %s102 = sphi 0, %s102
      %s104 = sphi 0, %s102
      %s105 = sphi 0, %s104
      %s119 = sphi 0, %s105
      %s123 = sphi 0, %s123
      %s125 = sphi 0, %s123
      %s126 = sphi 0, %s125
      %s140 = sphi 0, %s126
      %s144 = sphi 0, %s144
      %s146 = sphi 0, %s144
      %s147 = sphi 0, %s146
      %s161 = sphi 0, %s147
      %s165 = sphi 0, %s165
      %s167 = sphi 0, %s165
      %s168 = sphi 0, %s167
      %s182 = sphi 0, %s168
      %s186 = sphi 0, %s186
      %s188 = sphi 0, %s186
      %s189 = sphi 0, %s188
      %s203 = sphi 0, %s189
      %s207 = sphi 0, %s207
      %s209 = sphi 0, %s207
      %s210 = sphi 0, %s209
      %s224 = sphi 0, %s210
      %s228 = sphi 0, %s228
      %s230 = sphi 0, %s228
      %s231 = sphi 0, %s230
      %s245 = sphi 0, %s231
      %s249 = sphi 0, %s249
      %s251 = sphi 0, %s249
      %s252 = sphi 0, %s251
      %s266 = sphi 0, %s252
      %s272 = sphi 0, %s274
      %s275 = sphi 0, %s272
      %s276 = sphi 0, %s275
      %s292 = sphi 0, %s276
    $region4: #{tpu_custom_call.1} parent=1 // loop_header_branch
      %29 = sbr.rel (%p27) target = $region8
    $region5: #{tpu_custom_call.1} parent=1 // loop_body
      %s31 = ssub.s32 %s26, 1
      %s32 = ssub.s32 %s26, 2
      %s33 = sadd.s32 %s26, 1
      %s34 = ssub.s32 %s26, %s33
      %p35 = scmp.eq.s32.totalorder %s34, 0
      %s37 = sadd.s32 %s36, 1
      %s38 = scalar_select %p35, %s36, %s37
      %p41 = pneg %p35
      %p42 = scmp.eq.s32.totalorder %s26, 1
      %p43 = por %p41, %p42
      %p44 = scmp.ne.s32.totalorder %s36, %s39
      %p45 = scmp.eq.s32.totalorder %s26, 0
      %p46 = por %p44, %p45
      %p47 = scmp.ne.s32.totalorder %s36, %s39
      %p48 = scmp.eq.s32.totalorder %s31, 1
      %p49 = por %p47, %p48
      %p50 = scmp.ne.s32.totalorder %s39, %s40
      %p51 = scmp.eq.s32.totalorder %s31, 0
      %p52 = por %p50, %p51
      %p53 = scmp.ne.s32.totalorder %s39, %s40
      %p54 = scmp.eq.s32.totalorder %s32, 1
      %p55 = por %p53, %p54
      %p57 = scmp.ne.s32.totalorder %s40, %s56
      %p58 = scmp.eq.s32.totalorder %s32, 0
      %p59 = por %p57, %p58
      %s61 = sadd.s32 %s60, 1
      %p64 = scmp.eq.s32.totalorder %s26, 1
      %p65 = scmp.ne.s32.totalorder %s60, %s62
      %p66 = scmp.eq.s32.totalorder %s26, 0
      %p67 = por %p65, %p66
      %p68 = scmp.ne.s32.totalorder %s60, %s62
      %p69 = scmp.eq.s32.totalorder %s31, 1
      %p70 = por %p68, %p69
      %p71 = scmp.ne.s32.totalorder %s62, %s63
      %p72 = scmp.eq.s32.totalorder %s31, 0
      %p73 = por %p71, %p72
      %p74 = scmp.ne.s32.totalorder %s62, %s63
      %p75 = scmp.eq.s32.totalorder %s32, 1
      %p76 = por %p74, %p75
      %p78 = scmp.ne.s32.totalorder %s63, %s77
      %p79 = scmp.eq.s32.totalorder %s32, 0
      %p80 = por %p78, %p79
      %s82 = sadd.s32 %s81, 1
      %p85 = scmp.eq.s32.totalorder %s26, 1
      %p86 = scmp.ne.s32.totalorder %s81, %s83
      %p87 = scmp.eq.s32.totalorder %s26, 0
      %p88 = por %p86, %p87
      %p89 = scmp.ne.s32.totalorder %s81, %s83
      %p90 = scmp.eq.s32.totalorder %s31, 1
      %p91 = por %p89, %p90
      %p92 = scmp.ne.s32.totalorder %s83, %s84
      %p93 = scmp.eq.s32.totalorder %s31, 0
      %p94 = por %p92, %p93
      %p95 = scmp.ne.s32.totalorder %s83, %s84
      %p96 = scmp.eq.s32.totalorder %s32, 1
      %p97 = por %p95, %p96
      %p99 = scmp.ne.s32.totalorder %s84, %s98
      %p100 = scmp.eq.s32.totalorder %s32, 0
      %p101 = por %p99, %p100
      %s103 = sadd.s32 %s102, 1
      %p106 = scmp.eq.s32.totalorder %s26, 1
      %p107 = scmp.ne.s32.totalorder %s102, %s104
      %p108 = scmp.eq.s32.totalorder %s26, 0
      %p109 = por %p107, %p108
      %p110 = scmp.ne.s32.totalorder %s102, %s104
      %p111 = scmp.eq.s32.totalorder %s31, 1
      %p112 = por %p110, %p111
      %p113 = scmp.ne.s32.totalorder %s104, %s105
      %p114 = scmp.eq.s32.totalorder %s31, 0
      %p115 = por %p113, %p114
      %p116 = scmp.ne.s32.totalorder %s104, %s105
      %p117 = scmp.eq.s32.totalorder %s32, 1
      %p118 = por %p116, %p117
      %p120 = scmp.ne.s32.totalorder %s105, %s119
      %p121 = scmp.eq.s32.totalorder %s32, 0
      %p122 = por %p120, %p121
      %s124 = sadd.s32 %s123, 1
      %p127 = scmp.eq.s32.totalorder %s26, 1
      %p128 = scmp.ne.s32.totalorder %s123, %s125
      %p129 = scmp.eq.s32.totalorder %s26, 0
      %p130 = por %p128, %p129
      %p131 = scmp.ne.s32.totalorder %s123, %s125
      %p132 = scmp.eq.s32.totalorder %s31, 1
      %p133 = por %p131, %p132
      %p134 = scmp.ne.s32.totalorder %s125, %s126
      %p135 = scmp.eq.s32.totalorder %s31, 0
      %p136 = por %p134, %p135
      %p137 = scmp.ne.s32.totalorder %s125, %s126
      %p138 = scmp.eq.s32.totalorder %s32, 1
      %p139 = por %p137, %p138
      %p141 = scmp.ne.s32.totalorder %s126, %s140
      %p142 = scmp.eq.s32.totalorder %s32, 0
      %p143 = por %p141, %p142
      %s145 = sadd.s32 %s144, 1
      %p148 = scmp.eq.s32.totalorder %s26, 1
      %p149 = scmp.ne.s32.totalorder %s144, %s146
      %p150 = scmp.eq.s32.totalorder %s26, 0
      %p151 = por %p149, %p150
      %p152 = scmp.ne.s32.totalorder %s144, %s146
      %p153 = scmp.eq.s32.totalorder %s31, 1
      %p154 = por %p152, %p153
      %p155 = scmp.ne.s32.totalorder %s146, %s147
      %p156 = scmp.eq.s32.totalorder %s31, 0
      %p157 = por %p155, %p156
      %p158 = scmp.ne.s32.totalorder %s146, %s147
      %p159 = scmp.eq.s32.totalorder %s32, 1
      %p160 = por %p158, %p159
      %p162 = scmp.ne.s32.totalorder %s147, %s161
      %p163 = scmp.eq.s32.totalorder %s32, 0
      %p164 = por %p162, %p163
      %s166 = sadd.s32 %s165, 1
      %p169 = scmp.eq.s32.totalorder %s26, 1
      %p170 = scmp.ne.s32.totalorder %s165, %s167
      %p171 = scmp.eq.s32.totalorder %s26, 0
      %p172 = por %p170, %p171
      %p173 = scmp.ne.s32.totalorder %s165, %s167
      %p174 = scmp.eq.s32.totalorder %s31, 1
      %p175 = por %p173, %p174
      %p176 = scmp.ne.s32.totalorder %s167, %s168
      %p177 = scmp.eq.s32.totalorder %s31, 0
      %p178 = por %p176, %p177
      %p179 = scmp.ne.s32.totalorder %s167, %s168
      %p180 = scmp.eq.s32.totalorder %s32, 1
      %p181 = por %p179, %p180
      %p183 = scmp.ne.s32.totalorder %s168, %s182
      %p184 = scmp.eq.s32.totalorder %s32, 0
      %p185 = por %p183, %p184
      %s187 = sadd.s32 %s186, 1
      %p190 = scmp.eq.s32.totalorder %s26, 1
      %p191 = scmp.ne.s32.totalorder %s186, %s188
      %p192 = scmp.eq.s32.totalorder %s26, 0
      %p193 = por %p191, %p192
      %p194 = scmp.ne.s32.totalorder %s186, %s188
      %p195 = scmp.eq.s32.totalorder %s31, 1
      %p196 = por %p194, %p195
      %p197 = scmp.ne.s32.totalorder %s188, %s189
      %p198 = scmp.eq.s32.totalorder %s31, 0
      %p199 = por %p197, %p198
      %p200 = scmp.ne.s32.totalorder %s188, %s189
      %p201 = scmp.eq.s32.totalorder %s32, 1
      %p202 = por %p200, %p201
      %p204 = scmp.ne.s32.totalorder %s189, %s203
      %p205 = scmp.eq.s32.totalorder %s32, 0
      %p206 = por %p204, %p205
      %s208 = sadd.s32 %s207, 1
      %p211 = scmp.eq.s32.totalorder %s26, 1
      %p212 = scmp.ne.s32.totalorder %s207, %s209
      %p213 = scmp.eq.s32.totalorder %s26, 0
      %p214 = por %p212, %p213
      %p215 = scmp.ne.s32.totalorder %s207, %s209
      %p216 = scmp.eq.s32.totalorder %s31, 1
      %p217 = por %p215, %p216
      %p218 = scmp.ne.s32.totalorder %s209, %s210
      %p219 = scmp.eq.s32.totalorder %s31, 0
      %p220 = por %p218, %p219
      %p221 = scmp.ne.s32.totalorder %s209, %s210
      %p222 = scmp.eq.s32.totalorder %s32, 1
      %p223 = por %p221, %p222
      %p225 = scmp.ne.s32.totalorder %s210, %s224
      %p226 = scmp.eq.s32.totalorder %s32, 0
      %p227 = por %p225, %p226
      %s229 = sadd.s32 %s228, 1
      %p232 = scmp.eq.s32.totalorder %s26, 1
      %p233 = scmp.ne.s32.totalorder %s228, %s230
      %p234 = scmp.eq.s32.totalorder %s26, 0
      %p235 = por %p233, %p234
      %p236 = scmp.ne.s32.totalorder %s228, %s230
      %p237 = scmp.eq.s32.totalorder %s31, 1
      %p238 = por %p236, %p237
      %p239 = scmp.ne.s32.totalorder %s230, %s231
      %p240 = scmp.eq.s32.totalorder %s31, 0
      %p241 = por %p239, %p240
      %p242 = scmp.ne.s32.totalorder %s230, %s231
      %p243 = scmp.eq.s32.totalorder %s32, 1
      %p244 = por %p242, %p243
      %p246 = scmp.ne.s32.totalorder %s231, %s245
      %p247 = scmp.eq.s32.totalorder %s32, 0
      %p248 = por %p246, %p247
      %s250 = sadd.s32 %s249, 1
      %p253 = scmp.eq.s32.totalorder %s26, 1
      %p254 = scmp.ne.s32.totalorder %s249, %s251
      %p255 = scmp.eq.s32.totalorder %s26, 0
      %p256 = por %p254, %p255
      %p257 = scmp.ne.s32.totalorder %s249, %s251
      %p258 = scmp.eq.s32.totalorder %s31, 1
      %p259 = por %p257, %p258
      %p260 = scmp.ne.s32.totalorder %s251, %s252
      %p261 = scmp.eq.s32.totalorder %s31, 0
      %p262 = por %p260, %p261
      %p263 = scmp.ne.s32.totalorder %s251, %s252
      %p264 = scmp.eq.s32.totalorder %s32, 1
      %p265 = por %p263, %p264
      %p267 = scmp.ne.s32.totalorder %s252, %s266
      %p268 = scmp.eq.s32.totalorder %s32, 0
      %p269 = por %p267, %p268
      %s270 = ssub.s32 %s26, %s33
      %p271 = scmp.eq.s32.totalorder %s270, 0
      %s273 = sadd.s32 %s272, 1
      %s274 = scalar_select %p271, %s272, %s273
      %p277 = pneg %p271
      %p278 = scmp.eq.s32.totalorder %s26, 1
      %p279 = por %p277, %p278
      %p280 = scmp.ne.s32.totalorder %s272, %s275
      %p281 = scmp.eq.s32.totalorder %s26, 0
      %p282 = por %p280, %p281
      %p283 = scmp.ne.s32.totalorder %s272, %s275
      %p284 = scmp.eq.s32.totalorder %s31, 1
      %p285 = por %p283, %p284
      %p286 = scmp.ne.s32.totalorder %s275, %s276
      %p287 = scmp.eq.s32.totalorder %s31, 0
      %p288 = por %p286, %p287
      %p289 = scmp.ne.s32.totalorder %s275, %s276
      %p290 = scmp.eq.s32.totalorder %s32, 1
      %p291 = por %p289, %p290
      %p293 = scmp.ne.s32.totalorder %s276, %s292
      %p294 = scmp.eq.s32.totalorder %s32, 0
      %p295 = por %p293, %p294
      %p296 = scmp.le.s32.totalorder 1, %s26
      %p297 = scmp.lt.s32.totalorder %s26, 3
      %p298 = pnand %p296, %p297
      %p299 = pneg %p298
      // Predicated region
      $region9: #{tpu_custom_call.1} parent=5 // pred_check
        _
      $region10: #{tpu_custom_call.1} parent=5 // pred_check_branch
        %301 = sbr.rel (%p298) target = $region12
      $region11: #{tpu_custom_call.1} parent=5 // pred_region
        %s302 = ssub.s32 %s26, 1
        // Predicated region
        $region13: #{tpu_custom_call.1} parent=11 // pred_check
          %p303 = pneg %p73
        $region14: #{tpu_custom_call.1} parent=11 // pred_check_branch
          %305 = sbr.rel (%p303) target = $region16
        $region15: #{tpu_custom_call.1} parent=11 // pred_region
          %s307 = ssub.s32 16384, 16384
          %308 = vsyncadd [#allocation6], %s307
          %s309 = sshll.u32 [#allocation5], 4
          %s310 = int_to_ptr.vmem [resolvable:$true] %s309
          %315 = dma.hbm_to_vmem [thread:$0]  %s1, 16384, %s310, [#allocation6], 512, 512, 32
        $region16: #{tpu_custom_call.1} parent=11 // pred_fallthru
          _
        // Predicated region
        $region17: #{tpu_custom_call.1} parent=11 // pred_check
          %p316 = pneg %p94
        $region18: #{tpu_custom_call.1} parent=11 // pred_check_branch
          %318 = sbr.rel (%p316) target = $region20
        $region19: #{tpu_custom_call.1} parent=11 // pred_region
          %s320 = ssub.s32 128, 128
          %321 = vsyncadd [#allocation6], %s320
          %s323 = sshll.u32 [#allocation7], 4
          %s324 = int_to_ptr.vmem [resolvable:$true] %s323
          %326 = dma.hbm_to_vmem [thread:$0]  %s2, 128, %s324, [#allocation6]
        $region20: #{tpu_custom_call.1} parent=11 // pred_fallthru
          _
        // Predicated region
        $region21: #{tpu_custom_call.1} parent=11 // pred_check
          %p327 = pneg %p115
        $region22: #{tpu_custom_call.1} parent=11 // pred_check_branch
          %329 = sbr.rel (%p327) target = $region24
        $region23: #{tpu_custom_call.1} parent=11 // pred_region
          %s331 = ssub.s32 32768, 32768
          %332 = vsyncadd [#allocation9], %s331
          %s333 = sshll.u32 [#allocation8], 4
          %s334 = int_to_ptr.vmem [resolvable:$true] %s333
          %339 = dma.hbm_to_vmem [thread:$0]  %s3, 32768, %s334, [#allocation9], 256, 256, 16
        $region24: #{tpu_custom_call.1} parent=11 // pred_fallthru
          _
        // Predicated region
        $region25: #{tpu_custom_call.1} parent=11 // pred_check
          %p340 = pneg %p136
        $region26: #{tpu_custom_call.1} parent=11 // pred_check_branch
          %342 = sbr.rel (%p340) target = $region28
        $region27: #{tpu_custom_call.1} parent=11 // pred_region
          _
        $region28: #{tpu_custom_call.1} parent=11 // pred_fallthru
          _
        // Predicated region
        $region29: #{tpu_custom_call.1} parent=11 // pred_check
          %p343 = pneg %p157
        $region30: #{tpu_custom_call.1} parent=11 // pred_check_branch
          %345 = sbr.rel (%p343) target = $region32
        $region31: #{tpu_custom_call.1} parent=11 // pred_region
          %s347 = ssub.s32 8192, 8192
          %348 = vsyncadd [#allocation9], %s347
          %s349 = sshll.u32 [#allocation10], 4
          %s350 = int_to_ptr.vmem [resolvable:$true] %s349
          %355 = dma.hbm_to_vmem [thread:$0]  %s5, 8192, %s350, [#allocation9], 128, 128, 8
        $region32: #{tpu_custom_call.1} parent=11 // pred_fallthru
          _
        // Predicated region
        $region33: #{tpu_custom_call.1} parent=11 // pred_check
          %p356 = pneg %p178
        $region34: #{tpu_custom_call.1} parent=11 // pred_check_branch
          %358 = sbr.rel (%p356) target = $region36
        $region35: #{tpu_custom_call.1} parent=11 // pred_region
          _
        $region36: #{tpu_custom_call.1} parent=11 // pred_fallthru
          _
        // Predicated region
        $region37: #{tpu_custom_call.1} parent=11 // pred_check
          %p359 = pneg %p199
        $region38: #{tpu_custom_call.1} parent=11 // pred_check_branch
          %361 = sbr.rel (%p359) target = $region40
        $region39: #{tpu_custom_call.1} parent=11 // pred_region
          %s363 = ssub.s32 2048, 2048
          %364 = vsyncadd [#allocation12], %s363
          %s365 = sshll.u32 [#allocation11], 4
          %s366 = int_to_ptr.vmem [resolvable:$true] %s365
          %371 = dma.hbm_to_vmem [thread:$0]  %s7, 2048, %s366, [#allocation12], 64, 64, 4
        $region40: #{tpu_custom_call.1} parent=11 // pred_fallthru
          _
        // Predicated region
        $region41: #{tpu_custom_call.1} parent=11 // pred_check
          %p372 = pneg %p220
        $region42: #{tpu_custom_call.1} parent=11 // pred_check_branch
          %374 = sbr.rel (%p372) target = $region44
        $region43: #{tpu_custom_call.1} parent=11 // pred_region
          _
        $region44: #{tpu_custom_call.1} parent=11 // pred_fallthru
          _
        // Predicated region
        $region45: #{tpu_custom_call.1} parent=11 // pred_check
          %p375 = pneg %p241
        $region46: #{tpu_custom_call.1} parent=11 // pred_check_branch
          %377 = sbr.rel (%p375) target = $region48
        $region47: #{tpu_custom_call.1} parent=11 // pred_region
          %s379 = ssub.s32 1024, 1024
          %380 = vsyncadd [#allocation12], %s379
          %s381 = sshll.u32 [#allocation13], 4
          %s382 = int_to_ptr.vmem [resolvable:$true] %s381
          %387 = dma.hbm_to_vmem [thread:$0]  %s9, 1024, %s382, [#allocation12], 64, 64, 4
        $region48: #{tpu_custom_call.1} parent=11 // pred_fallthru
          _
        // Predicated region
        $region49: #{tpu_custom_call.1} parent=11 // pred_check
          %p388 = pneg %p262
        $region50: #{tpu_custom_call.1} parent=11 // pred_check_branch
          %390 = sbr.rel (%p388) target = $region52
        $region51: #{tpu_custom_call.1} parent=11 // pred_region
          _
        $region52: #{tpu_custom_call.1} parent=11 // pred_fallthru
          _
      $region12: #{tpu_custom_call.1} parent=5 // pred_fallthru
        _
      %p391 = scmp.lt.s32.totalorder %s26, 2
      // Predicated region
      $region53: #{tpu_custom_call.1} parent=5 // pred_check
        %p392 = pneg %p391
      $region54: #{tpu_custom_call.1} parent=5 // pred_check_branch
        %394 = sbr.rel (%p392) target = $region56
      $region55: #{tpu_custom_call.1} parent=5 // pred_region
        // Predicated region
        $region57: #{tpu_custom_call.1} parent=55 // pred_check
          %p395 = pneg %p46
        $region58: #{tpu_custom_call.1} parent=55 // pred_check_branch
          %397 = sbr.rel (%p395) target = $region60
        $region59: #{tpu_custom_call.1} parent=55 // pred_region
          %s398 = sand.u32 %s36, 1
          %s399 = scalar_lea.sflag [#allocation3], %s398
          %s400 = sand.u32 %s36, 1
          %s401 = smul.addr %s400, 256
          %s402 = scalar_lea.vmem [#allocation2], %s401
          %s403 = smul.u32 16, %s26
          %s405 = ssub.s32 4096, 4096
          %406 = vsyncadd %s399, %s405
          %s407 = smul.addr %s403, 2
          %s408 = smul.addr %s407, 128
          %s409 = scalar_lea.hbm %s0, %s408
          %s410 = sshll.u32 %s402, 4
          %s411 = int_to_ptr.vmem [resolvable:$true] %s410
          %416 = dma.hbm_to_vmem [thread:$0]  %s409, 4096, %s411, %s399, 256, 256, 16
        $region60: #{tpu_custom_call.1} parent=55 // pred_fallthru
          _
      $region56: #{tpu_custom_call.1} parent=5 // pred_fallthru
        _
      %p417 = scmp.le.s32.totalorder 1, %s26
      %p418 = scmp.lt.s32.totalorder %s26, 3
      %p419 = pnand %p417, %p418
      %p420 = pneg %p419
      // Predicated region
      $region61: #{tpu_custom_call.1} parent=5 // pred_check
        _
      $region62: #{tpu_custom_call.1} parent=5 // pred_check_branch
        %422 = sbr.rel (%p419) target = $region64
      $region63: #{tpu_custom_call.1} parent=5 // pred_region
        %s423 = ssub.s32 %s26, 1
        %s424 = sand.u32 %s39, 1
        %s425 = scalar_lea.sflag [#allocation3], %s424
        %s426 = sand.u32 %s39, 1
        %s427 = smul.addr %s426, 256
        %s428 = scalar_lea.vmem [#allocation2], %s427
        // Predicated region
        $region65: #{tpu_custom_call.1} parent=63 // pred_check
          %p429 = pneg %p52
        $region66: #{tpu_custom_call.1} parent=63 // pred_check_branch
          %431 = sbr.rel (%p429) target = $region68
        $region67: #{tpu_custom_call.1} parent=63 // pred_region
          %432 = dma.done %s425, 4096
        $region68: #{tpu_custom_call.1} parent=63 // pred_fallthru
          _
        // Predicated region
        $region69: #{tpu_custom_call.1} parent=63 // pred_check
          %p433 = pneg %p73
        $region70: #{tpu_custom_call.1} parent=63 // pred_check_branch
          %435 = sbr.rel (%p433) target = $region72
        $region71: #{tpu_custom_call.1} parent=63 // pred_region
          %436 = dma.done [#allocation6], 16384
        $region72: #{tpu_custom_call.1} parent=63 // pred_fallthru
          _
        // Predicated region
        $region73: #{tpu_custom_call.1} parent=63 // pred_check
          %p437 = pneg %p94
        $region74: #{tpu_custom_call.1} parent=63 // pred_check_branch
          %439 = sbr.rel (%p437) target = $region76
        $region75: #{tpu_custom_call.1} parent=63 // pred_region
          %440 = dma.done [#allocation6], 128
        $region76: #{tpu_custom_call.1} parent=63 // pred_fallthru
          _
        // Predicated region
        $region77: #{tpu_custom_call.1} parent=63 // pred_check
          %p441 = pneg %p115
        $region78: #{tpu_custom_call.1} parent=63 // pred_check_branch
          %443 = sbr.rel (%p441) target = $region80
        $region79: #{tpu_custom_call.1} parent=63 // pred_region
          %444 = dma.done [#allocation9], 32768
        $region80: #{tpu_custom_call.1} parent=63 // pred_fallthru
          _
        // Predicated region
        $region81: #{tpu_custom_call.1} parent=63 // pred_check
          %p445 = pneg %p157
        $region82: #{tpu_custom_call.1} parent=63 // pred_check_branch
          %447 = sbr.rel (%p445) target = $region84
        $region83: #{tpu_custom_call.1} parent=63 // pred_region
          %448 = dma.done [#allocation9], 8192
        $region84: #{tpu_custom_call.1} parent=63 // pred_fallthru
          _
        // Predicated region
        $region85: #{tpu_custom_call.1} parent=63 // pred_check
          %p449 = pneg %p199
        $region86: #{tpu_custom_call.1} parent=63 // pred_check_branch
          %451 = sbr.rel (%p449) target = $region88
        $region87: #{tpu_custom_call.1} parent=63 // pred_region
          %452 = dma.done [#allocation12], 2048
        $region88: #{tpu_custom_call.1} parent=63 // pred_fallthru
          _
        // Predicated region
        $region89: #{tpu_custom_call.1} parent=63 // pred_check
          %p453 = pneg %p241
        $region90: #{tpu_custom_call.1} parent=63 // pred_check_branch
          %455 = sbr.rel (%p453) target = $region92
        $region91: #{tpu_custom_call.1} parent=63 // pred_region
          %456 = dma.done [#allocation12], 1024
        $region92: #{tpu_custom_call.1} parent=63 // pred_fallthru
          _
        %s457 = sand.u32 %s39, 1
        %s458 = scalar_lea.sflag [#allocation3], %s457
        %s459 = sand.u32 %s39, 1
        %s460 = smul.addr %s459, 256
        %s461 = scalar_lea.vmem [#allocation2], %s460
        %p462 = pneg %p52
        %p463 = pneg %p49
        %p464 = pneg %p73
        %p465 = pneg %p70
        %p466 = pneg %p94
        %p467 = pneg %p91
        %p468 = pneg %p115
        %p469 = pneg %p112
        %p470 = pneg %p136
        %p471 = pneg %p133
        %p472 = pneg %p157
        %p473 = pneg %p154
        %p474 = pneg %p178
        %p475 = pneg %p175
        %p476 = pneg %p199
        %p477 = pneg %p196
        %p478 = pneg %p220
        %p479 = pneg %p217
        %p480 = pneg %p241
        %p481 = pneg %p238
        %p482 = pneg %p262
        %p483 = pneg %p259
        %p484 = pneg %p288
        %p485 = pneg %p285
        %s486 = sand.u32 %s275, 1
        %s487 = scalar_lea.sflag [#allocation4], %s486
        %s488 = sand.u32 %s275, 1
        %s489 = smul.addr %s488, 128
        %s490 = scalar_lea.vmem [#allocation14], %s489
        %s491 = smul.u32 16, %s31
        %s492 = smul.u32 16, %s31
        %v494 = vld [vmem:[%s428] sm:$0xff]
        %v495 = vld [vmem:[%s428 + $0x8] sm:$0xff]
        %v496 = vld [vmem:[%s428 + $0x10] sm:$0xff]
        %v497 = vld [vmem:[%s428 + $0x18] sm:$0xff]
        %v498 = vld [vmem:[%s428 + $0x20] sm:$0xff]
        %v499 = vld [vmem:[%s428 + $0x28] sm:$0xff]
        %v500 = vld [vmem:[%s428 + $0x30] sm:$0xff]
        %v501 = vld [vmem:[%s428 + $0x38] sm:$0xff]
        %v502 = vld [vmem:[%s428 + $0x40] sm:$0xff]
        %v503 = vld [vmem:[%s428 + $0x48] sm:$0xff]
        %v504 = vld [vmem:[%s428 + $0x50] sm:$0xff]
        %v505 = vld [vmem:[%s428 + $0x58] sm:$0xff]
        %v506 = vld [vmem:[%s428 + $0x60] sm:$0xff]
        %v507 = vld [vmem:[%s428 + $0x68] sm:$0xff]
        %v508 = vld [vmem:[%s428 + $0x70] sm:$0xff]
        %v509 = vld [vmem:[%s428 + $0x78] sm:$0xff]
        %v510 = vld [vmem:[%s428 + $0x80] sm:$0xff]
        %v511 = vld [vmem:[%s428 + $0x88] sm:$0xff]
        %v512 = vld [vmem:[%s428 + $0x90] sm:$0xff]
        %v513 = vld [vmem:[%s428 + $0x98] sm:$0xff]
        %v514 = vld [vmem:[%s428 + $0xa0] sm:$0xff]
        %v515 = vld [vmem:[%s428 + $0xa8] sm:$0xff]
        %v516 = vld [vmem:[%s428 + $0xb0] sm:$0xff]
        %v517 = vld [vmem:[%s428 + $0xb8] sm:$0xff]
        %v518 = vld [vmem:[%s428 + $0xc0] sm:$0xff]
        %v519 = vld [vmem:[%s428 + $0xc8] sm:$0xff]
        %v520 = vld [vmem:[%s428 + $0xd0] sm:$0xff]
        %v521 = vld [vmem:[%s428 + $0xd8] sm:$0xff]
        %v522 = vld [vmem:[%s428 + $0xe0] sm:$0xff]
        %v523 = vld [vmem:[%s428 + $0xe8] sm:$0xff]
        %v524 = vld [vmem:[%s428 + $0xf0] sm:$0xff]
        %v525 = vld [vmem:[%s428 + $0xf8] sm:$0xff]
        %v526 = vpack.c.bf16 %v496, %v494
        %v527 = vpack.c.bf16 %v497, %v495
        %v528 = vpack.c.bf16 %v500, %v498
        %v529 = vpack.c.bf16 %v501, %v499
        %v530 = vpack.c.bf16 %v504, %v502
        %v531 = vpack.c.bf16 %v505, %v503
        %v532 = vpack.c.bf16 %v508, %v506
        %v533 = vpack.c.bf16 %v509, %v507
        %v534 = vpack.c.bf16 %v512, %v510
        %v535 = vpack.c.bf16 %v513, %v511
        %v536 = vpack.c.bf16 %v516, %v514
        %v537 = vpack.c.bf16 %v517, %v515
        %v538 = vpack.c.bf16 %v520, %v518
        %v539 = vpack.c.bf16 %v521, %v519
        %v540 = vpack.c.bf16 %v524, %v522
        %v541 = vpack.c.bf16 %v525, %v523
        %v542 = vld [vmem:[#allocation5] sm:$0xff]
        %v543 = vld [vmem:[#allocation5 + $0x8] sm:$0xff]
        %v544 = vld [vmem:[#allocation5 + $0x10] sm:$0xff]
        %v545 = vld [vmem:[#allocation5 + $0x18] sm:$0xff]
        %v546 = vld [vmem:[#allocation5 + $0x20] sm:$0xff]
        %v547 = vld [vmem:[#allocation5 + $0x28] sm:$0xff]
        %v548 = vld [vmem:[#allocation5 + $0x30] sm:$0xff]
        %v549 = vld [vmem:[#allocation5 + $0x38] sm:$0xff]
        %v550 = vld [vmem:[#allocation5 + $0x40] sm:$0xff]
        %v551 = vld [vmem:[#allocation5 + $0x48] sm:$0xff]
        %v552 = vld [vmem:[#allocation5 + $0x50] sm:$0xff]
        %v553 = vld [vmem:[#allocation5 + $0x58] sm:$0xff]
        %v554 = vld [vmem:[#allocation5 + $0x60] sm:$0xff]
        %v555 = vld [vmem:[#allocation5 + $0x68] sm:$0xff]
        %v556 = vld [vmem:[#allocation5 + $0x70] sm:$0xff]
        %v557 = vld [vmem:[#allocation5 + $0x78] sm:$0xff]
        %v558 = vld [vmem:[#allocation5 + $0x80] sm:$0xff]
        %v559 = vld [vmem:[#allocation5 + $0x88] sm:$0xff]
        %v560 = vld [vmem:[#allocation5 + $0x90] sm:$0xff]
        %v561 = vld [vmem:[#allocation5 + $0x98] sm:$0xff]
        %v562 = vld [vmem:[#allocation5 + $0xa0] sm:$0xff]
        %v563 = vld [vmem:[#allocation5 + $0xa8] sm:$0xff]
        %v564 = vld [vmem:[#allocation5 + $0xb0] sm:$0xff]
        %v565 = vld [vmem:[#allocation5 + $0xb8] sm:$0xff]
        %v566 = vld [vmem:[#allocation5 + $0xc0] sm:$0xff]
        %v567 = vld [vmem:[#allocation5 + $0xc8] sm:$0xff]
        %v568 = vld [vmem:[#allocation5 + $0xd0] sm:$0xff]
        %v569 = vld [vmem:[#allocation5 + $0xd8] sm:$0xff]
        %v570 = vld [vmem:[#allocation5 + $0xe0] sm:$0xff]
        %v571 = vld [vmem:[#allocation5 + $0xe8] sm:$0xff]
        %v572 = vld [vmem:[#allocation5 + $0xf0] sm:$0xff]
        %v573 = vld [vmem:[#allocation5 + $0xf8] sm:$0xff]
        %v574 = vld [vmem:[#allocation5 + $0x100] sm:$0xff]
        %v575 = vld [vmem:[#allocation5 + $0x108] sm:$0xff]
        %v576 = vld [vmem:[#allocation5 + $0x110] sm:$0xff]
        %v577 = vld [vmem:[#allocation5 + $0x118] sm:$0xff]
        %v578 = vld [vmem:[#allocation5 + $0x120] sm:$0xff]
        %v579 = vld [vmem:[#allocation5 + $0x128] sm:$0xff]
        %v580 = vld [vmem:[#allocation5 + $0x130] sm:$0xff]
        %v581 = vld [vmem:[#allocation5 + $0x138] sm:$0xff]
        %v582 = vld [vmem:[#allocation5 + $0x140] sm:$0xff]
        %v583 = vld [vmem:[#allocation5 + $0x148] sm:$0xff]
        %v584 = vld [vmem:[#allocation5 + $0x150] sm:$0xff]
        %v585 = vld [vmem:[#allocation5 + $0x158] sm:$0xff]
        %v586 = vld [vmem:[#allocation5 + $0x160] sm:$0xff]
        %v587 = vld [vmem:[#allocation5 + $0x168] sm:$0xff]
        %v588 = vld [vmem:[#allocation5 + $0x170] sm:$0xff]
        %v589 = vld [vmem:[#allocation5 + $0x178] sm:$0xff]
        %v590 = vld [vmem:[#allocation5 + $0x180] sm:$0xff]
        %v591 = vld [vmem:[#allocation5 + $0x188] sm:$0xff]
        %v592 = vld [vmem:[#allocation5 + $0x190] sm:$0xff]
        %v593 = vld [vmem:[#allocation5 + $0x198] sm:$0xff]
        %v594 = vld [vmem:[#allocation5 + $0x1a0] sm:$0xff]
        %v595 = vld [vmem:[#allocation5 + $0x1a8] sm:$0xff]
        %v596 = vld [vmem:[#allocation5 + $0x1b0] sm:$0xff]
        %v597 = vld [vmem:[#allocation5 + $0x1b8] sm:$0xff]
        %v598 = vld [vmem:[#allocation5 + $0x1c0] sm:$0xff]
        %v599 = vld [vmem:[#allocation5 + $0x1c8] sm:$0xff]
        %v600 = vld [vmem:[#allocation5 + $0x1d0] sm:$0xff]
        %v601 = vld [vmem:[#allocation5 + $0x1d8] sm:$0xff]
        %v602 = vld [vmem:[#allocation5 + $0x1e0] sm:$0xff]
        %v603 = vld [vmem:[#allocation5 + $0x1e8] sm:$0xff]
        %v604 = vld [vmem:[#allocation5 + $0x1f0] sm:$0xff]
        %v605 = vld [vmem:[#allocation5 + $0x1f8] sm:$0xff]
        %v606 = vld [vmem:[#allocation5 + $0x200] sm:$0xff]
        %v607 = vld [vmem:[#allocation5 + $0x208] sm:$0xff]
        %v608 = vld [vmem:[#allocation5 + $0x210] sm:$0xff]
        %v609 = vld [vmem:[#allocation5 + $0x218] sm:$0xff]
        %v610 = vld [vmem:[#allocation5 + $0x220] sm:$0xff]
        %v611 = vld [vmem:[#allocation5 + $0x228] sm:$0xff]
        %v612 = vld [vmem:[#allocation5 + $0x230] sm:$0xff]
        %v613 = vld [vmem:[#allocation5 + $0x238] sm:$0xff]
        %v614 = vld [vmem:[#allocation5 + $0x240] sm:$0xff]
        %v615 = vld [vmem:[#allocation5 + $0x248] sm:$0xff]
        %v616 = vld [vmem:[#allocation5 + $0x250] sm:$0xff]
        %v617 = vld [vmem:[#allocation5 + $0x258] sm:$0xff]
        %v618 = vld [vmem:[#allocation5 + $0x260] sm:$0xff]
        %v619 = vld [vmem:[#allocation5 + $0x268] sm:$0xff]
        %v620 = vld [vmem:[#allocation5 + $0x270] sm:$0xff]
        %v621 = vld [vmem:[#allocation5 + $0x278] sm:$0xff]
        %v622 = vld [vmem:[#allocation5 + $0x280] sm:$0xff]
        %v623 = vld [vmem:[#allocation5 + $0x288] sm:$0xff]
        %v624 = vld [vmem:[#allocation5 + $0x290] sm:$0xff]
        %v625 = vld [vmem:[#allocation5 + $0x298] sm:$0xff]
        %v626 = vld [vmem:[#allocation5 + $0x2a0] sm:$0xff]
        %v627 = vld [vmem:[#allocation5 + $0x2a8] sm:$0xff]
        %v628 = vld [vmem:[#allocation5 + $0x2b0] sm:$0xff]
        %v629 = vld [vmem:[#allocation5 + $0x2b8] sm:$0xff]
        %v630 = vld [vmem:[#allocation5 + $0x2c0] sm:$0xff]
        %v631 = vld [vmem:[#allocation5 + $0x2c8] sm:$0xff]
        %v632 = vld [vmem:[#allocation5 + $0x2d0] sm:$0xff]
        %v633 = vld [vmem:[#allocation5 + $0x2d8] sm:$0xff]
        %v634 = vld [vmem:[#allocation5 + $0x2e0] sm:$0xff]
        %v635 = vld [vmem:[#allocation5 + $0x2e8] sm:$0xff]
        %v636 = vld [vmem:[#allocation5 + $0x2f0] sm:$0xff]
        %v637 = vld [vmem:[#allocation5 + $0x2f8] sm:$0xff]
        %v638 = vld [vmem:[#allocation5 + $0x300] sm:$0xff]
        %v639 = vld [vmem:[#allocation5 + $0x308] sm:$0xff]
        %v640 = vld [vmem:[#allocation5 + $0x310] sm:$0xff]
        %v641 = vld [vmem:[#allocation5 + $0x318] sm:$0xff]
        %v642 = vld [vmem:[#allocation5 + $0x320] sm:$0xff]
        %v643 = vld [vmem:[#allocation5 + $0x328] sm:$0xff]
        %v644 = vld [vmem:[#allocation5 + $0x330] sm:$0xff]
        %v645 = vld [vmem:[#allocation5 + $0x338] sm:$0xff]
        %v646 = vld [vmem:[#allocation5 + $0x340] sm:$0xff]
        %v647 = vld [vmem:[#allocation5 + $0x348] sm:$0xff]
        %v648 = vld [vmem:[#allocation5 + $0x350] sm:$0xff]
        %v649 = vld [vmem:[#allocation5 + $0x358] sm:$0xff]
        %v650 = vld [vmem:[#allocation5 + $0x360] sm:$0xff]
        %v651 = vld [vmem:[#allocation5 + $0x368] sm:$0xff]
        %v652 = vld [vmem:[#allocation5 + $0x370] sm:$0xff]
        %v653 = vld [vmem:[#allocation5 + $0x378] sm:$0xff]
        %v654 = vld [vmem:[#allocation5 + $0x380] sm:$0xff]
        %v655 = vld [vmem:[#allocation5 + $0x388] sm:$0xff]
        %v656 = vld [vmem:[#allocation5 + $0x390] sm:$0xff]
        %v657 = vld [vmem:[#allocation5 + $0x398] sm:$0xff]
        %v658 = vld [vmem:[#allocation5 + $0x3a0] sm:$0xff]
        %v659 = vld [vmem:[#allocation5 + $0x3a8] sm:$0xff]
        %v660 = vld [vmem:[#allocation5 + $0x3b0] sm:$0xff]
        %v661 = vld [vmem:[#allocation5 + $0x3b8] sm:$0xff]
        %v662 = vld [vmem:[#allocation5 + $0x3c0] sm:$0xff]
        %v663 = vld [vmem:[#allocation5 + $0x3c8] sm:$0xff]
        %v664 = vld [vmem:[#allocation5 + $0x3d0] sm:$0xff]
        %v665 = vld [vmem:[#allocation5 + $0x3d8] sm:$0xff]
        %v666 = vld [vmem:[#allocation5 + $0x3e0] sm:$0xff]
        %v667 = vld [vmem:[#allocation5 + $0x3e8] sm:$0xff]
        %v668 = vld [vmem:[#allocation5 + $0x3f0] sm:$0xff]
        %v669 = vld [vmem:[#allocation5 + $0x3f8] sm:$0xff]
        %v670 = vld [vmem:[#allocation7] sm:$0xff]
        %v672 = vlaneseq
        %v673 = vshrl.u32 %v672, 7
        %v674 = vsub.s32 0, %v673
        %v675 = vrot.slane %v670, %v674
        %v676 = vlaneseq
        %v677 = vshrl.u32 %v676, 7
        %v678 = vsub.s32 1, %v677
        %v679 = vrot.slane %v670, %v678
        %v680 = vlaneseq
        %v681 = vshrl.u32 %v680, 7
        %v682 = vsub.s32 2, %v681
        %v683 = vrot.slane %v670, %v682
        %v684 = vlaneseq
        %v685 = vshrl.u32 %v684, 7
        %v686 = vsub.s32 3, %v685
        %v687 = vrot.slane %v670, %v686
        %v688 = vlaneseq
        %v689 = vshrl.u32 %v688, 7
        %v690 = vsub.s32 4, %v689
        %v691 = vrot.slane %v670, %v690
        %v692 = vlaneseq
        %v693 = vshrl.u32 %v692, 7
        %v694 = vsub.s32 5, %v693
        %v695 = vrot.slane %v670, %v694
        %v696 = vlaneseq
        %v697 = vshrl.u32 %v696, 7
        %v698 = vsub.s32 6, %v697
        %v699 = vrot.slane %v670, %v698
        %v700 = vlaneseq
        %v701 = vshrl.u32 %v700, 7
        %v702 = vsub.s32 7, %v701
        %v703 = vrot.slane %v670, %v702
        %v840 = vunpack.c.l.b16 %v542
        %v841 = vunpack.c.h.b16 %v542
        %v842 = vunpack.c.l.b16 %v543
        %v843 = vunpack.c.h.b16 %v543
        %v844 = vunpack.c.l.b16 %v544
        %v845 = vunpack.c.h.b16 %v544
        %v846 = vunpack.c.l.b16 %v545
        %v847 = vunpack.c.h.b16 %v545
        %v848 = vunpack.c.l.b16 %v546
        %v849 = vunpack.c.h.b16 %v546
        %v850 = vunpack.c.l.b16 %v547
        %v851 = vunpack.c.h.b16 %v547
        %v852 = vunpack.c.l.b16 %v548
        %v853 = vunpack.c.h.b16 %v548
        %v854 = vunpack.c.l.b16 %v549
        %v855 = vunpack.c.h.b16 %v549
        %v856 = vunpack.c.l.b16 %v550
        %v857 = vunpack.c.h.b16 %v550
        %v858 = vunpack.c.l.b16 %v551
        %v859 = vunpack.c.h.b16 %v551
        %v860 = vunpack.c.l.b16 %v552
        %v861 = vunpack.c.h.b16 %v552
        %v862 = vunpack.c.l.b16 %v553
        %v863 = vunpack.c.h.b16 %v553
        %v864 = vunpack.c.l.b16 %v554
        %v865 = vunpack.c.h.b16 %v554
        %v866 = vunpack.c.l.b16 %v555
        %v867 = vunpack.c.h.b16 %v555
        %v868 = vunpack.c.l.b16 %v556
        %v869 = vunpack.c.h.b16 %v556
        %v870 = vunpack.c.l.b16 %v557
        %v871 = vunpack.c.h.b16 %v557
        %v872 = vunpack.c.l.b16 %v558
        %v873 = vunpack.c.h.b16 %v558
        %v874 = vunpack.c.l.b16 %v559
        %v875 = vunpack.c.h.b16 %v559
        %v876 = vunpack.c.l.b16 %v560
        %v877 = vunpack.c.h.b16 %v560
        %v878 = vunpack.c.l.b16 %v561
        %v879 = vunpack.c.h.b16 %v561
        %v880 = vunpack.c.l.b16 %v562
        %v881 = vunpack.c.h.b16 %v562
        %v882 = vunpack.c.l.b16 %v563
        %v883 = vunpack.c.h.b16 %v563
        %v884 = vunpack.c.l.b16 %v564
        %v885 = vunpack.c.h.b16 %v564
        %v886 = vunpack.c.l.b16 %v565
        %v887 = vunpack.c.h.b16 %v565
        %v888 = vunpack.c.l.b16 %v566
        %v889 = vunpack.c.h.b16 %v566
        %v890 = vunpack.c.l.b16 %v567
        %v891 = vunpack.c.h.b16 %v567
        %v892 = vunpack.c.l.b16 %v568
        %v893 = vunpack.c.h.b16 %v568
        %v894 = vunpack.c.l.b16 %v569
        %v895 = vunpack.c.h.b16 %v569
        %v896 = vunpack.c.l.b16 %v570
        %v897 = vunpack.c.h.b16 %v570
        %v898 = vunpack.c.l.b16 %v571
        %v899 = vunpack.c.h.b16 %v571
        %v900 = vunpack.c.l.b16 %v572
        %v901 = vunpack.c.h.b16 %v572
        %v902 = vunpack.c.l.b16 %v573
        %v903 = vunpack.c.h.b16 %v573
        %v904 = vunpack.c.l.b16 %v574
        %v905 = vunpack.c.h.b16 %v574
        %v906 = vunpack.c.l.b16 %v575
        %v907 = vunpack.c.h.b16 %v575
        %v908 = vunpack.c.l.b16 %v576
        %v909 = vunpack.c.h.b16 %v576
        %v910 = vunpack.c.l.b16 %v577
        %v911 = vunpack.c.h.b16 %v577
        %v912 = vunpack.c.l.b16 %v578
        %v913 = vunpack.c.h.b16 %v578
        %v914 = vunpack.c.l.b16 %v579
        %v915 = vunpack.c.h.b16 %v579
        %v916 = vunpack.c.l.b16 %v580
        %v917 = vunpack.c.h.b16 %v580
        %v918 = vunpack.c.l.b16 %v581
        %v919 = vunpack.c.h.b16 %v581
        %v920 = vunpack.c.l.b16 %v582
        %v921 = vunpack.c.h.b16 %v582
        %v922 = vunpack.c.l.b16 %v583
        %v923 = vunpack.c.h.b16 %v583
        %v924 = vunpack.c.l.b16 %v584
        %v925 = vunpack.c.h.b16 %v584
        %v926 = vunpack.c.l.b16 %v585
        %v927 = vunpack.c.h.b16 %v585
        %v928 = vunpack.c.l.b16 %v586
        %v929 = vunpack.c.h.b16 %v586
        %v930 = vunpack.c.l.b16 %v587
        %v931 = vunpack.c.h.b16 %v587
        %v932 = vunpack.c.l.b16 %v588
        %v933 = vunpack.c.h.b16 %v588
        %v934 = vunpack.c.l.b16 %v589
        %v935 = vunpack.c.h.b16 %v589
        %v936 = vunpack.c.l.b16 %v590
        %v937 = vunpack.c.h.b16 %v590
        %v938 = vunpack.c.l.b16 %v591
        %v939 = vunpack.c.h.b16 %v591
        %v940 = vunpack.c.l.b16 %v592
        %v941 = vunpack.c.h.b16 %v592
        %v942 = vunpack.c.l.b16 %v593
        %v943 = vunpack.c.h.b16 %v593
        %v944 = vunpack.c.l.b16 %v594
        %v945 = vunpack.c.h.b16 %v594
        %v946 = vunpack.c.l.b16 %v595
        %v947 = vunpack.c.h.b16 %v595
        %v948 = vunpack.c.l.b16 %v596
        %v949 = vunpack.c.h.b16 %v596
        %v950 = vunpack.c.l.b16 %v597
        %v951 = vunpack.c.h.b16 %v597
        %v952 = vunpack.c.l.b16 %v598
        %v953 = vunpack.c.h.b16 %v598
        %v954 = vunpack.c.l.b16 %v599
        %v955 = vunpack.c.h.b16 %v599
        %v956 = vunpack.c.l.b16 %v600
        %v957 = vunpack.c.h.b16 %v600
        %v958 = vunpack.c.l.b16 %v601
        %v959 = vunpack.c.h.b16 %v601
        %v960 = vunpack.c.l.b16 %v602
        %v961 = vunpack.c.h.b16 %v602
        %v962 = vunpack.c.l.b16 %v603
        %v963 = vunpack.c.h.b16 %v603
        %v964 = vunpack.c.l.b16 %v604
        %v965 = vunpack.c.h.b16 %v604
        %v966 = vunpack.c.l.b16 %v605
        %v967 = vunpack.c.h.b16 %v605
        %v968 = vunpack.c.l.b16 %v606
        %v969 = vunpack.c.h.b16 %v606
        %v970 = vunpack.c.l.b16 %v607
        %v971 = vunpack.c.h.b16 %v607
        %v972 = vunpack.c.l.b16 %v608
        %v973 = vunpack.c.h.b16 %v608
        %v974 = vunpack.c.l.b16 %v609
        %v975 = vunpack.c.h.b16 %v609
        %v976 = vunpack.c.l.b16 %v610
        %v977 = vunpack.c.h.b16 %v610
        %v978 = vunpack.c.l.b16 %v611
        %v979 = vunpack.c.h.b16 %v611
        %v980 = vunpack.c.l.b16 %v612
        %v981 = vunpack.c.h.b16 %v612
        %v982 = vunpack.c.l.b16 %v613
        %v983 = vunpack.c.h.b16 %v613
        %v984 = vunpack.c.l.b16 %v614
        %v985 = vunpack.c.h.b16 %v614
        %v986 = vunpack.c.l.b16 %v615
        %v987 = vunpack.c.h.b16 %v615
        %v988 = vunpack.c.l.b16 %v616
        %v989 = vunpack.c.h.b16 %v616
        %v990 = vunpack.c.l.b16 %v617
        %v991 = vunpack.c.h.b16 %v617
        %v992 = vunpack.c.l.b16 %v618
        %v993 = vunpack.c.h.b16 %v618
        %v994 = vunpack.c.l.b16 %v619
        %v995 = vunpack.c.h.b16 %v619
        %v996 = vunpack.c.l.b16 %v620
        %v997 = vunpack.c.h.b16 %v620
        %v998 = vunpack.c.l.b16 %v621
        %v999 = vunpack.c.h.b16 %v621
        %v1000 = vunpack.c.l.b16 %v622
        %v1001 = vunpack.c.h.b16 %v622
        %v1002 = vunpack.c.l.b16 %v623
        %v1003 = vunpack.c.h.b16 %v623
        %v1004 = vunpack.c.l.b16 %v624
        %v1005 = vunpack.c.h.b16 %v624
        %v1006 = vunpack.c.l.b16 %v625
        %v1007 = vunpack.c.h.b16 %v625
        %v1008 = vunpack.c.l.b16 %v626
        %v1009 = vunpack.c.h.b16 %v626
        %v1010 = vunpack.c.l.b16 %v627
        %v1011 = vunpack.c.h.b16 %v627
        %v1012 = vunpack.c.l.b16 %v628
        %v1013 = vunpack.c.h.b16 %v628
        %v1014 = vunpack.c.l.b16 %v629
        %v1015 = vunpack.c.h.b16 %v629
        %v1016 = vunpack.c.l.b16 %v630
        %v1017 = vunpack.c.h.b16 %v630
        %v1018 = vunpack.c.l.b16 %v631
        %v1019 = vunpack.c.h.b16 %v631
        %v1020 = vunpack.c.l.b16 %v632
        %v1021 = vunpack.c.h.b16 %v632
        %v1022 = vunpack.c.l.b16 %v633
        %v1023 = vunpack.c.h.b16 %v633
        %v1024 = vunpack.c.l.b16 %v634
        %v1025 = vunpack.c.h.b16 %v634
        %v1026 = vunpack.c.l.b16 %v635
        %v1027 = vunpack.c.h.b16 %v635
        %v1028 = vunpack.c.l.b16 %v636
        %v1029 = vunpack.c.h.b16 %v636
        %v1030 = vunpack.c.l.b16 %v637
        %v1031 = vunpack.c.h.b16 %v637
        %v1032 = vunpack.c.l.b16 %v638
        %v1033 = vunpack.c.h.b16 %v638
        %v1034 = vunpack.c.l.b16 %v639
        %v1035 = vunpack.c.h.b16 %v639
        %v1036 = vunpack.c.l.b16 %v640
        %v1037 = vunpack.c.h.b16 %v640
        %v1038 = vunpack.c.l.b16 %v641
        %v1039 = vunpack.c.h.b16 %v641
        %v1040 = vunpack.c.l.b16 %v642
        %v1041 = vunpack.c.h.b16 %v642
        %v1042 = vunpack.c.l.b16 %v643
        %v1043 = vunpack.c.h.b16 %v643
        %v1044 = vunpack.c.l.b16 %v644
        %v1045 = vunpack.c.h.b16 %v644
        %v1046 = vunpack.c.l.b16 %v645
        %v1047 = vunpack.c.h.b16 %v645
        %v1048 = vunpack.c.l.b16 %v646
        %v1049 = vunpack.c.h.b16 %v646
        %v1050 = vunpack.c.l.b16 %v647
        %v1051 = vunpack.c.h.b16 %v647
        %v1052 = vunpack.c.l.b16 %v648
        %v1053 = vunpack.c.h.b16 %v648
        %v1054 = vunpack.c.l.b16 %v649
        %v1055 = vunpack.c.h.b16 %v649
        %v1056 = vunpack.c.l.b16 %v650
        %v1057 = vunpack.c.h.b16 %v650
        %v1058 = vunpack.c.l.b16 %v651
        %v1059 = vunpack.c.h.b16 %v651
        %v1060 = vunpack.c.l.b16 %v652
        %v1061 = vunpack.c.h.b16 %v652
        %v1062 = vunpack.c.l.b16 %v653
        %v1063 = vunpack.c.h.b16 %v653
        %v1064 = vunpack.c.l.b16 %v654
        %v1065 = vunpack.c.h.b16 %v654
        %v1066 = vunpack.c.l.b16 %v655
        %v1067 = vunpack.c.h.b16 %v655
        %v1068 = vunpack.c.l.b16 %v656
        %v1069 = vunpack.c.h.b16 %v656
        %v1070 = vunpack.c.l.b16 %v657
        %v1071 = vunpack.c.h.b16 %v657
        %v1072 = vunpack.c.l.b16 %v658
        %v1073 = vunpack.c.h.b16 %v658
        %v1074 = vunpack.c.l.b16 %v659
        %v1075 = vunpack.c.h.b16 %v659
        %v1076 = vunpack.c.l.b16 %v660
        %v1077 = vunpack.c.h.b16 %v660
        %v1078 = vunpack.c.l.b16 %v661
        %v1079 = vunpack.c.h.b16 %v661
        %v1080 = vunpack.c.l.b16 %v662
        %v1081 = vunpack.c.h.b16 %v662
        %v1082 = vunpack.c.l.b16 %v663
        %v1083 = vunpack.c.h.b16 %v663
        %v1084 = vunpack.c.l.b16 %v664
        %v1085 = vunpack.c.h.b16 %v664
        %v1086 = vunpack.c.l.b16 %v665
        %v1087 = vunpack.c.h.b16 %v665
        %v1088 = vunpack.c.l.b16 %v666
        %v1089 = vunpack.c.h.b16 %v666
        %v1090 = vunpack.c.l.b16 %v667
        %v1091 = vunpack.c.h.b16 %v667
        %v1092 = vunpack.c.l.b16 %v668
        %v1093 = vunpack.c.h.b16 %v668
        %v1094 = vunpack.c.l.b16 %v669
        %v1095 = vunpack.c.h.b16 %v669
        %v1096 = vpack.c.b16 %v848, %v840
        %v1097 = vpack.c.b16 %v849, %v841
        %v1098 = vpack.c.b16 %v850, %v842
        %v1099 = vpack.c.b16 %v851, %v843
        %v1100 = vpack.c.b16 %v852, %v844
        %v1101 = vpack.c.b16 %v853, %v845
        %v1102 = vpack.c.b16 %v854, %v846
        %v1103 = vpack.c.b16 %v855, %v847
        %v1104 = vpack.c.b16 %v864, %v856
        %v1105 = vpack.c.b16 %v865, %v857
        %v1106 = vpack.c.b16 %v866, %v858
        %v1107 = vpack.c.b16 %v867, %v859
        %v1108 = vpack.c.b16 %v868, %v860
        %v1109 = vpack.c.b16 %v869, %v861
        %v1110 = vpack.c.b16 %v870, %v862
        %v1111 = vpack.c.b16 %v871, %v863
        %v1112 = vpack.c.b16 %v880, %v872
        %v1113 = vpack.c.b16 %v881, %v873
        %v1114 = vpack.c.b16 %v882, %v874
        %v1115 = vpack.c.b16 %v883, %v875
        %v1116 = vpack.c.b16 %v884, %v876
        %v1117 = vpack.c.b16 %v885, %v877
        %v1118 = vpack.c.b16 %v886, %v878
        %v1119 = vpack.c.b16 %v887, %v879
        %v1120 = vpack.c.b16 %v896, %v888
        %v1121 = vpack.c.b16 %v897, %v889
        %v1122 = vpack.c.b16 %v898, %v890
        %v1123 = vpack.c.b16 %v899, %v891
        %v1124 = vpack.c.b16 %v900, %v892
        %v1125 = vpack.c.b16 %v901, %v893
        %v1126 = vpack.c.b16 %v902, %v894
        %v1127 = vpack.c.b16 %v903, %v895
        %v1128 = vpack.c.b16 %v912, %v904
        %v1129 = vpack.c.b16 %v913, %v905
        %v1130 = vpack.c.b16 %v914, %v906
        %v1131 = vpack.c.b16 %v915, %v907
        %v1132 = vpack.c.b16 %v916, %v908
        %v1133 = vpack.c.b16 %v917, %v909
        %v1134 = vpack.c.b16 %v918, %v910
        %v1135 = vpack.c.b16 %v919, %v911
        %v1136 = vpack.c.b16 %v928, %v920
        %v1137 = vpack.c.b16 %v929, %v921
        %v1138 = vpack.c.b16 %v930, %v922
        %v1139 = vpack.c.b16 %v931, %v923
        %v1140 = vpack.c.b16 %v932, %v924
        %v1141 = vpack.c.b16 %v933, %v925
        %v1142 = vpack.c.b16 %v934, %v926
        %v1143 = vpack.c.b16 %v935, %v927
        %v1144 = vpack.c.b16 %v944, %v936
        %v1145 = vpack.c.b16 %v945, %v937
        %v1146 = vpack.c.b16 %v946, %v938
        %v1147 = vpack.c.b16 %v947, %v939
        %v1148 = vpack.c.b16 %v948, %v940
        %v1149 = vpack.c.b16 %v949, %v941
        %v1150 = vpack.c.b16 %v950, %v942
        %v1151 = vpack.c.b16 %v951, %v943
        %v1152 = vpack.c.b16 %v960, %v952
        %v1153 = vpack.c.b16 %v961, %v953
        %v1154 = vpack.c.b16 %v962, %v954
        %v1155 = vpack.c.b16 %v963, %v955
        %v1156 = vpack.c.b16 %v964, %v956
        %v1157 = vpack.c.b16 %v965, %v957
        %v1158 = vpack.c.b16 %v966, %v958
        %v1159 = vpack.c.b16 %v967, %v959
        %v1160 = vpack.c.b16 %v976, %v968
        %v1161 = vpack.c.b16 %v977, %v969
        %v1162 = vpack.c.b16 %v978, %v970
        %v1163 = vpack.c.b16 %v979, %v971
        %v1164 = vpack.c.b16 %v980, %v972
        %v1165 = vpack.c.b16 %v981, %v973
        %v1166 = vpack.c.b16 %v982, %v974
        %v1167 = vpack.c.b16 %v983, %v975
        %v1168 = vpack.c.b16 %v992, %v984
        %v1169 = vpack.c.b16 %v993, %v985
        %v1170 = vpack.c.b16 %v994, %v986
        %v1171 = vpack.c.b16 %v995, %v987
        %v1172 = vpack.c.b16 %v996, %v988
        %v1173 = vpack.c.b16 %v997, %v989
        %v1174 = vpack.c.b16 %v998, %v990
        %v1175 = vpack.c.b16 %v999, %v991
        %v1176 = vpack.c.b16 %v1008, %v1000
        %v1177 = vpack.c.b16 %v1009, %v1001
        %v1178 = vpack.c.b16 %v1010, %v1002
        %v1179 = vpack.c.b16 %v1011, %v1003
        %v1180 = vpack.c.b16 %v1012, %v1004
        %v1181 = vpack.c.b16 %v1013, %v1005
        %v1182 = vpack.c.b16 %v1014, %v1006
        %v1183 = vpack.c.b16 %v1015, %v1007
        %v1184 = vpack.c.b16 %v1024, %v1016
        %v1185 = vpack.c.b16 %v1025, %v1017
        %v1186 = vpack.c.b16 %v1026, %v1018
        %v1187 = vpack.c.b16 %v1027, %v1019
        %v1188 = vpack.c.b16 %v1028, %v1020
        %v1189 = vpack.c.b16 %v1029, %v1021
        %v1190 = vpack.c.b16 %v1030, %v1022
        %v1191 = vpack.c.b16 %v1031, %v1023
        %v1192 = vpack.c.b16 %v1040, %v1032
        %v1193 = vpack.c.b16 %v1041, %v1033
        %v1194 = vpack.c.b16 %v1042, %v1034
        %v1195 = vpack.c.b16 %v1043, %v1035
        %v1196 = vpack.c.b16 %v1044, %v1036
        %v1197 = vpack.c.b16 %v1045, %v1037
        %v1198 = vpack.c.b16 %v1046, %v1038
        %v1199 = vpack.c.b16 %v1047, %v1039
        %v1200 = vpack.c.b16 %v1056, %v1048
        %v1201 = vpack.c.b16 %v1057, %v1049
        %v1202 = vpack.c.b16 %v1058, %v1050
        %v1203 = vpack.c.b16 %v1059, %v1051
        %v1204 = vpack.c.b16 %v1060, %v1052
        %v1205 = vpack.c.b16 %v1061, %v1053
        %v1206 = vpack.c.b16 %v1062, %v1054
        %v1207 = vpack.c.b16 %v1063, %v1055
        %v1208 = vpack.c.b16 %v1072, %v1064
        %v1209 = vpack.c.b16 %v1073, %v1065
        %v1210 = vpack.c.b16 %v1074, %v1066
        %v1211 = vpack.c.b16 %v1075, %v1067
        %v1212 = vpack.c.b16 %v1076, %v1068
        %v1213 = vpack.c.b16 %v1077, %v1069
        %v1214 = vpack.c.b16 %v1078, %v1070
        %v1215 = vpack.c.b16 %v1079, %v1071
        %v1216 = vpack.c.b16 %v1088, %v1080
        %v1217 = vpack.c.b16 %v1089, %v1081
        %v1218 = vpack.c.b16 %v1090, %v1082
        %v1219 = vpack.c.b16 %v1091, %v1083
        %v1220 = vpack.c.b16 %v1092, %v1084
        %v1221 = vpack.c.b16 %v1093, %v1085
        %v1222 = vpack.c.b16 %v1094, %v1086
        %v1223 = vpack.c.b16 %v1095, %v1087
        %1352 = vmatprep.subr.bf16.mxu0 %v1097
        %1353 = vmatpush1.bf16.msra.mxu0 %v1096
        %1354 = vmatprep.subr.bf16.mxu0 %v1105
        %1355 = vmatpush1.bf16.msra.mxu0 %v1104
        %1356 = vmatprep.subr.bf16.mxu0 %v1113
        %1357 = vmatpush1.bf16.msra.mxu0 %v1112
        %1358 = vmatprep.subr.bf16.mxu0 %v1121
        %1359 = vmatpush1.bf16.msra.mxu0 %v1120
        %1360 = vmatprep.subr.bf16.mxu0 %v1129
        %1361 = vmatpush1.bf16.msra.mxu0 %v1128
        %1362 = vmatprep.subr.bf16.mxu0 %v1137
        %1363 = vmatpush1.bf16.msra.mxu0 %v1136
        %1364 = vmatprep.subr.bf16.mxu0 %v1145
        %1365 = vmatpush1.bf16.msra.mxu0 %v1144
        %1366 = vmatprep.subr.bf16.mxu0 %v1153
        %1367 = vmatpush1.bf16.msra.mxu0 %v1152
        %1368 = vmatprep.subr.bf16.mxu0 %v1161
        %1369 = vmatpush1.bf16.msra.mxu0 %v1160
        %1370 = vmatprep.subr.bf16.mxu0 %v1169
        %1371 = vmatpush1.bf16.msra.mxu0 %v1168
        %1372 = vmatprep.subr.bf16.mxu0 %v1177
        %1373 = vmatpush1.bf16.msra.mxu0 %v1176
        %1374 = vmatprep.subr.bf16.mxu0 %v1185
        %1375 = vmatpush1.bf16.msra.mxu0 %v1184
        %1376 = vmatprep.subr.bf16.mxu0 %v1193
        %1377 = vmatpush1.bf16.msra.mxu0 %v1192
        %1378 = vmatprep.subr.bf16.mxu0 %v1201
        %1379 = vmatpush1.bf16.msra.mxu0 %v1200
        %1380 = vmatprep.subr.bf16.mxu0 %v1209
        %1381 = vmatpush1.bf16.msra.mxu0 %v1208
        %1382 = vmatprep.subr.bf16.mxu0 %v1217
        %1383 = vmatpush1.bf16.msra.mxu0 %v1216
        %1384 = vmatprep.mubr.bf16.mxu0 %v527
        %1385 = vmatmul.mubr.bf16.gmra.mrb[0].mxu0 %v526
        %v1386 = vpop.f32.mrb[0].mxu0
        %v1387 = vadd.f32 %v675, %v1386
        %v1388 = vpop.f32.mrb[0].mxu0
        %v1389 = vadd.f32 %v679, %v1388
        %v1390 = vpop.f32.mrb[0].mxu0
        %v1391 = vadd.f32 %v675, %v1390
        %v1392 = vpop.f32.mrb[0].mxu0
        %v1393 = vadd.f32 %v679, %v1392
        %1394 = vmatprep.mubr.bf16.mxu0 %v529
        %1395 = vmatmul.mubr.bf16.gmra.mrb[0].mxu0 %v528
        %v1396 = vpop.f32.mrb[0].mxu0
        %v1397 = vadd.f32 %v675, %v1396
        %v1398 = vpop.f32.mrb[0].mxu0
        %v1399 = vadd.f32 %v679, %v1398
        %v1400 = vpop.f32.mrb[0].mxu0
        %v1401 = vadd.f32 %v675, %v1400
        %v1402 = vpop.f32.mrb[0].mxu0
        %v1403 = vadd.f32 %v679, %v1402
        %1404 = vmatprep.mubr.bf16.mxu0 %v531
        %1405 = vmatmul.mubr.bf16.gmra.mrb[0].mxu0 %v530
        %v1406 = vpop.f32.mrb[0].mxu0
        %v1407 = vadd.f32 %v675, %v1406
        %v1408 = vpop.f32.mrb[0].mxu0
        %v1409 = vadd.f32 %v679, %v1408
        %v1410 = vpop.f32.mrb[0].mxu0
        %v1411 = vadd.f32 %v675, %v1410
        %v1412 = vpop.f32.mrb[0].mxu0
        %v1413 = vadd.f32 %v679, %v1412
        %1414 = vmatprep.mubr.bf16.mxu0 %v533
        %1415 = vmatmul.mubr.bf16.gmra.mrb[0].mxu0 %v532
        %v1416 = vpop.f32.mrb[0].mxu0
        %v1417 = vadd.f32 %v675, %v1416
        %v1418 = vpop.f32.mrb[0].mxu0
        %v1419 = vadd.f32 %v679, %v1418
        %v1420 = vpop.f32.mrb[0].mxu0
        %v1421 = vadd.f32 %v675, %v1420
        %v1422 = vpop.f32.mrb[0].mxu0
        %v1423 = vadd.f32 %v679, %v1422
        %1424 = vmatprep.mubr.bf16.mxu0 %v535
        %1425 = vmatmul.mubr.bf16.gmra.mrb[0].mxu0 %v534
        %v1426 = vpop.f32.mrb[0].mxu0
        %v1427 = vadd.f32 %v675, %v1426
        %v1428 = vpop.f32.mrb[0].mxu0
        %v1429 = vadd.f32 %v679, %v1428
        %v1430 = vpop.f32.mrb[0].mxu0
        %v1431 = vadd.f32 %v675, %v1430
        %v1432 = vpop.f32.mrb[0].mxu0
        %v1433 = vadd.f32 %v679, %v1432
        %1434 = vmatprep.mubr.bf16.mxu0 %v537
        %1435 = vmatmul.mubr.bf16.gmra.mrb[0].mxu0 %v536
        %v1436 = vpop.f32.mrb[0].mxu0
        %v1437 = vadd.f32 %v675, %v1436
        %v1438 = vpop.f32.mrb[0].mxu0
        %v1439 = vadd.f32 %v679, %v1438
        %v1440 = vpop.f32.mrb[0].mxu0
        %v1441 = vadd.f32 %v675, %v1440
        %v1442 = vpop.f32.mrb[0].mxu0
        %v1443 = vadd.f32 %v679, %v1442
        %1444 = vmatprep.mubr.bf16.mxu0 %v539
        %1445 = vmatmul.mubr.bf16.gmra.mrb[0].mxu0 %v538
        %v1446 = vpop.f32.mrb[0].mxu0
        %v1447 = vadd.f32 %v675, %v1446
        %v1448 = vpop.f32.mrb[0].mxu0
        %v1449 = vadd.f32 %v679, %v1448
        %v1450 = vpop.f32.mrb[0].mxu0
        %v1451 = vadd.f32 %v675, %v1450
        %v1452 = vpop.f32.mrb[0].mxu0
        %v1453 = vadd.f32 %v679, %v1452
        %1454 = vmatprep.mubr.bf16.mxu0 %v541
        %1455 = vmatmul.mubr.bf16.gmra.mrb[0].mxu0 %v540
        %v1456 = vpop.f32.mrb[0].mxu0
        %v1457 = vadd.f32 %v675, %v1456
        %v1458 = vpop.f32.mrb[0].mxu0
        %v1459 = vadd.f32 %v679, %v1458
        %v1460 = vpop.f32.mrb[0].mxu0
        %v1461 = vadd.f32 %v675, %v1460
        %v1462 = vpop.f32.mrb[0].mxu0
        %v1463 = vadd.f32 %v679, %v1462
        %1464 = vdwg.mxu0
        %1465 = vmatprep.subr.bf16.mxu0 %v1099
        %1466 = vmatpush1.bf16.msra.mxu0 %v1098
        %1467 = vmatprep.subr.bf16.mxu0 %v1107
        %1468 = vmatpush1.bf16.msra.mxu0 %v1106
        %1469 = vmatprep.subr.bf16.mxu0 %v1115
        %1470 = vmatpush1.bf16.msra.mxu0 %v1114
        %1471 = vmatprep.subr.bf16.mxu0 %v1123
        %1472 = vmatpush1.bf16.msra.mxu0 %v1122
        %1473 = vmatprep.subr.bf16.mxu0 %v1131
        %1474 = vmatpush1.bf16.msra.mxu0 %v1130
        %1475 = vmatprep.subr.bf16.mxu0 %v1139
        %1476 = vmatpush1.bf16.msra.mxu0 %v1138
        %1477 = vmatprep.subr.bf16.mxu0 %v1147
        %1478 = vmatpush1.bf16.msra.mxu0 %v1146
        %1479 = vmatprep.subr.bf16.mxu0 %v1155
        %1480 = vmatpush1.bf16.msra.mxu0 %v1154
        %1481 = vmatprep.subr.bf16.mxu0 %v1163
        %1482 = vmatpush1.bf16.msra.mxu0 %v1162
        %1483 = vmatprep.subr.bf16.mxu0 %v1171
        %1484 = vmatpush1.bf16.msra.mxu0 %v1170
        %1485 = vmatprep.subr.bf16.mxu0 %v1179
        %1486 = vmatpush1.bf16.msra.mxu0 %v1178
        %1487 = vmatprep.subr.bf16.mxu0 %v1187
        %1488 = vmatpush1.bf16.msra.mxu0 %v1186
        %1489 = vmatprep.subr.bf16.mxu0 %v1195
        %1490 = vmatpush1.bf16.msra.mxu0 %v1194
        %1491 = vmatprep.subr.bf16.mxu0 %v1203
        %1492 = vmatpush1.bf16.msra.mxu0 %v1202
        %1493 = vmatprep.subr.bf16.mxu0 %v1211
        %1494 = vmatpush1.bf16.msra.mxu0 %v1210
        %1495 = vmatprep.subr.bf16.mxu0 %v1219
        %1496 = vmatpush1.bf16.msra.mxu0 %v1218
        %1497 = vmatprep.mubr.bf16.mxu0 %v527
        %1498 = vmatmul.mubr.bf16.gmra.mrb[0].mxu0 %v526
        %v1499 = vpop.f32.mrb[0].mxu0
        %v1500 = vadd.f32 %v683, %v1499
        %v1501 = vpop.f32.mrb[0].mxu0
        %v1502 = vadd.f32 %v687, %v1501
        %v1503 = vpop.f32.mrb[0].mxu0
        %v1504 = vadd.f32 %v683, %v1503
        %v1505 = vpop.f32.mrb[0].mxu0
        %v1506 = vadd.f32 %v687, %v1505
        %1507 = vmatprep.mubr.bf16.mxu0 %v529
        %1508 = vmatmul.mubr.bf16.gmra.mrb[0].mxu0 %v528
        %v1509 = vpop.f32.mrb[0].mxu0
        %v1510 = vadd.f32 %v683, %v1509
        %v1511 = vpop.f32.mrb[0].mxu0
        %v1512 = vadd.f32 %v687, %v1511
        %v1513 = vpop.f32.mrb[0].mxu0
        %v1514 = vadd.f32 %v683, %v1513
        %v1515 = vpop.f32.mrb[0].mxu0
        %v1516 = vadd.f32 %v687, %v1515
        %1517 = vmatprep.mubr.bf16.mxu0 %v531
        %1518 = vmatmul.mubr.bf16.gmra.mrb[0].mxu0 %v530
        %v1519 = vpop.f32.mrb[0].mxu0
        %v1520 = vadd.f32 %v683, %v1519
        %v1521 = vpop.f32.mrb[0].mxu0
        %v1522 = vadd.f32 %v687, %v1521
        %v1523 = vpop.f32.mrb[0].mxu0
        %v1524 = vadd.f32 %v683, %v1523
        %v1525 = vpop.f32.mrb[0].mxu0
        %v1526 = vadd.f32 %v687, %v1525
        %1527 = vmatprep.mubr.bf16.mxu0 %v533
        %1528 = vmatmul.mubr.bf16.gmra.mrb[0].mxu0 %v532
        %v1529 = vpop.f32.mrb[0].mxu0
        %v1530 = vadd.f32 %v683, %v1529
        %v1531 = vpop.f32.mrb[0].mxu0
        %v1532 = vadd.f32 %v687, %v1531
        %v1533 = vpop.f32.mrb[0].mxu0
        %v1534 = vadd.f32 %v683, %v1533
        %v1535 = vpop.f32.mrb[0].mxu0
        %v1536 = vadd.f32 %v687, %v1535
        %1537 = vmatprep.mubr.bf16.mxu0 %v535
        %1538 = vmatmul.mubr.bf16.gmra.mrb[0].mxu0 %v534
        %v1539 = vpop.f32.mrb[0].mxu0
        %v1540 = vadd.f32 %v683, %v1539
        %v1541 = vpop.f32.mrb[0].mxu0
        %v1542 = vadd.f32 %v687, %v1541
        %v1543 = vpop.f32.mrb[0].mxu0
        %v1544 = vadd.f32 %v683, %v1543
        %v1545 = vpop.f32.mrb[0].mxu0
        %v1546 = vadd.f32 %v687, %v1545
        %1547 = vmatprep.mubr.bf16.mxu0 %v537
        %1548 = vmatmul.mubr.bf16.gmra.mrb[0].mxu0 %v536
        %v1549 = vpop.f32.mrb[0].mxu0
        %v1550 = vadd.f32 %v683, %v1549
        %v1551 = vpop.f32.mrb[0].mxu0
        %v1552 = vadd.f32 %v687, %v1551
        %v1553 = vpop.f32.mrb[0].mxu0
        %v1554 = vadd.f32 %v683, %v1553
        %v1555 = vpop.f32.mrb[0].mxu0
        %v1556 = vadd.f32 %v687, %v1555
        %1557 = vmatprep.mubr.bf16.mxu0 %v539
        %1558 = vmatmul.mubr.bf16.gmra.mrb[0].mxu0 %v538
        %v1559 = vpop.f32.mrb[0].mxu0
        %v1560 = vadd.f32 %v683, %v1559
        %v1561 = vpop.f32.mrb[0].mxu0
        %v1562 = vadd.f32 %v687, %v1561
        %v1563 = vpop.f32.mrb[0].mxu0
        %v1564 = vadd.f32 %v683, %v1563
        %v1565 = vpop.f32.mrb[0].mxu0
        %v1566 = vadd.f32 %v687, %v1565
        %1567 = vmatprep.mubr.bf16.mxu0 %v541
        %1568 = vmatmul.mubr.bf16.gmra.mrb[0].mxu0 %v540
        %v1569 = vpop.f32.mrb[0].mxu0
        %v1570 = vadd.f32 %v683, %v1569
        %v1571 = vpop.f32.mrb[0].mxu0
        %v1572 = vadd.f32 %v687, %v1571
        %v1573 = vpop.f32.mrb[0].mxu0
        %v1574 = vadd.f32 %v683, %v1573
        %v1575 = vpop.f32.mrb[0].mxu0
        %v1576 = vadd.f32 %v687, %v1575
        %1577 = vdwg.mxu0
        %1578 = vmatprep.subr.bf16.mxu0 %v1101
        %1579 = vmatpush1.bf16.msra.mxu0 %v1100
        %1580 = vmatprep.subr.bf16.mxu0 %v1109
        %1581 = vmatpush1.bf16.msra.mxu0 %v1108
        %1582 = vmatprep.subr.bf16.mxu0 %v1117
        %1583 = vmatpush1.bf16.msra.mxu0 %v1116
        %1584 = vmatprep.subr.bf16.mxu0 %v1125
        %1585 = vmatpush1.bf16.msra.mxu0 %v1124
        %1586 = vmatprep.subr.bf16.mxu0 %v1133
        %1587 = vmatpush1.bf16.msra.mxu0 %v1132
        %1588 = vmatprep.subr.bf16.mxu0 %v1141
        %1589 = vmatpush1.bf16.msra.mxu0 %v1140
        %1590 = vmatprep.subr.bf16.mxu0 %v1149
        %1591 = vmatpush1.bf16.msra.mxu0 %v1148
        %1592 = vmatprep.subr.bf16.mxu0 %v1157
        %1593 = vmatpush1.bf16.msra.mxu0 %v1156
        %1594 = vmatprep.subr.bf16.mxu0 %v1165
        %1595 = vmatpush1.bf16.msra.mxu0 %v1164
        %1596 = vmatprep.subr.bf16.mxu0 %v1173
        %1597 = vmatpush1.bf16.msra.mxu0 %v1172
        %1598 = vmatprep.subr.bf16.mxu0 %v1181
        %1599 = vmatpush1.bf16.msra.mxu0 %v1180
        %1600 = vmatprep.subr.bf16.mxu0 %v1189
        %1601 = vmatpush1.bf16.msra.mxu0 %v1188
        %1602 = vmatprep.subr.bf16.mxu0 %v1197
        %1603 = vmatpush1.bf16.msra.mxu0 %v1196
        %1604 = vmatprep.subr.bf16.mxu0 %v1205
        %1605 = vmatpush1.bf16.msra.mxu0 %v1204
        %1606 = vmatprep.subr.bf16.mxu0 %v1213
        %1607 = vmatpush1.bf16.msra.mxu0 %v1212
        %1608 = vmatprep.subr.bf16.mxu0 %v1221
        %1609 = vmatpush1.bf16.msra.mxu0 %v1220
        %1610 = vmatprep.mubr.bf16.mxu0 %v527
        %1611 = vmatmul.mubr.bf16.gmra.mrb[0].mxu0 %v526
        %v1612 = vpop.f32.mrb[0].mxu0
        %v1613 = vadd.f32 %v691, %v1612
        %v1614 = vpop.f32.mrb[0].mxu0
        %v1615 = vadd.f32 %v695, %v1614
        %v1616 = vpop.f32.mrb[0].mxu0
        %v1617 = vadd.f32 %v691, %v1616
        %v1618 = vpop.f32.mrb[0].mxu0
        %v1619 = vadd.f32 %v695, %v1618
        %1620 = vmatprep.mubr.bf16.mxu0 %v529
        %1621 = vmatmul.mubr.bf16.gmra.mrb[0].mxu0 %v528
        %v1622 = vpop.f32.mrb[0].mxu0
        %v1623 = vadd.f32 %v691, %v1622
        %v1624 = vpop.f32.mrb[0].mxu0
        %v1625 = vadd.f32 %v695, %v1624
        %v1626 = vpop.f32.mrb[0].mxu0
        %v1627 = vadd.f32 %v691, %v1626
        %v1628 = vpop.f32.mrb[0].mxu0
        %v1629 = vadd.f32 %v695, %v1628
        %1630 = vmatprep.mubr.bf16.mxu0 %v531
        %1631 = vmatmul.mubr.bf16.gmra.mrb[0].mxu0 %v530
        %v1632 = vpop.f32.mrb[0].mxu0
        %v1633 = vadd.f32 %v691, %v1632
        %v1634 = vpop.f32.mrb[0].mxu0
        %v1635 = vadd.f32 %v695, %v1634
        %v1636 = vpop.f32.mrb[0].mxu0
        %v1637 = vadd.f32 %v691, %v1636
        %v1638 = vpop.f32.mrb[0].mxu0
        %v1639 = vadd.f32 %v695, %v1638
        %1640 = vmatprep.mubr.bf16.mxu0 %v533
        %1641 = vmatmul.mubr.bf16.gmra.mrb[0].mxu0 %v532
        %v1642 = vpop.f32.mrb[0].mxu0
        %v1643 = vadd.f32 %v691, %v1642
        %v1644 = vpop.f32.mrb[0].mxu0
        %v1645 = vadd.f32 %v695, %v1644
        %v1646 = vpop.f32.mrb[0].mxu0
        %v1647 = vadd.f32 %v691, %v1646
        %v1648 = vpop.f32.mrb[0].mxu0
        %v1649 = vadd.f32 %v695, %v1648
        %1650 = vmatprep.mubr.bf16.mxu0 %v535
        %1651 = vmatmul.mubr.bf16.gmra.mrb[0].mxu0 %v534
        %v1652 = vpop.f32.mrb[0].mxu0
        %v1653 = vadd.f32 %v691, %v1652
        %v1654 = vpop.f32.mrb[0].mxu0
        %v1655 = vadd.f32 %v695, %v1654
        %v1656 = vpop.f32.mrb[0].mxu0
        %v1657 = vadd.f32 %v691, %v1656
        %v1658 = vpop.f32.mrb[0].mxu0
        %v1659 = vadd.f32 %v695, %v1658
        %1660 = vmatprep.mubr.bf16.mxu0 %v537
        %1661 = vmatmul.mubr.bf16.gmra.mrb[0].mxu0 %v536
        %v1662 = vpop.f32.mrb[0].mxu0
        %v1663 = vadd.f32 %v691, %v1662
        %v1664 = vpop.f32.mrb[0].mxu0
        %v1665 = vadd.f32 %v695, %v1664
        %v1666 = vpop.f32.mrb[0].mxu0
        %v1667 = vadd.f32 %v691, %v1666
        %v1668 = vpop.f32.mrb[0].mxu0
        %v1669 = vadd.f32 %v695, %v1668
        %1670 = vmatprep.mubr.bf16.mxu0 %v539
        %1671 = vmatmul.mubr.bf16.gmra.mrb[0].mxu0 %v538
        %v1672 = vpop.f32.mrb[0].mxu0
        %v1673 = vadd.f32 %v691, %v1672
        %v1674 = vpop.f32.mrb[0].mxu0
        %v1675 = vadd.f32 %v695, %v1674
        %v1676 = vpop.f32.mrb[0].mxu0
        %v1677 = vadd.f32 %v691, %v1676
        %v1678 = vpop.f32.mrb[0].mxu0
        %v1679 = vadd.f32 %v695, %v1678
        %1680 = vmatprep.mubr.bf16.mxu0 %v541
        %1681 = vmatmul.mubr.bf16.gmra.mrb[0].mxu0 %v540
        %v1682 = vpop.f32.mrb[0].mxu0
        %v1683 = vadd.f32 %v691, %v1682
        %v1684 = vpop.f32.mrb[0].mxu0
        %v1685 = vadd.f32 %v695, %v1684
        %v1686 = vpop.f32.mrb[0].mxu0
        %v1687 = vadd.f32 %v691, %v1686
        %v1688 = vpop.f32.mrb[0].mxu0
        %v1689 = vadd.f32 %v695, %v1688
        %1690 = vdwg.mxu0
        %1691 = vmatprep.subr.bf16.mxu0 %v1103
        %1692 = vmatpush1.bf16.msra.mxu0 %v1102
        %1693 = vmatprep.subr.bf16.mxu0 %v1111
        %1694 = vmatpush1.bf16.msra.mxu0 %v1110
        %1695 = vmatprep.subr.bf16.mxu0 %v1119
        %1696 = vmatpush1.bf16.msra.mxu0 %v1118
        %1697 = vmatprep.subr.bf16.mxu0 %v1127
        %1698 = vmatpush1.bf16.msra.mxu0 %v1126
        %1699 = vmatprep.subr.bf16.mxu0 %v1135
        %1700 = vmatpush1.bf16.msra.mxu0 %v1134
        %1701 = vmatprep.subr.bf16.mxu0 %v1143
        %1702 = vmatpush1.bf16.msra.mxu0 %v1142
        %1703 = vmatprep.subr.bf16.mxu0 %v1151
        %1704 = vmatpush1.bf16.msra.mxu0 %v1150
        %1705 = vmatprep.subr.bf16.mxu0 %v1159
        %1706 = vmatpush1.bf16.msra.mxu0 %v1158
        %1707 = vmatprep.subr.bf16.mxu0 %v1167
        %1708 = vmatpush1.bf16.msra.mxu0 %v1166
        %1709 = vmatprep.subr.bf16.mxu0 %v1175
        %1710 = vmatpush1.bf16.msra.mxu0 %v1174
        %1711 = vmatprep.subr.bf16.mxu0 %v1183
        %1712 = vmatpush1.bf16.msra.mxu0 %v1182
        %1713 = vmatprep.subr.bf16.mxu0 %v1191
        %1714 = vmatpush1.bf16.msra.mxu0 %v1190
        %1715 = vmatprep.subr.bf16.mxu0 %v1199
        %1716 = vmatpush1.bf16.msra.mxu0 %v1198
        %1717 = vmatprep.subr.bf16.mxu0 %v1207
        %1718 = vmatpush1.bf16.msra.mxu0 %v1206
        %1719 = vmatprep.subr.bf16.mxu0 %v1215
        %1720 = vmatpush1.bf16.msra.mxu0 %v1214
        %1721 = vmatprep.subr.bf16.mxu0 %v1223
        %1722 = vmatpush1.bf16.msra.mxu0 %v1222
        %1723 = vmatprep.mubr.bf16.mxu0 %v527
        %1724 = vmatmul.mubr.bf16.gmra.mrb[0].mxu0 %v526
        %v1725 = vpop.f32.mrb[0].mxu0
        %v1726 = vadd.f32 %v699, %v1725
        %v1727 = vpop.f32.mrb[0].mxu0
        %v1728 = vadd.f32 %v703, %v1727
        %v1729 = vpop.f32.mrb[0].mxu0
        %v1730 = vadd.f32 %v699, %v1729
        %v1731 = vpop.f32.mrb[0].mxu0
        %v1732 = vadd.f32 %v703, %v1731
        %1733 = vmatprep.mubr.bf16.mxu0 %v529
        %1734 = vmatmul.mubr.bf16.gmra.mrb[0].mxu0 %v528
        %v1735 = vpop.f32.mrb[0].mxu0
        %v1736 = vadd.f32 %v699, %v1735
        %v1737 = vpop.f32.mrb[0].mxu0
        %v1738 = vadd.f32 %v703, %v1737
        %v1739 = vpop.f32.mrb[0].mxu0
        %v1740 = vadd.f32 %v699, %v1739
        %v1741 = vpop.f32.mrb[0].mxu0
        %v1742 = vadd.f32 %v703, %v1741
        %1743 = vmatprep.mubr.bf16.mxu0 %v531
        %1744 = vmatmul.mubr.bf16.gmra.mrb[0].mxu0 %v530
        %v1745 = vpop.f32.mrb[0].mxu0
        %v1746 = vadd.f32 %v699, %v1745
        %v1747 = vpop.f32.mrb[0].mxu0
        %v1748 = vadd.f32 %v703, %v1747
        %v1749 = vpop.f32.mrb[0].mxu0
        %v1750 = vadd.f32 %v699, %v1749
        %v1751 = vpop.f32.mrb[0].mxu0
        %v1752 = vadd.f32 %v703, %v1751
        %1753 = vmatprep.mubr.bf16.mxu0 %v533
        %1754 = vmatmul.mubr.bf16.gmra.mrb[0].mxu0 %v532
        %v1755 = vpop.f32.mrb[0].mxu0
        %v1756 = vadd.f32 %v699, %v1755
        %v1757 = vpop.f32.mrb[0].mxu0
        %v1758 = vadd.f32 %v703, %v1757
        %v1759 = vpop.f32.mrb[0].mxu0
        %v1760 = vadd.f32 %v699, %v1759
        %v1761 = vpop.f32.mrb[0].mxu0
        %v1762 = vadd.f32 %v703, %v1761
        %1763 = vmatprep.mubr.bf16.mxu0 %v535
        %1764 = vmatmul.mubr.bf16.gmra.mrb[0].mxu0 %v534
        %v1765 = vpop.f32.mrb[0].mxu0
        %v1766 = vadd.f32 %v699, %v1765
        %v1767 = vpop.f32.mrb[0].mxu0
        %v1768 = vadd.f32 %v703, %v1767
        %v1769 = vpop.f32.mrb[0].mxu0
        %v1770 = vadd.f32 %v699, %v1769
        %v1771 = vpop.f32.mrb[0].mxu0
        %v1772 = vadd.f32 %v703, %v1771
        %1773 = vmatprep.mubr.bf16.mxu0 %v537
        %1774 = vmatmul.mubr.bf16.gmra.mrb[0].mxu0 %v536
        %v1775 = vpop.f32.mrb[0].mxu0
        %v1776 = vadd.f32 %v699, %v1775
        %v1777 = vpop.f32.mrb[0].mxu0
        %v1778 = vadd.f32 %v703, %v1777
        %v1779 = vpop.f32.mrb[0].mxu0
        %v1780 = vadd.f32 %v699, %v1779
        %v1781 = vpop.f32.mrb[0].mxu0
        %v1782 = vadd.f32 %v703, %v1781
        %1783 = vmatprep.mubr.bf16.mxu0 %v539
        %1784 = vmatmul.mubr.bf16.gmra.mrb[0].mxu0 %v538
        %v1785 = vpop.f32.mrb[0].mxu0
        %v1786 = vadd.f32 %v699, %v1785
        %v1787 = vpop.f32.mrb[0].mxu0
        %v1788 = vadd.f32 %v703, %v1787
        %v1789 = vpop.f32.mrb[0].mxu0
        %v1790 = vadd.f32 %v699, %v1789
        %v1791 = vpop.f32.mrb[0].mxu0
        %v1792 = vadd.f32 %v703, %v1791
        %1793 = vmatprep.mubr.bf16.mxu0 %v541
        %1794 = vmatmul.mubr.bf16.gmra.mrb[0].mxu0 %v540
        %v1795 = vpop.f32.mrb[0].mxu0
        %v1796 = vadd.f32 %v699, %v1795
        %v1797 = vpop.f32.mrb[0].mxu0
        %v1798 = vadd.f32 %v703, %v1797
        %v1799 = vpop.f32.mrb[0].mxu0
        %v1800 = vadd.f32 %v699, %v1799
        %v1801 = vpop.f32.mrb[0].mxu0
        %v1802 = vadd.f32 %v703, %v1801
        %1803 = vdwg.mxu0
        %vm1804 = vcmp.gt.f32.partialorder %v1387, 0.0
        %vm1805 = vcmp.gt.f32.partialorder %v1389, 0.0
        %vm1806 = vcmp.gt.f32.partialorder %v1500, 0.0
        %vm1807 = vcmp.gt.f32.partialorder %v1502, 0.0
        %vm1808 = vcmp.gt.f32.partialorder %v1613, 0.0
        %vm1809 = vcmp.gt.f32.partialorder %v1615, 0.0
        %vm1810 = vcmp.gt.f32.partialorder %v1726, 0.0
        %vm1811 = vcmp.gt.f32.partialorder %v1728, 0.0
        %vm1812 = vcmp.gt.f32.partialorder %v1391, 0.0
        %vm1813 = vcmp.gt.f32.partialorder %v1393, 0.0
        %vm1814 = vcmp.gt.f32.partialorder %v1504, 0.0
        %vm1815 = vcmp.gt.f32.partialorder %v1506, 0.0
        %vm1816 = vcmp.gt.f32.partialorder %v1617, 0.0
        %vm1817 = vcmp.gt.f32.partialorder %v1619, 0.0
        %vm1818 = vcmp.gt.f32.partialorder %v1730, 0.0
        %vm1819 = vcmp.gt.f32.partialorder %v1732, 0.0
        %vm1820 = vcmp.gt.f32.partialorder %v1397, 0.0
        %vm1821 = vcmp.gt.f32.partialorder %v1399, 0.0
        %vm1822 = vcmp.gt.f32.partialorder %v1510, 0.0
        %vm1823 = vcmp.gt.f32.partialorder %v1512, 0.0
        %vm1824 = vcmp.gt.f32.partialorder %v1623, 0.0
        %vm1825 = vcmp.gt.f32.partialorder %v1625, 0.0
        %vm1826 = vcmp.gt.f32.partialorder %v1736, 0.0
        %vm1827 = vcmp.gt.f32.partialorder %v1738, 0.0
        %vm1828 = vcmp.gt.f32.partialorder %v1401, 0.0
        %vm1829 = vcmp.gt.f32.partialorder %v1403, 0.0
        %vm1830 = vcmp.gt.f32.partialorder %v1514, 0.0
        %vm1831 = vcmp.gt.f32.partialorder %v1516, 0.0
        %vm1832 = vcmp.gt.f32.partialorder %v1627, 0.0
        %vm1833 = vcmp.gt.f32.partialorder %v1629, 0.0
        %vm1834 = vcmp.gt.f32.partialorder %v1740, 0.0
        %vm1835 = vcmp.gt.f32.partialorder %v1742, 0.0
        %vm1836 = vcmp.gt.f32.partialorder %v1407, 0.0
        %vm1837 = vcmp.gt.f32.partialorder %v1409, 0.0
        %vm1838 = vcmp.gt.f32.partialorder %v1520, 0.0
        %vm1839 = vcmp.gt.f32.partialorder %v1522, 0.0
        %vm1840 = vcmp.gt.f32.partialorder %v1633, 0.0
        %vm1841 = vcmp.gt.f32.partialorder %v1635, 0.0
        %vm1842 = vcmp.gt.f32.partialorder %v1746, 0.0
        %vm1843 = vcmp.gt.f32.partialorder %v1748, 0.0
        %vm1844 = vcmp.gt.f32.partialorder %v1411, 0.0
        %vm1845 = vcmp.gt.f32.partialorder %v1413, 0.0
        %vm1846 = vcmp.gt.f32.partialorder %v1524, 0.0
        %vm1847 = vcmp.gt.f32.partialorder %v1526, 0.0
        %vm1848 = vcmp.gt.f32.partialorder %v1637, 0.0
        %vm1849 = vcmp.gt.f32.partialorder %v1639, 0.0
        %vm1850 = vcmp.gt.f32.partialorder %v1750, 0.0
        %vm1851 = vcmp.gt.f32.partialorder %v1752, 0.0
        %vm1852 = vcmp.gt.f32.partialorder %v1417, 0.0
        %vm1853 = vcmp.gt.f32.partialorder %v1419, 0.0
        %vm1854 = vcmp.gt.f32.partialorder %v1530, 0.0
        %vm1855 = vcmp.gt.f32.partialorder %v1532, 0.0
        %vm1856 = vcmp.gt.f32.partialorder %v1643, 0.0
        %vm1857 = vcmp.gt.f32.partialorder %v1645, 0.0
        %vm1858 = vcmp.gt.f32.partialorder %v1756, 0.0
        %vm1859 = vcmp.gt.f32.partialorder %v1758, 0.0
        %vm1860 = vcmp.gt.f32.partialorder %v1421, 0.0
        %vm1861 = vcmp.gt.f32.partialorder %v1423, 0.0
        %vm1862 = vcmp.gt.f32.partialorder %v1534, 0.0
        %vm1863 = vcmp.gt.f32.partialorder %v1536, 0.0
        %vm1864 = vcmp.gt.f32.partialorder %v1647, 0.0
        %vm1865 = vcmp.gt.f32.partialorder %v1649, 0.0
        %vm1866 = vcmp.gt.f32.partialorder %v1760, 0.0
        %vm1867 = vcmp.gt.f32.partialorder %v1762, 0.0
        %vm1868 = vcmp.gt.f32.partialorder %v1427, 0.0
        %vm1869 = vcmp.gt.f32.partialorder %v1429, 0.0
        %vm1870 = vcmp.gt.f32.partialorder %v1540, 0.0
        %vm1871 = vcmp.gt.f32.partialorder %v1542, 0.0
        %vm1872 = vcmp.gt.f32.partialorder %v1653, 0.0
        %vm1873 = vcmp.gt.f32.partialorder %v1655, 0.0
        %vm1874 = vcmp.gt.f32.partialorder %v1766, 0.0
        %vm1875 = vcmp.gt.f32.partialorder %v1768, 0.0
        %vm1876 = vcmp.gt.f32.partialorder %v1431, 0.0
        %vm1877 = vcmp.gt.f32.partialorder %v1433, 0.0
        %vm1878 = vcmp.gt.f32.partialorder %v1544, 0.0
        %vm1879 = vcmp.gt.f32.partialorder %v1546, 0.0
        %vm1880 = vcmp.gt.f32.partialorder %v1657, 0.0
        %vm1881 = vcmp.gt.f32.partialorder %v1659, 0.0
        %vm1882 = vcmp.gt.f32.partialorder %v1770, 0.0
        %vm1883 = vcmp.gt.f32.partialorder %v1772, 0.0
        %vm1884 = vcmp.gt.f32.partialorder %v1437, 0.0
        %vm1885 = vcmp.gt.f32.partialorder %v1439, 0.0
        %vm1886 = vcmp.gt.f32.partialorder %v1550, 0.0
        %vm1887 = vcmp.gt.f32.partialorder %v1552, 0.0
        %vm1888 = vcmp.gt.f32.partialorder %v1663, 0.0
        %vm1889 = vcmp.gt.f32.partialorder %v1665, 0.0
        %vm1890 = vcmp.gt.f32.partialorder %v1776, 0.0
        %vm1891 = vcmp.gt.f32.partialorder %v1778, 0.0
        %vm1892 = vcmp.gt.f32.partialorder %v1441, 0.0
        %vm1893 = vcmp.gt.f32.partialorder %v1443, 0.0
        %vm1894 = vcmp.gt.f32.partialorder %v1554, 0.0
        %vm1895 = vcmp.gt.f32.partialorder %v1556, 0.0
        %vm1896 = vcmp.gt.f32.partialorder %v1667, 0.0
        %vm1897 = vcmp.gt.f32.partialorder %v1669, 0.0
        %vm1898 = vcmp.gt.f32.partialorder %v1780, 0.0
        %vm1899 = vcmp.gt.f32.partialorder %v1782, 0.0
        %vm1900 = vcmp.gt.f32.partialorder %v1447, 0.0
        %vm1901 = vcmp.gt.f32.partialorder %v1449, 0.0
        %vm1902 = vcmp.gt.f32.partialorder %v1560, 0.0
        %vm1903 = vcmp.gt.f32.partialorder %v1562, 0.0
        %vm1904 = vcmp.gt.f32.partialorder %v1673, 0.0
        %vm1905 = vcmp.gt.f32.partialorder %v1675, 0.0
        %vm1906 = vcmp.gt.f32.partialorder %v1786, 0.0
        %vm1907 = vcmp.gt.f32.partialorder %v1788, 0.0
        %vm1908 = vcmp.gt.f32.partialorder %v1451, 0.0
        %vm1909 = vcmp.gt.f32.partialorder %v1453, 0.0
        %vm1910 = vcmp.gt.f32.partialorder %v1564, 0.0
        %vm1911 = vcmp.gt.f32.partialorder %v1566, 0.0
        %vm1912 = vcmp.gt.f32.partialorder %v1677, 0.0
        %vm1913 = vcmp.gt.f32.partialorder %v1679, 0.0
        %vm1914 = vcmp.gt.f32.partialorder %v1790, 0.0
        %vm1915 = vcmp.gt.f32.partialorder %v1792, 0.0
        %vm1916 = vcmp.gt.f32.partialorder %v1457, 0.0
        %vm1917 = vcmp.gt.f32.partialorder %v1459, 0.0
        %vm1918 = vcmp.gt.f32.partialorder %v1570, 0.0
        %vm1919 = vcmp.gt.f32.partialorder %v1572, 0.0
        %vm1920 = vcmp.gt.f32.partialorder %v1683, 0.0
        %vm1921 = vcmp.gt.f32.partialorder %v1685, 0.0
        %vm1922 = vcmp.gt.f32.partialorder %v1796, 0.0
        %vm1923 = vcmp.gt.f32.partialorder %v1798, 0.0
        %vm1924 = vcmp.gt.f32.partialorder %v1461, 0.0
        %vm1925 = vcmp.gt.f32.partialorder %v1463, 0.0
        %vm1926 = vcmp.gt.f32.partialorder %v1574, 0.0
        %vm1927 = vcmp.gt.f32.partialorder %v1576, 0.0
        %vm1928 = vcmp.gt.f32.partialorder %v1687, 0.0
        %vm1929 = vcmp.gt.f32.partialorder %v1689, 0.0
        %vm1930 = vcmp.gt.f32.partialorder %v1800, 0.0
        %vm1931 = vcmp.gt.f32.partialorder %v1802, 0.0
        %v1932 = vmul.f32 %v1387, 0.01
        %v1933 = vmul.f32 %v1389, 0.01
        %v1934 = vmul.f32 %v1500, 0.01
        %v1935 = vmul.f32 %v1502, 0.01
        %v1936 = vmul.f32 %v1613, 0.01
        %v1937 = vmul.f32 %v1615, 0.01
        %v1938 = vmul.f32 %v1726, 0.01
        %v1939 = vmul.f32 %v1728, 0.01
        %v1940 = vmul.f32 %v1391, 0.01
        %v1941 = vmul.f32 %v1393, 0.01
        %v1942 = vmul.f32 %v1504, 0.01
        %v1943 = vmul.f32 %v1506, 0.01
        %v1944 = vmul.f32 %v1617, 0.01
        %v1945 = vmul.f32 %v1619, 0.01
        %v1946 = vmul.f32 %v1730, 0.01
        %v1947 = vmul.f32 %v1732, 0.01
        %v1948 = vmul.f32 %v1397, 0.01
        %v1949 = vmul.f32 %v1399, 0.01
        %v1950 = vmul.f32 %v1510, 0.01
        %v1951 = vmul.f32 %v1512, 0.01
        %v1952 = vmul.f32 %v1623, 0.01
        %v1953 = vmul.f32 %v1625, 0.01
        %v1954 = vmul.f32 %v1736, 0.01
        %v1955 = vmul.f32 %v1738, 0.01
        %v1956 = vmul.f32 %v1401, 0.01
        %v1957 = vmul.f32 %v1403, 0.01
        %v1958 = vmul.f32 %v1514, 0.01
        %v1959 = vmul.f32 %v1516, 0.01
        %v1960 = vmul.f32 %v1627, 0.01
        %v1961 = vmul.f32 %v1629, 0.01
        %v1962 = vmul.f32 %v1740, 0.01
        %v1963 = vmul.f32 %v1742, 0.01
        %v1964 = vmul.f32 %v1407, 0.01
        %v1965 = vmul.f32 %v1409, 0.01
        %v1966 = vmul.f32 %v1520, 0.01
        %v1967 = vmul.f32 %v1522, 0.01
        %v1968 = vmul.f32 %v1633, 0.01
        %v1969 = vmul.f32 %v1635, 0.01
        %v1970 = vmul.f32 %v1746, 0.01
        %v1971 = vmul.f32 %v1748, 0.01
        %v1972 = vmul.f32 %v1411, 0.01
        %v1973 = vmul.f32 %v1413, 0.01
        %v1974 = vmul.f32 %v1524, 0.01
        %v1975 = vmul.f32 %v1526, 0.01
        %v1976 = vmul.f32 %v1637, 0.01
        %v1977 = vmul.f32 %v1639, 0.01
        %v1978 = vmul.f32 %v1750, 0.01
        %v1979 = vmul.f32 %v1752, 0.01
        %v1980 = vmul.f32 %v1417, 0.01
        %v1981 = vmul.f32 %v1419, 0.01
        %v1982 = vmul.f32 %v1530, 0.01
        %v1983 = vmul.f32 %v1532, 0.01
        %v1984 = vmul.f32 %v1643, 0.01
        %v1985 = vmul.f32 %v1645, 0.01
        %v1986 = vmul.f32 %v1756, 0.01
        %v1987 = vmul.f32 %v1758, 0.01
        %v1988 = vmul.f32 %v1421, 0.01
        %v1989 = vmul.f32 %v1423, 0.01
        %v1990 = vmul.f32 %v1534, 0.01
        %v1991 = vmul.f32 %v1536, 0.01
        %v1992 = vmul.f32 %v1647, 0.01
        %v1993 = vmul.f32 %v1649, 0.01
        %v1994 = vmul.f32 %v1760, 0.01
        %v1995 = vmul.f32 %v1762, 0.01
        %v1996 = vmul.f32 %v1427, 0.01
        %v1997 = vmul.f32 %v1429, 0.01
        %v1998 = vmul.f32 %v1540, 0.01
        %v1999 = vmul.f32 %v1542, 0.01
        %v2000 = vmul.f32 %v1653, 0.01
        %v2001 = vmul.f32 %v1655, 0.01
        %v2002 = vmul.f32 %v1766, 0.01
        %v2003 = vmul.f32 %v1768, 0.01
        %v2004 = vmul.f32 %v1431, 0.01
        %v2005 = vmul.f32 %v1433, 0.01
        %v2006 = vmul.f32 %v1544, 0.01
        %v2007 = vmul.f32 %v1546, 0.01
        %v2008 = vmul.f32 %v1657, 0.01
        %v2009 = vmul.f32 %v1659, 0.01
        %v2010 = vmul.f32 %v1770, 0.01
        %v2011 = vmul.f32 %v1772, 0.01
        %v2012 = vmul.f32 %v1437, 0.01
        %v2013 = vmul.f32 %v1439, 0.01
        %v2014 = vmul.f32 %v1550, 0.01
        %v2015 = vmul.f32 %v1552, 0.01
        %v2016 = vmul.f32 %v1663, 0.01
        %v2017 = vmul.f32 %v1665, 0.01
        %v2018 = vmul.f32 %v1776, 0.01
        %v2019 = vmul.f32 %v1778, 0.01
        %v2020 = vmul.f32 %v1441, 0.01
        %v2021 = vmul.f32 %v1443, 0.01
        %v2022 = vmul.f32 %v1554, 0.01
        %v2023 = vmul.f32 %v1556, 0.01
        %v2024 = vmul.f32 %v1667, 0.01
        %v2025 = vmul.f32 %v1669, 0.01
        %v2026 = vmul.f32 %v1780, 0.01
        %v2027 = vmul.f32 %v1782, 0.01
        %v2028 = vmul.f32 %v1447, 0.01
        %v2029 = vmul.f32 %v1449, 0.01
        %v2030 = vmul.f32 %v1560, 0.01
        %v2031 = vmul.f32 %v1562, 0.01
        %v2032 = vmul.f32 %v1673, 0.01
        %v2033 = vmul.f32 %v1675, 0.01
        %v2034 = vmul.f32 %v1786, 0.01
        %v2035 = vmul.f32 %v1788, 0.01
        %v2036 = vmul.f32 %v1451, 0.01
        %v2037 = vmul.f32 %v1453, 0.01
        %v2038 = vmul.f32 %v1564, 0.01
        %v2039 = vmul.f32 %v1566, 0.01
        %v2040 = vmul.f32 %v1677, 0.01
        %v2041 = vmul.f32 %v1679, 0.01
        %v2042 = vmul.f32 %v1790, 0.01
        %v2043 = vmul.f32 %v1792, 0.01
        %v2044 = vmul.f32 %v1457, 0.01
        %v2045 = vmul.f32 %v1459, 0.01
        %v2046 = vmul.f32 %v1570, 0.01
        %v2047 = vmul.f32 %v1572, 0.01
        %v2048 = vmul.f32 %v1683, 0.01
        %v2049 = vmul.f32 %v1685, 0.01
        %v2050 = vmul.f32 %v1796, 0.01
        %v2051 = vmul.f32 %v1798, 0.01
        %v2052 = vmul.f32 %v1461, 0.01
        %v2053 = vmul.f32 %v1463, 0.01
        %v2054 = vmul.f32 %v1574, 0.01
        %v2055 = vmul.f32 %v1576, 0.01
        %v2056 = vmul.f32 %v1687, 0.01
        %v2057 = vmul.f32 %v1689, 0.01
        %v2058 = vmul.f32 %v1800, 0.01
        %v2059 = vmul.f32 %v1802, 0.01
        %v2060 = vsel %vm1804, %v1387, %v1932
        %v2061 = vsel %vm1805, %v1389, %v1933
        %v2062 = vsel %vm1806, %v1500, %v1934
        %v2063 = vsel %vm1807, %v1502, %v1935
        %v2064 = vsel %vm1808, %v1613, %v1936
        %v2065 = vsel %vm1809, %v1615, %v1937
        %v2066 = vsel %vm1810, %v1726, %v1938
        %v2067 = vsel %vm1811, %v1728, %v1939
        %v2068 = vsel %vm1812, %v1391, %v1940
        %v2069 = vsel %vm1813, %v1393, %v1941
        %v2070 = vsel %vm1814, %v1504, %v1942
        %v2071 = vsel %vm1815, %v1506, %v1943
        %v2072 = vsel %vm1816, %v1617, %v1944
        %v2073 = vsel %vm1817, %v1619, %v1945
        %v2074 = vsel %vm1818, %v1730, %v1946
        %v2075 = vsel %vm1819, %v1732, %v1947
        %v2076 = vsel %vm1820, %v1397, %v1948
        %v2077 = vsel %vm1821, %v1399, %v1949
        %v2078 = vsel %vm1822, %v1510, %v1950
        %v2079 = vsel %vm1823, %v1512, %v1951
        %v2080 = vsel %vm1824, %v1623, %v1952
        %v2081 = vsel %vm1825, %v1625, %v1953
        %v2082 = vsel %vm1826, %v1736, %v1954
        %v2083 = vsel %vm1827, %v1738, %v1955
        %v2084 = vsel %vm1828, %v1401, %v1956
        %v2085 = vsel %vm1829, %v1403, %v1957
        %v2086 = vsel %vm1830, %v1514, %v1958
        %v2087 = vsel %vm1831, %v1516, %v1959
        %v2088 = vsel %vm1832, %v1627, %v1960
        %v2089 = vsel %vm1833, %v1629, %v1961
        %v2090 = vsel %vm1834, %v1740, %v1962
        %v2091 = vsel %vm1835, %v1742, %v1963
        %v2092 = vsel %vm1836, %v1407, %v1964
        %v2093 = vsel %vm1837, %v1409, %v1965
        %v2094 = vsel %vm1838, %v1520, %v1966
        %v2095 = vsel %vm1839, %v1522, %v1967
        %v2096 = vsel %vm1840, %v1633, %v1968
        %v2097 = vsel %vm1841, %v1635, %v1969
        %v2098 = vsel %vm1842, %v1746, %v1970
        %v2099 = vsel %vm1843, %v1748, %v1971
        %v2100 = vsel %vm1844, %v1411, %v1972
        %v2101 = vsel %vm1845, %v1413, %v1973
        %v2102 = vsel %vm1846, %v1524, %v1974
        %v2103 = vsel %vm1847, %v1526, %v1975
        %v2104 = vsel %vm1848, %v1637, %v1976
        %v2105 = vsel %vm1849, %v1639, %v1977
        %v2106 = vsel %vm1850, %v1750, %v1978
        %v2107 = vsel %vm1851, %v1752, %v1979
        %v2108 = vsel %vm1852, %v1417, %v1980
        %v2109 = vsel %vm1853, %v1419, %v1981
        %v2110 = vsel %vm1854, %v1530, %v1982
        %v2111 = vsel %vm1855, %v1532, %v1983
        %v2112 = vsel %vm1856, %v1643, %v1984
        %v2113 = vsel %vm1857, %v1645, %v1985
        %v2114 = vsel %vm1858, %v1756, %v1986
        %v2115 = vsel %vm1859, %v1758, %v1987
        %v2116 = vsel %vm1860, %v1421, %v1988
        %v2117 = vsel %vm1861, %v1423, %v1989
        %v2118 = vsel %vm1862, %v1534, %v1990
        %v2119 = vsel %vm1863, %v1536, %v1991
        %v2120 = vsel %vm1864, %v1647, %v1992
        %v2121 = vsel %vm1865, %v1649, %v1993
        %v2122 = vsel %vm1866, %v1760, %v1994
        %v2123 = vsel %vm1867, %v1762, %v1995
        %v2124 = vsel %vm1868, %v1427, %v1996
        %v2125 = vsel %vm1869, %v1429, %v1997
        %v2126 = vsel %vm1870, %v1540, %v1998
        %v2127 = vsel %vm1871, %v1542, %v1999
        %v2128 = vsel %vm1872, %v1653, %v2000
        %v2129 = vsel %vm1873, %v1655, %v2001
        %v2130 = vsel %vm1874, %v1766, %v2002
        %v2131 = vsel %vm1875, %v1768, %v2003
        %v2132 = vsel %vm1876, %v1431, %v2004
        %v2133 = vsel %vm1877, %v1433, %v2005
        %v2134 = vsel %vm1878, %v1544, %v2006
        %v2135 = vsel %vm1879, %v1546, %v2007
        %v2136 = vsel %vm1880, %v1657, %v2008
        %v2137 = vsel %vm1881, %v1659, %v2009
        %v2138 = vsel %vm1882, %v1770, %v2010
        %v2139 = vsel %vm1883, %v1772, %v2011
        %v2140 = vsel %vm1884, %v1437, %v2012
        %v2141 = vsel %vm1885, %v1439, %v2013
        %v2142 = vsel %vm1886, %v1550, %v2014
        %v2143 = vsel %vm1887, %v1552, %v2015
        %v2144 = vsel %vm1888, %v1663, %v2016
        %v2145 = vsel %vm1889, %v1665, %v2017
        %v2146 = vsel %vm1890, %v1776, %v2018
        %v2147 = vsel %vm1891, %v1778, %v2019
        %v2148 = vsel %vm1892, %v1441, %v2020
        %v2149 = vsel %vm1893, %v1443, %v2021
        %v2150 = vsel %vm1894, %v1554, %v2022
        %v2151 = vsel %vm1895, %v1556, %v2023
        %v2152 = vsel %vm1896, %v1667, %v2024
        %v2153 = vsel %vm1897, %v1669, %v2025
        %v2154 = vsel %vm1898, %v1780, %v2026
        %v2155 = vsel %vm1899, %v1782, %v2027
        %v2156 = vsel %vm1900, %v1447, %v2028
        %v2157 = vsel %vm1901, %v1449, %v2029
        %v2158 = vsel %vm1902, %v1560, %v2030
        %v2159 = vsel %vm1903, %v1562, %v2031
        %v2160 = vsel %vm1904, %v1673, %v2032
        %v2161 = vsel %vm1905, %v1675, %v2033
        %v2162 = vsel %vm1906, %v1786, %v2034
        %v2163 = vsel %vm1907, %v1788, %v2035
        %v2164 = vsel %vm1908, %v1451, %v2036
        %v2165 = vsel %vm1909, %v1453, %v2037
        %v2166 = vsel %vm1910, %v1564, %v2038
        %v2167 = vsel %vm1911, %v1566, %v2039
        %v2168 = vsel %vm1912, %v1677, %v2040
        %v2169 = vsel %vm1913, %v1679, %v2041
        %v2170 = vsel %vm1914, %v1790, %v2042
        %v2171 = vsel %vm1915, %v1792, %v2043
        %v2172 = vsel %vm1916, %v1457, %v2044
        %v2173 = vsel %vm1917, %v1459, %v2045
        %v2174 = vsel %vm1918, %v1570, %v2046
        %v2175 = vsel %vm1919, %v1572, %v2047
        %v2176 = vsel %vm1920, %v1683, %v2048
        %v2177 = vsel %vm1921, %v1685, %v2049
        %v2178 = vsel %vm1922, %v1796, %v2050
        %v2179 = vsel %vm1923, %v1798, %v2051
        %v2180 = vsel %vm1924, %v1461, %v2052
        %v2181 = vsel %vm1925, %v1463, %v2053
        %v2182 = vsel %vm1926, %v1574, %v2054
        %v2183 = vsel %vm1927, %v1576, %v2055
        %v2184 = vsel %vm1928, %v1687, %v2056
        %v2185 = vsel %vm1929, %v1689, %v2057
        %v2186 = vsel %vm1930, %v1800, %v2058
        %v2187 = vsel %vm1931, %v1802, %v2059
        %v2188 = vpack.c.bf16 %v2068, %v2060
        %v2189 = vpack.c.bf16 %v2069, %v2061
        %v2190 = vpack.c.bf16 %v2070, %v2062
        %v2191 = vpack.c.bf16 %v2071, %v2063
        %v2192 = vpack.c.bf16 %v2072, %v2064
        %v2193 = vpack.c.bf16 %v2073, %v2065
        %v2194 = vpack.c.bf16 %v2074, %v2066
        %v2195 = vpack.c.bf16 %v2075, %v2067
        %v2196 = vpack.c.bf16 %v2084, %v2076
        %v2197 = vpack.c.bf16 %v2085, %v2077
        %v2198 = vpack.c.bf16 %v2086, %v2078
        %v2199 = vpack.c.bf16 %v2087, %v2079
        %v2200 = vpack.c.bf16 %v2088, %v2080
        %v2201 = vpack.c.bf16 %v2089, %v2081
        %v2202 = vpack.c.bf16 %v2090, %v2082
        %v2203 = vpack.c.bf16 %v2091, %v2083
        %v2204 = vpack.c.bf16 %v2100, %v2092
        %v2205 = vpack.c.bf16 %v2101, %v2093
        %v2206 = vpack.c.bf16 %v2102, %v2094
        %v2207 = vpack.c.bf16 %v2103, %v2095
        %v2208 = vpack.c.bf16 %v2104, %v2096
        %v2209 = vpack.c.bf16 %v2105, %v2097
        %v2210 = vpack.c.bf16 %v2106, %v2098
        %v2211 = vpack.c.bf16 %v2107, %v2099
        %v2212 = vpack.c.bf16 %v2116, %v2108
        %v2213 = vpack.c.bf16 %v2117, %v2109
        %v2214 = vpack.c.bf16 %v2118, %v2110
        %v2215 = vpack.c.bf16 %v2119, %v2111
        %v2216 = vpack.c.bf16 %v2120, %v2112
        %v2217 = vpack.c.bf16 %v2121, %v2113
        %v2218 = vpack.c.bf16 %v2122, %v2114
        %v2219 = vpack.c.bf16 %v2123, %v2115
        %v2220 = vpack.c.bf16 %v2132, %v2124
        %v2221 = vpack.c.bf16 %v2133, %v2125
        %v2222 = vpack.c.bf16 %v2134, %v2126
        %v2223 = vpack.c.bf16 %v2135, %v2127
        %v2224 = vpack.c.bf16 %v2136, %v2128
        %v2225 = vpack.c.bf16 %v2137, %v2129
        %v2226 = vpack.c.bf16 %v2138, %v2130
        %v2227 = vpack.c.bf16 %v2139, %v2131
        %v2228 = vpack.c.bf16 %v2148, %v2140
        %v2229 = vpack.c.bf16 %v2149, %v2141
        %v2230 = vpack.c.bf16 %v2150, %v2142
        %v2231 = vpack.c.bf16 %v2151, %v2143
        %v2232 = vpack.c.bf16 %v2152, %v2144
        %v2233 = vpack.c.bf16 %v2153, %v2145
        %v2234 = vpack.c.bf16 %v2154, %v2146
        %v2235 = vpack.c.bf16 %v2155, %v2147
        %v2236 = vpack.c.bf16 %v2164, %v2156
        %v2237 = vpack.c.bf16 %v2165, %v2157
        %v2238 = vpack.c.bf16 %v2166, %v2158
        %v2239 = vpack.c.bf16 %v2167, %v2159
        %v2240 = vpack.c.bf16 %v2168, %v2160
        %v2241 = vpack.c.bf16 %v2169, %v2161
        %v2242 = vpack.c.bf16 %v2170, %v2162
        %v2243 = vpack.c.bf16 %v2171, %v2163
        %v2244 = vpack.c.bf16 %v2180, %v2172
        %v2245 = vpack.c.bf16 %v2181, %v2173
        %v2246 = vpack.c.bf16 %v2182, %v2174
        %v2247 = vpack.c.bf16 %v2183, %v2175
        %v2248 = vpack.c.bf16 %v2184, %v2176
        %v2249 = vpack.c.bf16 %v2185, %v2177
        %v2250 = vpack.c.bf16 %v2186, %v2178
        %v2251 = vpack.c.bf16 %v2187, %v2179
        %v2252 = vld [vmem:[#allocation8] sm:$0xff]
        %v2253 = vld [vmem:[#allocation8 + $0x8] sm:$0xff]
        %v2254 = vld [vmem:[#allocation8 + $0x10] sm:$0xff]
        %v2255 = vld [vmem:[#allocation8 + $0x18] sm:$0xff]
        %v2256 = vld [vmem:[#allocation8 + $0x20] sm:$0xff]
        %v2257 = vld [vmem:[#allocation8 + $0x28] sm:$0xff]
        %v2258 = vld [vmem:[#allocation8 + $0x30] sm:$0xff]
        %v2259 = vld [vmem:[#allocation8 + $0x38] sm:$0xff]
        %v2260 = vld [vmem:[#allocation8 + $0x40] sm:$0xff]
        %v2261 = vld [vmem:[#allocation8 + $0x48] sm:$0xff]
        %v2262 = vld [vmem:[#allocation8 + $0x50] sm:$0xff]
        %v2263 = vld [vmem:[#allocation8 + $0x58] sm:$0xff]
        %v2264 = vld [vmem:[#allocation8 + $0x60] sm:$0xff]
        %v2265 = vld [vmem:[#allocation8 + $0x68] sm:$0xff]
        %v2266 = vld [vmem:[#allocation8 + $0x70] sm:$0xff]
        %v2267 = vld [vmem:[#allocation8 + $0x78] sm:$0xff]
        %v2268 = vld [vmem:[#allocation8 + $0x80] sm:$0xff]
        %v2269 = vld [vmem:[#allocation8 + $0x88] sm:$0xff]
        %v2270 = vld [vmem:[#allocation8 + $0x90] sm:$0xff]
        %v2271 = vld [vmem:[#allocation8 + $0x98] sm:$0xff]
        %v2272 = vld [vmem:[#allocation8 + $0xa0] sm:$0xff]
        %v2273 = vld [vmem:[#allocation8 + $0xa8] sm:$0xff]
        %v2274 = vld [vmem:[#allocation8 + $0xb0] sm:$0xff]
        %v2275 = vld [vmem:[#allocation8 + $0xb8] sm:$0xff]
        %v2276 = vld [vmem:[#allocation8 + $0xc0] sm:$0xff]
        %v2277 = vld [vmem:[#allocation8 + $0xc8] sm:$0xff]
        %v2278 = vld [vmem:[#allocation8 + $0xd0] sm:$0xff]
        %v2279 = vld [vmem:[#allocation8 + $0xd8] sm:$0xff]
        %v2280 = vld [vmem:[#allocation8 + $0xe0] sm:$0xff]
        %v2281 = vld [vmem:[#allocation8 + $0xe8] sm:$0xff]
        %v2282 = vld [vmem:[#allocation8 + $0xf0] sm:$0xff]
        %v2283 = vld [vmem:[#allocation8 + $0xf8] sm:$0xff]
        %v2284 = vld [vmem:[#allocation8 + $0x100] sm:$0xff]
        %v2285 = vld [vmem:[#allocation8 + $0x108] sm:$0xff]
        %v2286 = vld [vmem:[#allocation8 + $0x110] sm:$0xff]
        %v2287 = vld [vmem:[#allocation8 + $0x118] sm:$0xff]
        %v2288 = vld [vmem:[#allocation8 + $0x120] sm:$0xff]
        %v2289 = vld [vmem:[#allocation8 + $0x128] sm:$0xff]
        %v2290 = vld [vmem:[#allocation8 + $0x130] sm:$0xff]
        %v2291 = vld [vmem:[#allocation8 + $0x138] sm:$0xff]
        %v2292 = vld [vmem:[#allocation8 + $0x140] sm:$0xff]
        %v2293 = vld [vmem:[#allocation8 + $0x148] sm:$0xff]
        %v2294 = vld [vmem:[#allocation8 + $0x150] sm:$0xff]
        %v2295 = vld [vmem:[#allocation8 + $0x158] sm:$0xff]
        %v2296 = vld [vmem:[#allocation8 + $0x160] sm:$0xff]
        %v2297 = vld [vmem:[#allocation8 + $0x168] sm:$0xff]
        %v2298 = vld [vmem:[#allocation8 + $0x170] sm:$0xff]
        %v2299 = vld [vmem:[#allocation8 + $0x178] sm:$0xff]
        %v2300 = vld [vmem:[#allocation8 + $0x180] sm:$0xff]
        %v2301 = vld [vmem:[#allocation8 + $0x188] sm:$0xff]
        %v2302 = vld [vmem:[#allocation8 + $0x190] sm:$0xff]
        %v2303 = vld [vmem:[#allocation8 + $0x198] sm:$0xff]
        %v2304 = vld [vmem:[#allocation8 + $0x1a0] sm:$0xff]
        %v2305 = vld [vmem:[#allocation8 + $0x1a8] sm:$0xff]
        %v2306 = vld [vmem:[#allocation8 + $0x1b0] sm:$0xff]
        %v2307 = vld [vmem:[#allocation8 + $0x1b8] sm:$0xff]
        %v2308 = vld [vmem:[#allocation8 + $0x1c0] sm:$0xff]
        %v2309 = vld [vmem:[#allocation8 + $0x1c8] sm:$0xff]
        %v2310 = vld [vmem:[#allocation8 + $0x1d0] sm:$0xff]
        %v2311 = vld [vmem:[#allocation8 + $0x1d8] sm:$0xff]
        %v2312 = vld [vmem:[#allocation8 + $0x1e0] sm:$0xff]
        %v2313 = vld [vmem:[#allocation8 + $0x1e8] sm:$0xff]
        %v2314 = vld [vmem:[#allocation8 + $0x1f0] sm:$0xff]
        %v2315 = vld [vmem:[#allocation8 + $0x1f8] sm:$0xff]
        %v2316 = vld [vmem:[#allocation8 + $0x200] sm:$0xff]
        %v2317 = vld [vmem:[#allocation8 + $0x208] sm:$0xff]
        %v2318 = vld [vmem:[#allocation8 + $0x210] sm:$0xff]
        %v2319 = vld [vmem:[#allocation8 + $0x218] sm:$0xff]
        %v2320 = vld [vmem:[#allocation8 + $0x220] sm:$0xff]
        %v2321 = vld [vmem:[#allocation8 + $0x228] sm:$0xff]
        %v2322 = vld [vmem:[#allocation8 + $0x230] sm:$0xff]
        %v2323 = vld [vmem:[#allocation8 + $0x238] sm:$0xff]
        %v2324 = vld [vmem:[#allocation8 + $0x240] sm:$0xff]
        %v2325 = vld [vmem:[#allocation8 + $0x248] sm:$0xff]
        %v2326 = vld [vmem:[#allocation8 + $0x250] sm:$0xff]
        %v2327 = vld [vmem:[#allocation8 + $0x258] sm:$0xff]
        %v2328 = vld [vmem:[#allocation8 + $0x260] sm:$0xff]
        %v2329 = vld [vmem:[#allocation8 + $0x268] sm:$0xff]
        %v2330 = vld [vmem:[#allocation8 + $0x270] sm:$0xff]
        %v2331 = vld [vmem:[#allocation8 + $0x278] sm:$0xff]
        %v2332 = vld [vmem:[#allocation8 + $0x280] sm:$0xff]
        %v2333 = vld [vmem:[#allocation8 + $0x288] sm:$0xff]
        %v2334 = vld [vmem:[#allocation8 + $0x290] sm:$0xff]
        %v2335 = vld [vmem:[#allocation8 + $0x298] sm:$0xff]
        %v2336 = vld [vmem:[#allocation8 + $0x2a0] sm:$0xff]
        %v2337 = vld [vmem:[#allocation8 + $0x2a8] sm:$0xff]
        %v2338 = vld [vmem:[#allocation8 + $0x2b0] sm:$0xff]
        %v2339 = vld [vmem:[#allocation8 + $0x2b8] sm:$0xff]
        %v2340 = vld [vmem:[#allocation8 + $0x2c0] sm:$0xff]
        %v2341 = vld [vmem:[#allocation8 + $0x2c8] sm:$0xff]
        %v2342 = vld [vmem:[#allocation8 + $0x2d0] sm:$0xff]
        %v2343 = vld [vmem:[#allocation8 + $0x2d8] sm:$0xff]
        %v2344 = vld [vmem:[#allocation8 + $0x2e0] sm:$0xff]
        %v2345 = vld [vmem:[#allocation8 + $0x2e8] sm:$0xff]
        %v2346 = vld [vmem:[#allocation8 + $0x2f0] sm:$0xff]
        %v2347 = vld [vmem:[#allocation8 + $0x2f8] sm:$0xff]
        %v2348 = vld [vmem:[#allocation8 + $0x300] sm:$0xff]
        %v2349 = vld [vmem:[#allocation8 + $0x308] sm:$0xff]
        %v2350 = vld [vmem:[#allocation8 + $0x310] sm:$0xff]
        %v2351 = vld [vmem:[#allocation8 + $0x318] sm:$0xff]
        %v2352 = vld [vmem:[#allocation8 + $0x320] sm:$0xff]
        %v2353 = vld [vmem:[#allocation8 + $0x328] sm:$0xff]
        %v2354 = vld [vmem:[#allocation8 + $0x330] sm:$0xff]
        %v2355 = vld [vmem:[#allocation8 + $0x338] sm:$0xff]
        %v2356 = vld [vmem:[#allocation8 + $0x340] sm:$0xff]
        %v2357 = vld [vmem:[#allocation8 + $0x348] sm:$0xff]
        %v2358 = vld [vmem:[#allocation8 + $0x350] sm:$0xff]
        %v2359 = vld [vmem:[#allocation8 + $0x358] sm:$0xff]
        %v2360 = vld [vmem:[#allocation8 + $0x360] sm:$0xff]
        %v2361 = vld [vmem:[#allocation8 + $0x368] sm:$0xff]
        %v2362 = vld [vmem:[#allocation8 + $0x370] sm:$0xff]
        %v2363 = vld [vmem:[#allocation8 + $0x378] sm:$0xff]
        %v2364 = vld [vmem:[#allocation8 + $0x380] sm:$0xff]
        %v2365 = vld [vmem:[#allocation8 + $0x388] sm:$0xff]
        %v2366 = vld [vmem:[#allocation8 + $0x390] sm:$0xff]
        %v2367 = vld [vmem:[#allocation8 + $0x398] sm:$0xff]
        %v2368 = vld [vmem:[#allocation8 + $0x3a0] sm:$0xff]
        %v2369 = vld [vmem:[#allocation8 + $0x3a8] sm:$0xff]
        %v2370 = vld [vmem:[#allocation8 + $0x3b0] sm:$0xff]
        %v2371 = vld [vmem:[#allocation8 + $0x3b8] sm:$0xff]
        %v2372 = vld [vmem:[#allocation8 + $0x3c0] sm:$0xff]
        %v2373 = vld [vmem:[#allocation8 + $0x3c8] sm:$0xff]
        %v2374 = vld [vmem:[#allocation8 + $0x3d0] sm:$0xff]
        %v2375 = vld [vmem:[#allocation8 + $0x3d8] sm:$0xff]
        %v2376 = vld [vmem:[#allocation8 + $0x3e0] sm:$0xff]
        %v2377 = vld [vmem:[#allocation8 + $0x3e8] sm:$0xff]
        %v2378 = vld [vmem:[#allocation8 + $0x3f0] sm:$0xff]
        %v2379 = vld [vmem:[#allocation8 + $0x3f8] sm:$0xff]
        %v2380 = vld [vmem:[#allocation8 + $0x400] sm:$0xff]
        %v2381 = vld [vmem:[#allocation8 + $0x408] sm:$0xff]
        %v2382 = vld [vmem:[#allocation8 + $0x410] sm:$0xff]
        %v2383 = vld [vmem:[#allocation8 + $0x418] sm:$0xff]
        %v2384 = vld [vmem:[#allocation8 + $0x420] sm:$0xff]
        %v2385 = vld [vmem:[#allocation8 + $0x428] sm:$0xff]
        %v2386 = vld [vmem:[#allocation8 + $0x430] sm:$0xff]
        %v2387 = vld [vmem:[#allocation8 + $0x438] sm:$0xff]
        %v2388 = vld [vmem:[#allocation8 + $0x440] sm:$0xff]
        %v2389 = vld [vmem:[#allocation8 + $0x448] sm:$0xff]
        %v2390 = vld [vmem:[#allocation8 + $0x450] sm:$0xff]
        %v2391 = vld [vmem:[#allocation8 + $0x458] sm:$0xff]
        %v2392 = vld [vmem:[#allocation8 + $0x460] sm:$0xff]
        %v2393 = vld [vmem:[#allocation8 + $0x468] sm:$0xff]
        %v2394 = vld [vmem:[#allocation8 + $0x470] sm:$0xff]
        %v2395 = vld [vmem:[#allocation8 + $0x478] sm:$0xff]
        %v2396 = vld [vmem:[#allocation8 + $0x480] sm:$0xff]
        %v2397 = vld [vmem:[#allocation8 + $0x488] sm:$0xff]
        %v2398 = vld [vmem:[#allocation8 + $0x490] sm:$0xff]
        %v2399 = vld [vmem:[#allocation8 + $0x498] sm:$0xff]
        %v2400 = vld [vmem:[#allocation8 + $0x4a0] sm:$0xff]
        %v2401 = vld [vmem:[#allocation8 + $0x4a8] sm:$0xff]
        %v2402 = vld [vmem:[#allocation8 + $0x4b0] sm:$0xff]
        %v2403 = vld [vmem:[#allocation8 + $0x4b8] sm:$0xff]
        %v2404 = vld [vmem:[#allocation8 + $0x4c0] sm:$0xff]
        %v2405 = vld [vmem:[#allocation8 + $0x4c8] sm:$0xff]
        %v2406 = vld [vmem:[#allocation8 + $0x4d0] sm:$0xff]
        %v2407 = vld [vmem:[#allocation8 + $0x4d8] sm:$0xff]
        %v2408 = vld [vmem:[#allocation8 + $0x4e0] sm:$0xff]
        %v2409 = vld [vmem:[#allocation8 + $0x4e8] sm:$0xff]
        %v2410 = vld [vmem:[#allocation8 + $0x4f0] sm:$0xff]
        %v2411 = vld [vmem:[#allocation8 + $0x4f8] sm:$0xff]
        %v2412 = vld [vmem:[#allocation8 + $0x500] sm:$0xff]
        %v2413 = vld [vmem:[#allocation8 + $0x508] sm:$0xff]
        %v2414 = vld [vmem:[#allocation8 + $0x510] sm:$0xff]
        %v2415 = vld [vmem:[#allocation8 + $0x518] sm:$0xff]
        %v2416 = vld [vmem:[#allocation8 + $0x520] sm:$0xff]
        %v2417 = vld [vmem:[#allocation8 + $0x528] sm:$0xff]
        %v2418 = vld [vmem:[#allocation8 + $0x530] sm:$0xff]
        %v2419 = vld [vmem:[#allocation8 + $0x538] sm:$0xff]
        %v2420 = vld [vmem:[#allocation8 + $0x540] sm:$0xff]
        %v2421 = vld [vmem:[#allocation8 + $0x548] sm:$0xff]
        %v2422 = vld [vmem:[#allocation8 + $0x550] sm:$0xff]
        %v2423 = vld [vmem:[#allocation8 + $0x558] sm:$0xff]
        %v2424 = vld [vmem:[#allocation8 + $0x560] sm:$0xff]
        %v2425 = vld [vmem:[#allocation8 + $0x568] sm:$0xff]
        %v2426 = vld [vmem:[#allocation8 + $0x570] sm:$0xff]
        %v2427 = vld [vmem:[#allocation8 + $0x578] sm:$0xff]
        %v2428 = vld [vmem:[#allocation8 + $0x580] sm:$0xff]
        %v2429 = vld [vmem:[#allocation8 + $0x588] sm:$0xff]
        %v2430 = vld [vmem:[#allocation8 + $0x590] sm:$0xff]
        %v2431 = vld [vmem:[#allocation8 + $0x598] sm:$0xff]
        %v2432 = vld [vmem:[#allocation8 + $0x5a0] sm:$0xff]
        %v2433 = vld [vmem:[#allocation8 + $0x5a8] sm:$0xff]
        %v2434 = vld [vmem:[#allocation8 + $0x5b0] sm:$0xff]
        %v2435 = vld [vmem:[#allocation8 + $0x5b8] sm:$0xff]
        %v2436 = vld [vmem:[#allocation8 + $0x5c0] sm:$0xff]
        %v2437 = vld [vmem:[#allocation8 + $0x5c8] sm:$0xff]
        %v2438 = vld [vmem:[#allocation8 + $0x5d0] sm:$0xff]
        %v2439 = vld [vmem:[#allocation8 + $0x5d8] sm:$0xff]
        %v2440 = vld [vmem:[#allocation8 + $0x5e0] sm:$0xff]
        %v2441 = vld [vmem:[#allocation8 + $0x5e8] sm:$0xff]
        %v2442 = vld [vmem:[#allocation8 + $0x5f0] sm:$0xff]
        %v2443 = vld [vmem:[#allocation8 + $0x5f8] sm:$0xff]
        %v2444 = vld [vmem:[#allocation8 + $0x600] sm:$0xff]
        %v2445 = vld [vmem:[#allocation8 + $0x608] sm:$0xff]
        %v2446 = vld [vmem:[#allocation8 + $0x610] sm:$0xff]
        %v2447 = vld [vmem:[#allocation8 + $0x618] sm:$0xff]
        %v2448 = vld [vmem:[#allocation8 + $0x620] sm:$0xff]
        %v2449 = vld [vmem:[#allocation8 + $0x628] sm:$0xff]
        %v2450 = vld [vmem:[#allocation8 + $0x630] sm:$0xff]
        %v2451 = vld [vmem:[#allocation8 + $0x638] sm:$0xff]
        %v2452 = vld [vmem:[#allocation8 + $0x640] sm:$0xff]
        %v2453 = vld [vmem:[#allocation8 + $0x648] sm:$0xff]
        %v2454 = vld [vmem:[#allocation8 + $0x650] sm:$0xff]
        %v2455 = vld [vmem:[#allocation8 + $0x658] sm:$0xff]
        %v2456 = vld [vmem:[#allocation8 + $0x660] sm:$0xff]
        %v2457 = vld [vmem:[#allocation8 + $0x668] sm:$0xff]
        %v2458 = vld [vmem:[#allocation8 + $0x670] sm:$0xff]
        %v2459 = vld [vmem:[#allocation8 + $0x678] sm:$0xff]
        %v2460 = vld [vmem:[#allocation8 + $0x680] sm:$0xff]
        %v2461 = vld [vmem:[#allocation8 + $0x688] sm:$0xff]
        %v2462 = vld [vmem:[#allocation8 + $0x690] sm:$0xff]
        %v2463 = vld [vmem:[#allocation8 + $0x698] sm:$0xff]
        %v2464 = vld [vmem:[#allocation8 + $0x6a0] sm:$0xff]
        %v2465 = vld [vmem:[#allocation8 + $0x6a8] sm:$0xff]
        %v2466 = vld [vmem:[#allocation8 + $0x6b0] sm:$0xff]
        %v2467 = vld [vmem:[#allocation8 + $0x6b8] sm:$0xff]
        %v2468 = vld [vmem:[#allocation8 + $0x6c0] sm:$0xff]
        %v2469 = vld [vmem:[#allocation8 + $0x6c8] sm:$0xff]
        %v2470 = vld [vmem:[#allocation8 + $0x6d0] sm:$0xff]
        %v2471 = vld [vmem:[#allocation8 + $0x6d8] sm:$0xff]
        %v2472 = vld [vmem:[#allocation8 + $0x6e0] sm:$0xff]
        %v2473 = vld [vmem:[#allocation8 + $0x6e8] sm:$0xff]
        %v2474 = vld [vmem:[#allocation8 + $0x6f0] sm:$0xff]
        %v2475 = vld [vmem:[#allocation8 + $0x6f8] sm:$0xff]
        %v2476 = vld [vmem:[#allocation8 + $0x700] sm:$0xff]
        %v2477 = vld [vmem:[#allocation8 + $0x708] sm:$0xff]
        %v2478 = vld [vmem:[#allocation8 + $0x710] sm:$0xff]
        %v2479 = vld [vmem:[#allocation8 + $0x718] sm:$0xff]
        %v2480 = vld [vmem:[#allocation8 + $0x720] sm:$0xff]
        %v2481 = vld [vmem:[#allocation8 + $0x728] sm:$0xff]
        %v2482 = vld [vmem:[#allocation8 + $0x730] sm:$0xff]
        %v2483 = vld [vmem:[#allocation8 + $0x738] sm:$0xff]
        %v2484 = vld [vmem:[#allocation8 + $0x740] sm:$0xff]
        %v2485 = vld [vmem:[#allocation8 + $0x748] sm:$0xff]
        %v2486 = vld [vmem:[#allocation8 + $0x750] sm:$0xff]
        %v2487 = vld [vmem:[#allocation8 + $0x758] sm:$0xff]
        %v2488 = vld [vmem:[#allocation8 + $0x760] sm:$0xff]
        %v2489 = vld [vmem:[#allocation8 + $0x768] sm:$0xff]
        %v2490 = vld [vmem:[#allocation8 + $0x770] sm:$0xff]
        %v2491 = vld [vmem:[#allocation8 + $0x778] sm:$0xff]
        %v2492 = vld [vmem:[#allocation8 + $0x780] sm:$0xff]
        %v2493 = vld [vmem:[#allocation8 + $0x788] sm:$0xff]
        %v2494 = vld [vmem:[#allocation8 + $0x790] sm:$0xff]
        %v2495 = vld [vmem:[#allocation8 + $0x798] sm:$0xff]
        %v2496 = vld [vmem:[#allocation8 + $0x7a0] sm:$0xff]
        %v2497 = vld [vmem:[#allocation8 + $0x7a8] sm:$0xff]
        %v2498 = vld [vmem:[#allocation8 + $0x7b0] sm:$0xff]
        %v2499 = vld [vmem:[#allocation8 + $0x7b8] sm:$0xff]
        %v2500 = vld [vmem:[#allocation8 + $0x7c0] sm:$0xff]
        %v2501 = vld [vmem:[#allocation8 + $0x7c8] sm:$0xff]
        %v2502 = vld [vmem:[#allocation8 + $0x7d0] sm:$0xff]
        %v2503 = vld [vmem:[#allocation8 + $0x7d8] sm:$0xff]
        %v2504 = vld [vmem:[#allocation8 + $0x7e0] sm:$0xff]
        %v2505 = vld [vmem:[#allocation8 + $0x7e8] sm:$0xff]
        %v2506 = vld [vmem:[#allocation8 + $0x7f0] sm:$0xff]
        %v2507 = vld [vmem:[#allocation8 + $0x7f8] sm:$0xff]
        %v2508 = vld [vmem:[%s4] sm:$0xf]
        %v2510 = vlaneseq
        %v2511 = vshrl.u32 %v2510, 7
        %v2512 = vsub.s32 0, %v2511
        %v2513 = vrot.slane %v2508, %v2512
        %v2514 = vlaneseq
        %v2515 = vshrl.u32 %v2514, 7
        %v2516 = vsub.s32 1, %v2515
        %v2517 = vrot.slane %v2508, %v2516
        %v2518 = vlaneseq
        %v2519 = vshrl.u32 %v2518, 7
        %v2520 = vsub.s32 2, %v2519
        %v2521 = vrot.slane %v2508, %v2520
        %v2522 = vlaneseq
        %v2523 = vshrl.u32 %v2522, 7
        %v2524 = vsub.s32 3, %v2523
        %v2525 = vrot.slane %v2508, %v2524
        %v2786 = vunpack.c.l.b16 %v2252
        %v2787 = vunpack.c.h.b16 %v2252
        %v2788 = vunpack.c.l.b16 %v2253
        %v2789 = vunpack.c.h.b16 %v2253
        %v2790 = vunpack.c.l.b16 %v2254
        %v2791 = vunpack.c.h.b16 %v2254
        %v2792 = vunpack.c.l.b16 %v2255
        %v2793 = vunpack.c.h.b16 %v2255
        %v2794 = vunpack.c.l.b16 %v2256
        %v2795 = vunpack.c.h.b16 %v2256
        %v2796 = vunpack.c.l.b16 %v2257
        %v2797 = vunpack.c.h.b16 %v2257
        %v2798 = vunpack.c.l.b16 %v2258
        %v2799 = vunpack.c.h.b16 %v2258
        %v2800 = vunpack.c.l.b16 %v2259
        %v2801 = vunpack.c.h.b16 %v2259
        %v2802 = vunpack.c.l.b16 %v2260
        %v2803 = vunpack.c.h.b16 %v2260
        %v2804 = vunpack.c.l.b16 %v2261
        %v2805 = vunpack.c.h.b16 %v2261
        %v2806 = vunpack.c.l.b16 %v2262
        %v2807 = vunpack.c.h.b16 %v2262
        %v2808 = vunpack.c.l.b16 %v2263
        %v2809 = vunpack.c.h.b16 %v2263
        %v2810 = vunpack.c.l.b16 %v2264
        %v2811 = vunpack.c.h.b16 %v2264
        %v2812 = vunpack.c.l.b16 %v2265
        %v2813 = vunpack.c.h.b16 %v2265
        %v2814 = vunpack.c.l.b16 %v2266
        %v2815 = vunpack.c.h.b16 %v2266
        %v2816 = vunpack.c.l.b16 %v2267
        %v2817 = vunpack.c.h.b16 %v2267
        %v2818 = vunpack.c.l.b16 %v2268
        %v2819 = vunpack.c.h.b16 %v2268
        %v2820 = vunpack.c.l.b16 %v2269
        %v2821 = vunpack.c.h.b16 %v2269
        %v2822 = vunpack.c.l.b16 %v2270
        %v2823 = vunpack.c.h.b16 %v2270
        %v2824 = vunpack.c.l.b16 %v2271
        %v2825 = vunpack.c.h.b16 %v2271
        %v2826 = vunpack.c.l.b16 %v2272
        %v2827 = vunpack.c.h.b16 %v2272
        %v2828 = vunpack.c.l.b16 %v2273
        %v2829 = vunpack.c.h.b16 %v2273
        %v2830 = vunpack.c.l.b16 %v2274
        %v2831 = vunpack.c.h.b16 %v2274
        %v2832 = vunpack.c.l.b16 %v2275
        %v2833 = vunpack.c.h.b16 %v2275
        %v2834 = vunpack.c.l.b16 %v2276
        %v2835 = vunpack.c.h.b16 %v2276
        %v2836 = vunpack.c.l.b16 %v2277
        %v2837 = vunpack.c.h.b16 %v2277
        %v2838 = vunpack.c.l.b16 %v2278
        %v2839 = vunpack.c.h.b16 %v2278
        %v2840 = vunpack.c.l.b16 %v2279
        %v2841 = vunpack.c.h.b16 %v2279
        %v2842 = vunpack.c.l.b16 %v2280
        %v2843 = vunpack.c.h.b16 %v2280
        %v2844 = vunpack.c.l.b16 %v2281
        %v2845 = vunpack.c.h.b16 %v2281
        %v2846 = vunpack.c.l.b16 %v2282
        %v2847 = vunpack.c.h.b16 %v2282
        %v2848 = vunpack.c.l.b16 %v2283
        %v2849 = vunpack.c.h.b16 %v2283
        %v2850 = vunpack.c.l.b16 %v2284
        %v2851 = vunpack.c.h.b16 %v2284
        %v2852 = vunpack.c.l.b16 %v2285
        %v2853 = vunpack.c.h.b16 %v2285
        %v2854 = vunpack.c.l.b16 %v2286
        %v2855 = vunpack.c.h.b16 %v2286
        %v2856 = vunpack.c.l.b16 %v2287
        %v2857 = vunpack.c.h.b16 %v2287
        %v2858 = vunpack.c.l.b16 %v2288
        %v2859 = vunpack.c.h.b16 %v2288
        %v2860 = vunpack.c.l.b16 %v2289
        %v2861 = vunpack.c.h.b16 %v2289
        %v2862 = vunpack.c.l.b16 %v2290
        %v2863 = vunpack.c.h.b16 %v2290
        %v2864 = vunpack.c.l.b16 %v2291
        %v2865 = vunpack.c.h.b16 %v2291
        %v2866 = vunpack.c.l.b16 %v2292
        %v2867 = vunpack.c.h.b16 %v2292
        %v2868 = vunpack.c.l.b16 %v2293
        %v2869 = vunpack.c.h.b16 %v2293
        %v2870 = vunpack.c.l.b16 %v2294
        %v2871 = vunpack.c.h.b16 %v2294
        %v2872 = vunpack.c.l.b16 %v2295
        %v2873 = vunpack.c.h.b16 %v2295
        %v2874 = vunpack.c.l.b16 %v2296
        %v2875 = vunpack.c.h.b16 %v2296
        %v2876 = vunpack.c.l.b16 %v2297
        %v2877 = vunpack.c.h.b16 %v2297
        %v2878 = vunpack.c.l.b16 %v2298
        %v2879 = vunpack.c.h.b16 %v2298
        %v2880 = vunpack.c.l.b16 %v2299
        %v2881 = vunpack.c.h.b16 %v2299
        %v2882 = vunpack.c.l.b16 %v2300
        %v2883 = vunpack.c.h.b16 %v2300
        %v2884 = vunpack.c.l.b16 %v2301
        %v2885 = vunpack.c.h.b16 %v2301
        %v2886 = vunpack.c.l.b16 %v2302
        %v2887 = vunpack.c.h.b16 %v2302
        %v2888 = vunpack.c.l.b16 %v2303
        %v2889 = vunpack.c.h.b16 %v2303
        %v2890 = vunpack.c.l.b16 %v2304
        %v2891 = vunpack.c.h.b16 %v2304
        %v2892 = vunpack.c.l.b16 %v2305
        %v2893 = vunpack.c.h.b16 %v2305
        %v2894 = vunpack.c.l.b16 %v2306
        %v2895 = vunpack.c.h.b16 %v2306
        %v2896 = vunpack.c.l.b16 %v2307
        %v2897 = vunpack.c.h.b16 %v2307
        %v2898 = vunpack.c.l.b16 %v2308
        %v2899 = vunpack.c.h.b16 %v2308
        %v2900 = vunpack.c.l.b16 %v2309
        %v2901 = vunpack.c.h.b16 %v2309
        %v2902 = vunpack.c.l.b16 %v2310
        %v2903 = vunpack.c.h.b16 %v2310
        %v2904 = vunpack.c.l.b16 %v2311
        %v2905 = vunpack.c.h.b16 %v2311
        %v2906 = vunpack.c.l.b16 %v2312
        %v2907 = vunpack.c.h.b16 %v2312
        %v2908 = vunpack.c.l.b16 %v2313
        %v2909 = vunpack.c.h.b16 %v2313
        %v2910 = vunpack.c.l.b16 %v2314
        %v2911 = vunpack.c.h.b16 %v2314
        %v2912 = vunpack.c.l.b16 %v2315
        %v2913 = vunpack.c.h.b16 %v2315
        %v2914 = vunpack.c.l.b16 %v2316
        %v2915 = vunpack.c.h.b16 %v2316
        %v2916 = vunpack.c.l.b16 %v2317
        %v2917 = vunpack.c.h.b16 %v2317
        %v2918 = vunpack.c.l.b16 %v2318
        %v2919 = vunpack.c.h.b16 %v2318
        %v2920 = vunpack.c.l.b16 %v2319
        %v2921 = vunpack.c.h.b16 %v2319
        %v2922 = vunpack.c.l.b16 %v2320
        %v2923 = vunpack.c.h.b16 %v2320
        %v2924 = vunpack.c.l.b16 %v2321
        %v2925 = vunpack.c.h.b16 %v2321
        %v2926 = vunpack.c.l.b16 %v2322
        %v2927 = vunpack.c.h.b16 %v2322
        %v2928 = vunpack.c.l.b16 %v2323
        %v2929 = vunpack.c.h.b16 %v2323
        %v2930 = vunpack.c.l.b16 %v2324
        %v2931 = vunpack.c.h.b16 %v2324
        %v2932 = vunpack.c.l.b16 %v2325
        %v2933 = vunpack.c.h.b16 %v2325
        %v2934 = vunpack.c.l.b16 %v2326
        %v2935 = vunpack.c.h.b16 %v2326
        %v2936 = vunpack.c.l.b16 %v2327
        %v2937 = vunpack.c.h.b16 %v2327
        %v2938 = vunpack.c.l.b16 %v2328
        %v2939 = vunpack.c.h.b16 %v2328
        %v2940 = vunpack.c.l.b16 %v2329
        %v2941 = vunpack.c.h.b16 %v2329
        %v2942 = vunpack.c.l.b16 %v2330
        %v2943 = vunpack.c.h.b16 %v2330
        %v2944 = vunpack.c.l.b16 %v2331
        %v2945 = vunpack.c.h.b16 %v2331
        %v2946 = vunpack.c.l.b16 %v2332
        %v2947 = vunpack.c.h.b16 %v2332
        %v2948 = vunpack.c.l.b16 %v2333
        %v2949 = vunpack.c.h.b16 %v2333
        %v2950 = vunpack.c.l.b16 %v2334
        %v2951 = vunpack.c.h.b16 %v2334
        %v2952 = vunpack.c.l.b16 %v2335
        %v2953 = vunpack.c.h.b16 %v2335
        %v2954 = vunpack.c.l.b16 %v2336
        %v2955 = vunpack.c.h.b16 %v2336
        %v2956 = vunpack.c.l.b16 %v2337
        %v2957 = vunpack.c.h.b16 %v2337
        %v2958 = vunpack.c.l.b16 %v2338
        %v2959 = vunpack.c.h.b16 %v2338
        %v2960 = vunpack.c.l.b16 %v2339
        %v2961 = vunpack.c.h.b16 %v2339
        %v2962 = vunpack.c.l.b16 %v2340
        %v2963 = vunpack.c.h.b16 %v2340
        %v2964 = vunpack.c.l.b16 %v2341
        %v2965 = vunpack.c.h.b16 %v2341
        %v2966 = vunpack.c.l.b16 %v2342
        %v2967 = vunpack.c.h.b16 %v2342
        %v2968 = vunpack.c.l.b16 %v2343
        %v2969 = vunpack.c.h.b16 %v2343
        %v2970 = vunpack.c.l.b16 %v2344
        %v2971 = vunpack.c.h.b16 %v2344
        %v2972 = vunpack.c.l.b16 %v2345
        %v2973 = vunpack.c.h.b16 %v2345
        %v2974 = vunpack.c.l.b16 %v2346
        %v2975 = vunpack.c.h.b16 %v2346
        %v2976 = vunpack.c.l.b16 %v2347
        %v2977 = vunpack.c.h.b16 %v2347
        %v2978 = vunpack.c.l.b16 %v2348
        %v2979 = vunpack.c.h.b16 %v2348
        %v2980 = vunpack.c.l.b16 %v2349
        %v2981 = vunpack.c.h.b16 %v2349
        %v2982 = vunpack.c.l.b16 %v2350
        %v2983 = vunpack.c.h.b16 %v2350
        %v2984 = vunpack.c.l.b16 %v2351
        %v2985 = vunpack.c.h.b16 %v2351
        %v2986 = vunpack.c.l.b16 %v2352
        %v2987 = vunpack.c.h.b16 %v2352
        %v2988 = vunpack.c.l.b16 %v2353
        %v2989 = vunpack.c.h.b16 %v2353
        %v2990 = vunpack.c.l.b16 %v2354
        %v2991 = vunpack.c.h.b16 %v2354
        %v2992 = vunpack.c.l.b16 %v2355
        %v2993 = vunpack.c.h.b16 %v2355
        %v2994 = vunpack.c.l.b16 %v2356
        %v2995 = vunpack.c.h.b16 %v2356
        %v2996 = vunpack.c.l.b16 %v2357
        %v2997 = vunpack.c.h.b16 %v2357
        %v2998 = vunpack.c.l.b16 %v2358
        %v2999 = vunpack.c.h.b16 %v2358
        %v3000 = vunpack.c.l.b16 %v2359
        %v3001 = vunpack.c.h.b16 %v2359
        %v3002 = vunpack.c.l.b16 %v2360
        %v3003 = vunpack.c.h.b16 %v2360
        %v3004 = vunpack.c.l.b16 %v2361
        %v3005 = vunpack.c.h.b16 %v2361
        %v3006 = vunpack.c.l.b16 %v2362
        %v3007 = vunpack.c.h.b16 %v2362
        %v3008 = vunpack.c.l.b16 %v2363
        %v3009 = vunpack.c.h.b16 %v2363
        %v3010 = vunpack.c.l.b16 %v2364
        %v3011 = vunpack.c.h.b16 %v2364
        %v3012 = vunpack.c.l.b16 %v2365
        %v3013 = vunpack.c.h.b16 %v2365
        %v3014 = vunpack.c.l.b16 %v2366
        %v3015 = vunpack.c.h.b16 %v2366
        %v3016 = vunpack.c.l.b16 %v2367
        %v3017 = vunpack.c.h.b16 %v2367
        %v3018 = vunpack.c.l.b16 %v2368
        %v3019 = vunpack.c.h.b16 %v2368
        %v3020 = vunpack.c.l.b16 %v2369
        %v3021 = vunpack.c.h.b16 %v2369
        %v3022 = vunpack.c.l.b16 %v2370
        %v3023 = vunpack.c.h.b16 %v2370
        %v3024 = vunpack.c.l.b16 %v2371
        %v3025 = vunpack.c.h.b16 %v2371
        %v3026 = vunpack.c.l.b16 %v2372
        %v3027 = vunpack.c.h.b16 %v2372
        %v3028 = vunpack.c.l.b16 %v2373
        %v3029 = vunpack.c.h.b16 %v2373
        %v3030 = vunpack.c.l.b16 %v2374
        %v3031 = vunpack.c.h.b16 %v2374
        %v3032 = vunpack.c.l.b16 %v2375
        %v3033 = vunpack.c.h.b16 %v2375
        %v3034 = vunpack.c.l.b16 %v2376
        %v3035 = vunpack.c.h.b16 %v2376
        %v3036 = vunpack.c.l.b16 %v2377
        %v3037 = vunpack.c.h.b16 %v2377
        %v3038 = vunpack.c.l.b16 %v2378
        %v3039 = vunpack.c.h.b16 %v2378
        %v3040 = vunpack.c.l.b16 %v2379
        %v3041 = vunpack.c.h.b16 %v2379
        %v3042 = vunpack.c.l.b16 %v2380
        %v3043 = vunpack.c.h.b16 %v2380
        %v3044 = vunpack.c.l.b16 %v2381
        %v3045 = vunpack.c.h.b16 %v2381
        %v3046 = vunpack.c.l.b16 %v2382
        %v3047 = vunpack.c.h.b16 %v2382
        %v3048 = vunpack.c.l.b16 %v2383
        %v3049 = vunpack.c.h.b16 %v2383
        %v3050 = vunpack.c.l.b16 %v2384
        %v3051 = vunpack.c.h.b16 %v2384
        %v3052 = vunpack.c.l.b16 %v2385
        %v3053 = vunpack.c.h.b16 %v2385
        %v3054 = vunpack.c.l.b16 %v2386
        %v3055 = vunpack.c.h.b16 %v2386
        %v3056 = vunpack.c.l.b16 %v2387
        %v3057 = vunpack.c.h.b16 %v2387
        %v3058 = vunpack.c.l.b16 %v2388
        %v3059 = vunpack.c.h.b16 %v2388
        %v3060 = vunpack.c.l.b16 %v2389
        %v3061 = vunpack.c.h.b16 %v2389
        %v3062 = vunpack.c.l.b16 %v2390
        %v3063 = vunpack.c.h.b16 %v2390
        %v3064 = vunpack.c.l.b16 %v2391
        %v3065 = vunpack.c.h.b16 %v2391
        %v3066 = vunpack.c.l.b16 %v2392
        %v3067 = vunpack.c.h.b16 %v2392
        %v3068 = vunpack.c.l.b16 %v2393
        %v3069 = vunpack.c.h.b16 %v2393
        %v3070 = vunpack.c.l.b16 %v2394
        %v3071 = vunpack.c.h.b16 %v2394
        %v3072 = vunpack.c.l.b16 %v2395
        %v3073 = vunpack.c.h.b16 %v2395
        %v3074 = vunpack.c.l.b16 %v2396
        %v3075 = vunpack.c.h.b16 %v2396
        %v3076 = vunpack.c.l.b16 %v2397
        %v3077 = vunpack.c.h.b16 %v2397
        %v3078 = vunpack.c.l.b16 %v2398
        %v3079 = vunpack.c.h.b16 %v2398
        %v3080 = vunpack.c.l.b16 %v2399
        %v3081 = vunpack.c.h.b16 %v2399
        %v3082 = vunpack.c.l.b16 %v2400
        %v3083 = vunpack.c.h.b16 %v2400
        %v3084 = vunpack.c.l.b16 %v2401
        %v3085 = vunpack.c.h.b16 %v2401
        %v3086 = vunpack.c.l.b16 %v2402
        %v3087 = vunpack.c.h.b16 %v2402
        %v3088 = vunpack.c.l.b16 %v2403
        %v3089 = vunpack.c.h.b16 %v2403
        %v3090 = vunpack.c.l.b16 %v2404
        %v3091 = vunpack.c.h.b16 %v2404
        %v3092 = vunpack.c.l.b16 %v2405
        %v3093 = vunpack.c.h.b16 %v2405
        %v3094 = vunpack.c.l.b16 %v2406
        %v3095 = vunpack.c.h.b16 %v2406
        %v3096 = vunpack.c.l.b16 %v2407
        %v3097 = vunpack.c.h.b16 %v2407
        %v3098 = vunpack.c.l.b16 %v2408
        %v3099 = vunpack.c.h.b16 %v2408
        %v3100 = vunpack.c.l.b16 %v2409
        %v3101 = vunpack.c.h.b16 %v2409
        %v3102 = vunpack.c.l.b16 %v2410
        %v3103 = vunpack.c.h.b16 %v2410
        %v3104 = vunpack.c.l.b16 %v2411
        %v3105 = vunpack.c.h.b16 %v2411
        %v3106 = vunpack.c.l.b16 %v2412
        %v3107 = vunpack.c.h.b16 %v2412
        %v3108 = vunpack.c.l.b16 %v2413
        %v3109 = vunpack.c.h.b16 %v2413
        %v3110 = vunpack.c.l.b16 %v2414
        %v3111 = vunpack.c.h.b16 %v2414
        %v3112 = vunpack.c.l.b16 %v2415
        %v3113 = vunpack.c.h.b16 %v2415
        %v3114 = vunpack.c.l.b16 %v2416
        %v3115 = vunpack.c.h.b16 %v2416
        %v3116 = vunpack.c.l.b16 %v2417
        %v3117 = vunpack.c.h.b16 %v2417
        %v3118 = vunpack.c.l.b16 %v2418
        %v3119 = vunpack.c.h.b16 %v2418
        %v3120 = vunpack.c.l.b16 %v2419
        %v3121 = vunpack.c.h.b16 %v2419
        %v3122 = vunpack.c.l.b16 %v2420
        %v3123 = vunpack.c.h.b16 %v2420
        %v3124 = vunpack.c.l.b16 %v2421
        %v3125 = vunpack.c.h.b16 %v2421
        %v3126 = vunpack.c.l.b16 %v2422
        %v3127 = vunpack.c.h.b16 %v2422
        %v3128 = vunpack.c.l.b16 %v2423
        %v3129 = vunpack.c.h.b16 %v2423
        %v3130 = vunpack.c.l.b16 %v2424
        %v3131 = vunpack.c.h.b16 %v2424
        %v3132 = vunpack.c.l.b16 %v2425
        %v3133 = vunpack.c.h.b16 %v2425
        %v3134 = vunpack.c.l.b16 %v2426
        %v3135 = vunpack.c.h.b16 %v2426
        %v3136 = vunpack.c.l.b16 %v2427
        %v3137 = vunpack.c.h.b16 %v2427
        %v3138 = vunpack.c.l.b16 %v2428
        %v3139 = vunpack.c.h.b16 %v2428
        %v3140 = vunpack.c.l.b16 %v2429
        %v3141 = vunpack.c.h.b16 %v2429
        %v3142 = vunpack.c.l.b16 %v2430
        %v3143 = vunpack.c.h.b16 %v2430
        %v3144 = vunpack.c.l.b16 %v2431
        %v3145 = vunpack.c.h.b16 %v2431
        %v3146 = vunpack.c.l.b16 %v2432
        %v3147 = vunpack.c.h.b16 %v2432
        %v3148 = vunpack.c.l.b16 %v2433
        %v3149 = vunpack.c.h.b16 %v2433
        %v3150 = vunpack.c.l.b16 %v2434
        %v3151 = vunpack.c.h.b16 %v2434
        %v3152 = vunpack.c.l.b16 %v2435
        %v3153 = vunpack.c.h.b16 %v2435
        %v3154 = vunpack.c.l.b16 %v2436
        %v3155 = vunpack.c.h.b16 %v2436
        %v3156 = vunpack.c.l.b16 %v2437
        %v3157 = vunpack.c.h.b16 %v2437
        %v3158 = vunpack.c.l.b16 %v2438
        %v3159 = vunpack.c.h.b16 %v2438
        %v3160 = vunpack.c.l.b16 %v2439
        %v3161 = vunpack.c.h.b16 %v2439
        %v3162 = vunpack.c.l.b16 %v2440
        %v3163 = vunpack.c.h.b16 %v2440
        %v3164 = vunpack.c.l.b16 %v2441
        %v3165 = vunpack.c.h.b16 %v2441
        %v3166 = vunpack.c.l.b16 %v2442
        %v3167 = vunpack.c.h.b16 %v2442
        %v3168 = vunpack.c.l.b16 %v2443
        %v3169 = vunpack.c.h.b16 %v2443
        %v3170 = vunpack.c.l.b16 %v2444
        %v3171 = vunpack.c.h.b16 %v2444
        %v3172 = vunpack.c.l.b16 %v2445
        %v3173 = vunpack.c.h.b16 %v2445
        %v3174 = vunpack.c.l.b16 %v2446
        %v3175 = vunpack.c.h.b16 %v2446
        %v3176 = vunpack.c.l.b16 %v2447
        %v3177 = vunpack.c.h.b16 %v2447
        %v3178 = vunpack.c.l.b16 %v2448
        %v3179 = vunpack.c.h.b16 %v2448
        %v3180 = vunpack.c.l.b16 %v2449
        %v3181 = vunpack.c.h.b16 %v2449
        %v3182 = vunpack.c.l.b16 %v2450
        %v3183 = vunpack.c.h.b16 %v2450
        %v3184 = vunpack.c.l.b16 %v2451
        %v3185 = vunpack.c.h.b16 %v2451
        %v3186 = vunpack.c.l.b16 %v2452
        %v3187 = vunpack.c.h.b16 %v2452
        %v3188 = vunpack.c.l.b16 %v2453
        %v3189 = vunpack.c.h.b16 %v2453
        %v3190 = vunpack.c.l.b16 %v2454
        %v3191 = vunpack.c.h.b16 %v2454
        %v3192 = vunpack.c.l.b16 %v2455
        %v3193 = vunpack.c.h.b16 %v2455
        %v3194 = vunpack.c.l.b16 %v2456
        %v3195 = vunpack.c.h.b16 %v2456
        %v3196 = vunpack.c.l.b16 %v2457
        %v3197 = vunpack.c.h.b16 %v2457
        %v3198 = vunpack.c.l.b16 %v2458
        %v3199 = vunpack.c.h.b16 %v2458
        %v3200 = vunpack.c.l.b16 %v2459
        %v3201 = vunpack.c.h.b16 %v2459
        %v3202 = vunpack.c.l.b16 %v2460
        %v3203 = vunpack.c.h.b16 %v2460
        %v3204 = vunpack.c.l.b16 %v2461
        %v3205 = vunpack.c.h.b16 %v2461
        %v3206 = vunpack.c.l.b16 %v2462
        %v3207 = vunpack.c.h.b16 %v2462
        %v3208 = vunpack.c.l.b16 %v2463
        %v3209 = vunpack.c.h.b16 %v2463
        %v3210 = vunpack.c.l.b16 %v2464
        %v3211 = vunpack.c.h.b16 %v2464
        %v3212 = vunpack.c.l.b16 %v2465
        %v3213 = vunpack.c.h.b16 %v2465
        %v3214 = vunpack.c.l.b16 %v2466
        %v3215 = vunpack.c.h.b16 %v2466
        %v3216 = vunpack.c.l.b16 %v2467
        %v3217 = vunpack.c.h.b16 %v2467
        %v3218 = vunpack.c.l.b16 %v2468
        %v3219 = vunpack.c.h.b16 %v2468
        %v3220 = vunpack.c.l.b16 %v2469
        %v3221 = vunpack.c.h.b16 %v2469
        %v3222 = vunpack.c.l.b16 %v2470
        %v3223 = vunpack.c.h.b16 %v2470
        %v3224 = vunpack.c.l.b16 %v2471
        %v3225 = vunpack.c.h.b16 %v2471
        %v3226 = vunpack.c.l.b16 %v2472
        %v3227 = vunpack.c.h.b16 %v2472
        %v3228 = vunpack.c.l.b16 %v2473
        %v3229 = vunpack.c.h.b16 %v2473
        %v3230 = vunpack.c.l.b16 %v2474
        %v3231 = vunpack.c.h.b16 %v2474
        %v3232 = vunpack.c.l.b16 %v2475
        %v3233 = vunpack.c.h.b16 %v2475
        %v3234 = vunpack.c.l.b16 %v2476
        %v3235 = vunpack.c.h.b16 %v2476
        %v3236 = vunpack.c.l.b16 %v2477
        %v3237 = vunpack.c.h.b16 %v2477
        %v3238 = vunpack.c.l.b16 %v2478
        %v3239 = vunpack.c.h.b16 %v2478
        %v3240 = vunpack.c.l.b16 %v2479
        %v3241 = vunpack.c.h.b16 %v2479
        %v3242 = vunpack.c.l.b16 %v2480
        %v3243 = vunpack.c.h.b16 %v2480
        %v3244 = vunpack.c.l.b16 %v2481
        %v3245 = vunpack.c.h.b16 %v2481
        %v3246 = vunpack.c.l.b16 %v2482
        %v3247 = vunpack.c.h.b16 %v2482
        %v3248 = vunpack.c.l.b16 %v2483
        %v3249 = vunpack.c.h.b16 %v2483
        %v3250 = vunpack.c.l.b16 %v2484
        %v3251 = vunpack.c.h.b16 %v2484
        %v3252 = vunpack.c.l.b16 %v2485
        %v3253 = vunpack.c.h.b16 %v2485
        %v3254 = vunpack.c.l.b16 %v2486
        %v3255 = vunpack.c.h.b16 %v2486
        %v3256 = vunpack.c.l.b16 %v2487
        %v3257 = vunpack.c.h.b16 %v2487
        %v3258 = vunpack.c.l.b16 %v2488
        %v3259 = vunpack.c.h.b16 %v2488
        %v3260 = vunpack.c.l.b16 %v2489
        %v3261 = vunpack.c.h.b16 %v2489
        %v3262 = vunpack.c.l.b16 %v2490
        %v3263 = vunpack.c.h.b16 %v2490
        %v3264 = vunpack.c.l.b16 %v2491
        %v3265 = vunpack.c.h.b16 %v2491
        %v3266 = vunpack.c.l.b16 %v2492
        %v3267 = vunpack.c.h.b16 %v2492
        %v3268 = vunpack.c.l.b16 %v2493
        %v3269 = vunpack.c.h.b16 %v2493
        %v3270 = vunpack.c.l.b16 %v2494
        %v3271 = vunpack.c.h.b16 %v2494
        %v3272 = vunpack.c.l.b16 %v2495
        %v3273 = vunpack.c.h.b16 %v2495
        %v3274 = vunpack.c.l.b16 %v2496
        %v3275 = vunpack.c.h.b16 %v2496
        %v3276 = vunpack.c.l.b16 %v2497
        %v3277 = vunpack.c.h.b16 %v2497
        %v3278 = vunpack.c.l.b16 %v2498
        %v3279 = vunpack.c.h.b16 %v2498
        %v3280 = vunpack.c.l.b16 %v2499
        %v3281 = vunpack.c.h.b16 %v2499
        %v3282 = vunpack.c.l.b16 %v2500
        %v3283 = vunpack.c.h.b16 %v2500
        %v3284 = vunpack.c.l.b16 %v2501
        %v3285 = vunpack.c.h.b16 %v2501
        %v3286 = vunpack.c.l.b16 %v2502
        %v3287 = vunpack.c.h.b16 %v2502
        %v3288 = vunpack.c.l.b16 %v2503
        %v3289 = vunpack.c.h.b16 %v2503
        %v3290 = vunpack.c.l.b16 %v2504
        %v3291 = vunpack.c.h.b16 %v2504
        %v3292 = vunpack.c.l.b16 %v2505
        %v3293 = vunpack.c.h.b16 %v2505
        %v3294 = vunpack.c.l.b16 %v2506
        %v3295 = vunpack.c.h.b16 %v2506
        %v3296 = vunpack.c.l.b16 %v2507
        %v3297 = vunpack.c.h.b16 %v2507
        %v3298 = vpack.c.b16 %v2790, %v2786
        %v3299 = vpack.c.b16 %v2791, %v2787
        %v3300 = vpack.c.b16 %v2792, %v2788
        %v3301 = vpack.c.b16 %v2793, %v2789
        %v3302 = vpack.c.b16 %v2798, %v2794
        %v3303 = vpack.c.b16 %v2799, %v2795
        %v3304 = vpack.c.b16 %v2800, %v2796
        %v3305 = vpack.c.b16 %v2801, %v2797
        %v3306 = vpack.c.b16 %v2806, %v2802
        %v3307 = vpack.c.b16 %v2807, %v2803
        %v3308 = vpack.c.b16 %v2808, %v2804
        %v3309 = vpack.c.b16 %v2809, %v2805
        %v3310 = vpack.c.b16 %v2814, %v2810
        %v3311 = vpack.c.b16 %v2815, %v2811
        %v3312 = vpack.c.b16 %v2816, %v2812
        %v3313 = vpack.c.b16 %v2817, %v2813
        %v3314 = vpack.c.b16 %v2822, %v2818
        %v3315 = vpack.c.b16 %v2823, %v2819
        %v3316 = vpack.c.b16 %v2824, %v2820
        %v3317 = vpack.c.b16 %v2825, %v2821
        %v3318 = vpack.c.b16 %v2830, %v2826
        %v3319 = vpack.c.b16 %v2831, %v2827
        %v3320 = vpack.c.b16 %v2832, %v2828
        %v3321 = vpack.c.b16 %v2833, %v2829
        %v3322 = vpack.c.b16 %v2838, %v2834
        %v3323 = vpack.c.b16 %v2839, %v2835
        %v3324 = vpack.c.b16 %v2840, %v2836
        %v3325 = vpack.c.b16 %v2841, %v2837
        %v3326 = vpack.c.b16 %v2846, %v2842
        %v3327 = vpack.c.b16 %v2847, %v2843
        %v3328 = vpack.c.b16 %v2848, %v2844
        %v3329 = vpack.c.b16 %v2849, %v2845
        %v3330 = vpack.c.b16 %v2854, %v2850
        %v3331 = vpack.c.b16 %v2855, %v2851
        %v3332 = vpack.c.b16 %v2856, %v2852
        %v3333 = vpack.c.b16 %v2857, %v2853
        %v3334 = vpack.c.b16 %v2862, %v2858
        %v3335 = vpack.c.b16 %v2863, %v2859
        %v3336 = vpack.c.b16 %v2864, %v2860
        %v3337 = vpack.c.b16 %v2865, %v2861
        %v3338 = vpack.c.b16 %v2870, %v2866
        %v3339 = vpack.c.b16 %v2871, %v2867
        %v3340 = vpack.c.b16 %v2872, %v2868
        %v3341 = vpack.c.b16 %v2873, %v2869
        %v3342 = vpack.c.b16 %v2878, %v2874
        %v3343 = vpack.c.b16 %v2879, %v2875
        %v3344 = vpack.c.b16 %v2880, %v2876
        %v3345 = vpack.c.b16 %v2881, %v2877
        %v3346 = vpack.c.b16 %v2886, %v2882
        %v3347 = vpack.c.b16 %v2887, %v2883
        %v3348 = vpack.c.b16 %v2888, %v2884
        %v3349 = vpack.c.b16 %v2889, %v2885
        %v3350 = vpack.c.b16 %v2894, %v2890
        %v3351 = vpack.c.b16 %v2895, %v2891
        %v3352 = vpack.c.b16 %v2896, %v2892
        %v3353 = vpack.c.b16 %v2897, %v2893
        %v3354 = vpack.c.b16 %v2902, %v2898
        %v3355 = vpack.c.b16 %v2903, %v2899
        %v3356 = vpack.c.b16 %v2904, %v2900
        %v3357 = vpack.c.b16 %v2905, %v2901
        %v3358 = vpack.c.b16 %v2910, %v2906
        %v3359 = vpack.c.b16 %v2911, %v2907
        %v3360 = vpack.c.b16 %v2912, %v2908
        %v3361 = vpack.c.b16 %v2913, %v2909
        %v3362 = vpack.c.b16 %v2918, %v2914
        %v3363 = vpack.c.b16 %v2919, %v2915
        %v3364 = vpack.c.b16 %v2920, %v2916
        %v3365 = vpack.c.b16 %v2921, %v2917
        %v3366 = vpack.c.b16 %v2926, %v2922
        %v3367 = vpack.c.b16 %v2927, %v2923
        %v3368 = vpack.c.b16 %v2928, %v2924
        %v3369 = vpack.c.b16 %v2929, %v2925
        %v3370 = vpack.c.b16 %v2934, %v2930
        %v3371 = vpack.c.b16 %v2935, %v2931
        %v3372 = vpack.c.b16 %v2936, %v2932
        %v3373 = vpack.c.b16 %v2937, %v2933
        %v3374 = vpack.c.b16 %v2942, %v2938
        %v3375 = vpack.c.b16 %v2943, %v2939
        %v3376 = vpack.c.b16 %v2944, %v2940
        %v3377 = vpack.c.b16 %v2945, %v2941
        %v3378 = vpack.c.b16 %v2950, %v2946
        %v3379 = vpack.c.b16 %v2951, %v2947
        %v3380 = vpack.c.b16 %v2952, %v2948
        %v3381 = vpack.c.b16 %v2953, %v2949
        %v3382 = vpack.c.b16 %v2958, %v2954
        %v3383 = vpack.c.b16 %v2959, %v2955
        %v3384 = vpack.c.b16 %v2960, %v2956
        %v3385 = vpack.c.b16 %v2961, %v2957
        %v3386 = vpack.c.b16 %v2966, %v2962
        %v3387 = vpack.c.b16 %v2967, %v2963
        %v3388 = vpack.c.b16 %v2968, %v2964
        %v3389 = vpack.c.b16 %v2969, %v2965
        %v3390 = vpack.c.b16 %v2974, %v2970
        %v3391 = vpack.c.b16 %v2975, %v2971
        %v3392 = vpack.c.b16 %v2976, %v2972
        %v3393 = vpack.c.b16 %v2977, %v2973
        %v3394 = vpack.c.b16 %v2982, %v2978
        %v3395 = vpack.c.b16 %v2983, %v2979
        %v3396 = vpack.c.b16 %v2984, %v2980
        %v3397 = vpack.c.b16 %v2985, %v2981
        %v3398 = vpack.c.b16 %v2990, %v2986
        %v3399 = vpack.c.b16 %v2991, %v2987
        %v3400 = vpack.c.b16 %v2992, %v2988
        %v3401 = vpack.c.b16 %v2993, %v2989
        %v3402 = vpack.c.b16 %v2998, %v2994
        %v3403 = vpack.c.b16 %v2999, %v2995
        %v3404 = vpack.c.b16 %v3000, %v2996
        %v3405 = vpack.c.b16 %v3001, %v2997
        %v3406 = vpack.c.b16 %v3006, %v3002
        %v3407 = vpack.c.b16 %v3007, %v3003
        %v3408 = vpack.c.b16 %v3008, %v3004
        %v3409 = vpack.c.b16 %v3009, %v3005
        %v3410 = vpack.c.b16 %v3014, %v3010
        %v3411 = vpack.c.b16 %v3015, %v3011
        %v3412 = vpack.c.b16 %v3016, %v3012
        %v3413 = vpack.c.b16 %v3017, %v3013
        %v3414 = vpack.c.b16 %v3022, %v3018
        %v3415 = vpack.c.b16 %v3023, %v3019
        %v3416 = vpack.c.b16 %v3024, %v3020
        %v3417 = vpack.c.b16 %v3025, %v3021
        %v3418 = vpack.c.b16 %v3030, %v3026
        %v3419 = vpack.c.b16 %v3031, %v3027
        %v3420 = vpack.c.b16 %v3032, %v3028
        %v3421 = vpack.c.b16 %v3033, %v3029
        %v3422 = vpack.c.b16 %v3038, %v3034
        %v3423 = vpack.c.b16 %v3039, %v3035
        %v3424 = vpack.c.b16 %v3040, %v3036
        %v3425 = vpack.c.b16 %v3041, %v3037
        %v3426 = vpack.c.b16 %v3046, %v3042
        %v3427 = vpack.c.b16 %v3047, %v3043
        %v3428 = vpack.c.b16 %v3048, %v3044
        %v3429 = vpack.c.b16 %v3049, %v3045
        %v3430 = vpack.c.b16 %v3054, %v3050
        %v3431 = vpack.c.b16 %v3055, %v3051
        %v3432 = vpack.c.b16 %v3056, %v3052
        %v3433 = vpack.c.b16 %v3057, %v3053
        %v3434 = vpack.c.b16 %v3062, %v3058
        %v3435 = vpack.c.b16 %v3063, %v3059
        %v3436 = vpack.c.b16 %v3064, %v3060
        %v3437 = vpack.c.b16 %v3065, %v3061
        %v3438 = vpack.c.b16 %v3070, %v3066
        %v3439 = vpack.c.b16 %v3071, %v3067
        %v3440 = vpack.c.b16 %v3072, %v3068
        %v3441 = vpack.c.b16 %v3073, %v3069
        %v3442 = vpack.c.b16 %v3078, %v3074
        %v3443 = vpack.c.b16 %v3079, %v3075
        %v3444 = vpack.c.b16 %v3080, %v3076
        %v3445 = vpack.c.b16 %v3081, %v3077
        %v3446 = vpack.c.b16 %v3086, %v3082
        %v3447 = vpack.c.b16 %v3087, %v3083
        %v3448 = vpack.c.b16 %v3088, %v3084
        %v3449 = vpack.c.b16 %v3089, %v3085
        %v3450 = vpack.c.b16 %v3094, %v3090
        %v3451 = vpack.c.b16 %v3095, %v3091
        %v3452 = vpack.c.b16 %v3096, %v3092
        %v3453 = vpack.c.b16 %v3097, %v3093
        %v3454 = vpack.c.b16 %v3102, %v3098
        %v3455 = vpack.c.b16 %v3103, %v3099
        %v3456 = vpack.c.b16 %v3104, %v3100
        %v3457 = vpack.c.b16 %v3105, %v3101
        %v3458 = vpack.c.b16 %v3110, %v3106
        %v3459 = vpack.c.b16 %v3111, %v3107
        %v3460 = vpack.c.b16 %v3112, %v3108
        %v3461 = vpack.c.b16 %v3113, %v3109
        %v3462 = vpack.c.b16 %v3118, %v3114
        %v3463 = vpack.c.b16 %v3119, %v3115
        %v3464 = vpack.c.b16 %v3120, %v3116
        %v3465 = vpack.c.b16 %v3121, %v3117
        %v3466 = vpack.c.b16 %v3126, %v3122
        %v3467 = vpack.c.b16 %v3127, %v3123
        %v3468 = vpack.c.b16 %v3128, %v3124
        %v3469 = vpack.c.b16 %v3129, %v3125
        %v3470 = vpack.c.b16 %v3134, %v3130
        %v3471 = vpack.c.b16 %v3135, %v3131
        %v3472 = vpack.c.b16 %v3136, %v3132
        %v3473 = vpack.c.b16 %v3137, %v3133
        %v3474 = vpack.c.b16 %v3142, %v3138
        %v3475 = vpack.c.b16 %v3143, %v3139
        %v3476 = vpack.c.b16 %v3144, %v3140
        %v3477 = vpack.c.b16 %v3145, %v3141
        %v3478 = vpack.c.b16 %v3150, %v3146
        %v3479 = vpack.c.b16 %v3151, %v3147
        %v3480 = vpack.c.b16 %v3152, %v3148
        %v3481 = vpack.c.b16 %v3153, %v3149
        %v3482 = vpack.c.b16 %v3158, %v3154
        %v3483 = vpack.c.b16 %v3159, %v3155
        %v3484 = vpack.c.b16 %v3160, %v3156
        %v3485 = vpack.c.b16 %v3161, %v3157
        %v3486 = vpack.c.b16 %v3166, %v3162
        %v3487 = vpack.c.b16 %v3167, %v3163
        %v3488 = vpack.c.b16 %v3168, %v3164
        %v3489 = vpack.c.b16 %v3169, %v3165
        %v3490 = vpack.c.b16 %v3174, %v3170
        %v3491 = vpack.c.b16 %v3175, %v3171
        %v3492 = vpack.c.b16 %v3176, %v3172
        %v3493 = vpack.c.b16 %v3177, %v3173
        %v3494 = vpack.c.b16 %v3182, %v3178
        %v3495 = vpack.c.b16 %v3183, %v3179
        %v3496 = vpack.c.b16 %v3184, %v3180
        %v3497 = vpack.c.b16 %v3185, %v3181
        %v3498 = vpack.c.b16 %v3190, %v3186
        %v3499 = vpack.c.b16 %v3191, %v3187
        %v3500 = vpack.c.b16 %v3192, %v3188
        %v3501 = vpack.c.b16 %v3193, %v3189
        %v3502 = vpack.c.b16 %v3198, %v3194
        %v3503 = vpack.c.b16 %v3199, %v3195
        %v3504 = vpack.c.b16 %v3200, %v3196
        %v3505 = vpack.c.b16 %v3201, %v3197
        %v3506 = vpack.c.b16 %v3206, %v3202
        %v3507 = vpack.c.b16 %v3207, %v3203
        %v3508 = vpack.c.b16 %v3208, %v3204
        %v3509 = vpack.c.b16 %v3209, %v3205
        %v3510 = vpack.c.b16 %v3214, %v3210
        %v3511 = vpack.c.b16 %v3215, %v3211
        %v3512 = vpack.c.b16 %v3216, %v3212
        %v3513 = vpack.c.b16 %v3217, %v3213
        %v3514 = vpack.c.b16 %v3222, %v3218
        %v3515 = vpack.c.b16 %v3223, %v3219
        %v3516 = vpack.c.b16 %v3224, %v3220
        %v3517 = vpack.c.b16 %v3225, %v3221
        %v3518 = vpack.c.b16 %v3230, %v3226
        %v3519 = vpack.c.b16 %v3231, %v3227
        %v3520 = vpack.c.b16 %v3232, %v3228
        %v3521 = vpack.c.b16 %v3233, %v3229
        %v3522 = vpack.c.b16 %v3238, %v3234
        %v3523 = vpack.c.b16 %v3239, %v3235
        %v3524 = vpack.c.b16 %v3240, %v3236
        %v3525 = vpack.c.b16 %v3241, %v3237
        %v3526 = vpack.c.b16 %v3246, %v3242
        %v3527 = vpack.c.b16 %v3247, %v3243
        %v3528 = vpack.c.b16 %v3248, %v3244
        %v3529 = vpack.c.b16 %v3249, %v3245
        %v3530 = vpack.c.b16 %v3254, %v3250
        %v3531 = vpack.c.b16 %v3255, %v3251
        %v3532 = vpack.c.b16 %v3256, %v3252
        %v3533 = vpack.c.b16 %v3257, %v3253
        %v3534 = vpack.c.b16 %v3262, %v3258
        %v3535 = vpack.c.b16 %v3263, %v3259
        %v3536 = vpack.c.b16 %v3264, %v3260
        %v3537 = vpack.c.b16 %v3265, %v3261
        %v3538 = vpack.c.b16 %v3270, %v3266
        %v3539 = vpack.c.b16 %v3271, %v3267
        %v3540 = vpack.c.b16 %v3272, %v3268
        %v3541 = vpack.c.b16 %v3273, %v3269
        %v3542 = vpack.c.b16 %v3278, %v3274
        %v3543 = vpack.c.b16 %v3279, %v3275
        %v3544 = vpack.c.b16 %v3280, %v3276
        %v3545 = vpack.c.b16 %v3281, %v3277
        %v3546 = vpack.c.b16 %v3286, %v3282
        %v3547 = vpack.c.b16 %v3287, %v3283
        %v3548 = vpack.c.b16 %v3288, %v3284
        %v3549 = vpack.c.b16 %v3289, %v3285
        %v3550 = vpack.c.b16 %v3294, %v3290
        %v3551 = vpack.c.b16 %v3295, %v3291
        %v3552 = vpack.c.b16 %v3296, %v3292
        %v3553 = vpack.c.b16 %v3297, %v3293
        %3810 = vmatprep.subr.bf16.mxu0 %v3299
        %3811 = vmatpush1.bf16.msra.mxu0 %v3298
        %3812 = vmatprep.subr.bf16.mxu0 %v3303
        %3813 = vmatpush1.bf16.msra.mxu0 %v3302
        %3814 = vmatprep.subr.bf16.mxu0 %v3307
        %3815 = vmatpush1.bf16.msra.mxu0 %v3306
        %3816 = vmatprep.subr.bf16.mxu0 %v3311
        %3817 = vmatpush1.bf16.msra.mxu0 %v3310
        %3818 = vmatprep.subr.bf16.mxu0 %v3315
        %3819 = vmatpush1.bf16.msra.mxu0 %v3314
        %3820 = vmatprep.subr.bf16.mxu0 %v3319
        %3821 = vmatpush1.bf16.msra.mxu0 %v3318
        %3822 = vmatprep.subr.bf16.mxu0 %v3323
        %3823 = vmatpush1.bf16.msra.mxu0 %v3322
        %3824 = vmatprep.subr.bf16.mxu0 %v3327
        %3825 = vmatpush1.bf16.msra.mxu0 %v3326
        %3826 = vmatprep.subr.bf16.mxu0 %v3331
        %3827 = vmatpush1.bf16.msra.mxu0 %v3330
        %3828 = vmatprep.subr.bf16.mxu0 %v3335
        %3829 = vmatpush1.bf16.msra.mxu0 %v3334
        %3830 = vmatprep.subr.bf16.mxu0 %v3339
        %3831 = vmatpush1.bf16.msra.mxu0 %v3338
        %3832 = vmatprep.subr.bf16.mxu0 %v3343
        %3833 = vmatpush1.bf16.msra.mxu0 %v3342
        %3834 = vmatprep.subr.bf16.mxu0 %v3347
        %3835 = vmatpush1.bf16.msra.mxu0 %v3346
        %3836 = vmatprep.subr.bf16.mxu0 %v3351
        %3837 = vmatpush1.bf16.msra.mxu0 %v3350
        %3838 = vmatprep.subr.bf16.mxu0 %v3355
        %3839 = vmatpush1.bf16.msra.mxu0 %v3354
        %3840 = vmatprep.subr.bf16.mxu0 %v3359
        %3841 = vmatpush1.bf16.msra.mxu0 %v3358
        %3842 = vmatprep.mubr.bf16.mxu0 %v2189
        %3843 = vmatmul.mubr.bf16.gmra.mrb[0].mxu0 %v2188
        %v3844 = vpop.f32.mrb[0].mxu0
        %v3845 = vadd.f32 %v2513, %v3844
        %v3846 = vpop.f32.mrb[0].mxu0
        %v3847 = vadd.f32 %v2517, %v3846
        %v3848 = vpop.f32.mrb[0].mxu0
        %v3849 = vadd.f32 %v2513, %v3848
        %v3850 = vpop.f32.mrb[0].mxu0
        %v3851 = vadd.f32 %v2517, %v3850
        %3852 = vmatprep.mubr.bf16.mxu0 %v2197
        %3853 = vmatmul.mubr.bf16.gmra.mrb[0].mxu0 %v2196
        %v3854 = vpop.f32.mrb[0].mxu0
        %v3855 = vadd.f32 %v2513, %v3854
        %v3856 = vpop.f32.mrb[0].mxu0
        %v3857 = vadd.f32 %v2517, %v3856
        %v3858 = vpop.f32.mrb[0].mxu0
        %v3859 = vadd.f32 %v2513, %v3858
        %v3860 = vpop.f32.mrb[0].mxu0
        %v3861 = vadd.f32 %v2517, %v3860
        %3862 = vmatprep.mubr.bf16.mxu0 %v2205
        %3863 = vmatmul.mubr.bf16.gmra.mrb[0].mxu0 %v2204
        %v3864 = vpop.f32.mrb[0].mxu0
        %v3865 = vadd.f32 %v2513, %v3864
        %v3866 = vpop.f32.mrb[0].mxu0
        %v3867 = vadd.f32 %v2517, %v3866
        %v3868 = vpop.f32.mrb[0].mxu0
        %v3869 = vadd.f32 %v2513, %v3868
        %v3870 = vpop.f32.mrb[0].mxu0
        %v3871 = vadd.f32 %v2517, %v3870
        %3872 = vmatprep.mubr.bf16.mxu0 %v2213
        %3873 = vmatmul.mubr.bf16.gmra.mrb[0].mxu0 %v2212
        %v3874 = vpop.f32.mrb[0].mxu0
        %v3875 = vadd.f32 %v2513, %v3874
        %v3876 = vpop.f32.mrb[0].mxu0
        %v3877 = vadd.f32 %v2517, %v3876
        %v3878 = vpop.f32.mrb[0].mxu0
        %v3879 = vadd.f32 %v2513, %v3878
        %v3880 = vpop.f32.mrb[0].mxu0
        %v3881 = vadd.f32 %v2517, %v3880
        %3882 = vmatprep.mubr.bf16.mxu0 %v2221
        %3883 = vmatmul.mubr.bf16.gmra.mrb[0].mxu0 %v2220
        %v3884 = vpop.f32.mrb[0].mxu0
        %v3885 = vadd.f32 %v2513, %v3884
        %v3886 = vpop.f32.mrb[0].mxu0
        %v3887 = vadd.f32 %v2517, %v3886
        %v3888 = vpop.f32.mrb[0].mxu0
        %v3889 = vadd.f32 %v2513, %v3888
        %v3890 = vpop.f32.mrb[0].mxu0
        %v3891 = vadd.f32 %v2517, %v3890
        %3892 = vmatprep.mubr.bf16.mxu0 %v2229
        %3893 = vmatmul.mubr.bf16.gmra.mrb[0].mxu0 %v2228
        %v3894 = vpop.f32.mrb[0].mxu0
        %v3895 = vadd.f32 %v2513, %v3894
        %v3896 = vpop.f32.mrb[0].mxu0
        %v3897 = vadd.f32 %v2517, %v3896
        %v3898 = vpop.f32.mrb[0].mxu0
        %v3899 = vadd.f32 %v2513, %v3898
        %v3900 = vpop.f32.mrb[0].mxu0
        %v3901 = vadd.f32 %v2517, %v3900
        %3902 = vmatprep.mubr.bf16.mxu0 %v2237
        %3903 = vmatmul.mubr.bf16.gmra.mrb[0].mxu0 %v2236
        %v3904 = vpop.f32.mrb[0].mxu0
        %v3905 = vadd.f32 %v2513, %v3904
        %v3906 = vpop.f32.mrb[0].mxu0
        %v3907 = vadd.f32 %v2517, %v3906
        %v3908 = vpop.f32.mrb[0].mxu0
        %v3909 = vadd.f32 %v2513, %v3908
        %v3910 = vpop.f32.mrb[0].mxu0
        %v3911 = vadd.f32 %v2517, %v3910
        %3912 = vmatprep.mubr.bf16.mxu0 %v2245
        %3913 = vmatmul.mubr.bf16.gmra.mrb[0].mxu0 %v2244
        %v3914 = vpop.f32.mrb[0].mxu0
        %v3915 = vadd.f32 %v2513, %v3914
        %v3916 = vpop.f32.mrb[0].mxu0
        %v3917 = vadd.f32 %v2517, %v3916
        %v3918 = vpop.f32.mrb[0].mxu0
        %v3919 = vadd.f32 %v2513, %v3918
        %v3920 = vpop.f32.mrb[0].mxu0
        %v3921 = vadd.f32 %v2517, %v3920
        %3922 = vdwg.mxu0
        %3923 = vmatprep.subr.bf16.mxu0 %v3363
        %3924 = vmatpush1.bf16.msra.mxu0 %v3362
        %3925 = vmatprep.subr.bf16.mxu0 %v3367
        %3926 = vmatpush1.bf16.msra.mxu0 %v3366
        %3927 = vmatprep.subr.bf16.mxu0 %v3371
        %3928 = vmatpush1.bf16.msra.mxu0 %v3370
        %3929 = vmatprep.subr.bf16.mxu0 %v3375
        %3930 = vmatpush1.bf16.msra.mxu0 %v3374
        %3931 = vmatprep.subr.bf16.mxu0 %v3379
        %3932 = vmatpush1.bf16.msra.mxu0 %v3378
        %3933 = vmatprep.subr.bf16.mxu0 %v3383
        %3934 = vmatpush1.bf16.msra.mxu0 %v3382
        %3935 = vmatprep.subr.bf16.mxu0 %v3387
        %3936 = vmatpush1.bf16.msra.mxu0 %v3386
        %3937 = vmatprep.subr.bf16.mxu0 %v3391
        %3938 = vmatpush1.bf16.msra.mxu0 %v3390
        %3939 = vmatprep.subr.bf16.mxu0 %v3395
        %3940 = vmatpush1.bf16.msra.mxu0 %v3394
        %3941 = vmatprep.subr.bf16.mxu0 %v3399
        %3942 = vmatpush1.bf16.msra.mxu0 %v3398
        %3943 = vmatprep.subr.bf16.mxu0 %v3403
        %3944 = vmatpush1.bf16.msra.mxu0 %v3402
        %3945 = vmatprep.subr.bf16.mxu0 %v3407
        %3946 = vmatpush1.bf16.msra.mxu0 %v3406
        %3947 = vmatprep.subr.bf16.mxu0 %v3411
        %3948 = vmatpush1.bf16.msra.mxu0 %v3410
        %3949 = vmatprep.subr.bf16.mxu0 %v3415
        %3950 = vmatpush1.bf16.msra.mxu0 %v3414
        %3951 = vmatprep.subr.bf16.mxu0 %v3419
        %3952 = vmatpush1.bf16.msra.mxu0 %v3418
        %3953 = vmatprep.subr.bf16.mxu0 %v3423
        %3954 = vmatpush1.bf16.msra.mxu0 %v3422
        %3955 = vmatprep.mubr.bf16.mxu0 %v2191
        %3956 = vmatmul.mubr.bf16.gmra.mrb[0].mxu0 %v2190
        %v3957 = vpop.f32.mrb[0].mxu0
        %v3958 = vadd.f32 %v3845, %v3957
        %v3959 = vpop.f32.mrb[0].mxu0
        %v3960 = vadd.f32 %v3847, %v3959
        %v3961 = vpop.f32.mrb[0].mxu0
        %v3962 = vadd.f32 %v3849, %v3961
        %v3963 = vpop.f32.mrb[0].mxu0
        %v3964 = vadd.f32 %v3851, %v3963
        %3965 = vmatprep.mubr.bf16.mxu0 %v2199
        %3966 = vmatmul.mubr.bf16.gmra.mrb[0].mxu0 %v2198
        %v3967 = vpop.f32.mrb[0].mxu0
        %v3968 = vadd.f32 %v3855, %v3967
        %v3969 = vpop.f32.mrb[0].mxu0
        %v3970 = vadd.f32 %v3857, %v3969
        %v3971 = vpop.f32.mrb[0].mxu0
        %v3972 = vadd.f32 %v3859, %v3971
        %v3973 = vpop.f32.mrb[0].mxu0
        %v3974 = vadd.f32 %v3861, %v3973
        %3975 = vmatprep.mubr.bf16.mxu0 %v2207
        %3976 = vmatmul.mubr.bf16.gmra.mrb[0].mxu0 %v2206
        %v3977 = vpop.f32.mrb[0].mxu0
        %v3978 = vadd.f32 %v3865, %v3977
        %v3979 = vpop.f32.mrb[0].mxu0
        %v3980 = vadd.f32 %v3867, %v3979
        %v3981 = vpop.f32.mrb[0].mxu0
        %v3982 = vadd.f32 %v3869, %v3981
        %v3983 = vpop.f32.mrb[0].mxu0
        %v3984 = vadd.f32 %v3871, %v3983
        %3985 = vmatprep.mubr.bf16.mxu0 %v2215
        %3986 = vmatmul.mubr.bf16.gmra.mrb[0].mxu0 %v2214
        %v3987 = vpop.f32.mrb[0].mxu0
        %v3988 = vadd.f32 %v3875, %v3987
        %v3989 = vpop.f32.mrb[0].mxu0
        %v3990 = vadd.f32 %v3877, %v3989
        %v3991 = vpop.f32.mrb[0].mxu0
        %v3992 = vadd.f32 %v3879, %v3991
        %v3993 = vpop.f32.mrb[0].mxu0
        %v3994 = vadd.f32 %v3881, %v3993
        %3995 = vmatprep.mubr.bf16.mxu0 %v2223
        %3996 = vmatmul.mubr.bf16.gmra.mrb[0].mxu0 %v2222
        %v3997 = vpop.f32.mrb[0].mxu0
        %v3998 = vadd.f32 %v3885, %v3997
        %v3999 = vpop.f32.mrb[0].mxu0
        %v4000 = vadd.f32 %v3887, %v3999
        %v4001 = vpop.f32.mrb[0].mxu0
        %v4002 = vadd.f32 %v3889, %v4001
        %v4003 = vpop.f32.mrb[0].mxu0
        %v4004 = vadd.f32 %v3891, %v4003
        %4005 = vmatprep.mubr.bf16.mxu0 %v2231
        %4006 = vmatmul.mubr.bf16.gmra.mrb[0].mxu0 %v2230
        %v4007 = vpop.f32.mrb[0].mxu0
        %v4008 = vadd.f32 %v3895, %v4007
        %v4009 = vpop.f32.mrb[0].mxu0
        %v4010 = vadd.f32 %v3897, %v4009
        %v4011 = vpop.f32.mrb[0].mxu0
        %v4012 = vadd.f32 %v3899, %v4011
        %v4013 = vpop.f32.mrb[0].mxu0
        %v4014 = vadd.f32 %v3901, %v4013
        %4015 = vmatprep.mubr.bf16.mxu0 %v2239
        %4016 = vmatmul.mubr.bf16.gmra.mrb[0].mxu0 %v2238
        %v4017 = vpop.f32.mrb[0].mxu0
        %v4018 = vadd.f32 %v3905, %v4017
        %v4019 = vpop.f32.mrb[0].mxu0
        %v4020 = vadd.f32 %v3907, %v4019
        %v4021 = vpop.f32.mrb[0].mxu0
        %v4022 = vadd.f32 %v3909, %v4021
        %v4023 = vpop.f32.mrb[0].mxu0
        %v4024 = vadd.f32 %v3911, %v4023
        %4025 = vmatprep.mubr.bf16.mxu0 %v2247
        %4026 = vmatmul.mubr.bf16.gmra.mrb[0].mxu0 %v2246
        %v4027 = vpop.f32.mrb[0].mxu0
        %v4028 = vadd.f32 %v3915, %v4027
        %v4029 = vpop.f32.mrb[0].mxu0
        %v4030 = vadd.f32 %v3917, %v4029
        %v4031 = vpop.f32.mrb[0].mxu0
        %v4032 = vadd.f32 %v3919, %v4031
        %v4033 = vpop.f32.mrb[0].mxu0
        %v4034 = vadd.f32 %v3921, %v4033
        %4035 = vdwg.mxu0
        %4036 = vmatprep.subr.bf16.mxu0 %v3427
        %4037 = vmatpush1.bf16.msra.mxu0 %v3426
        %4038 = vmatprep.subr.bf16.mxu0 %v3431
        %4039 = vmatpush1.bf16.msra.mxu0 %v3430
        %4040 = vmatprep.subr.bf16.mxu0 %v3435
        %4041 = vmatpush1.bf16.msra.mxu0 %v3434
        %4042 = vmatprep.subr.bf16.mxu0 %v3439
        %4043 = vmatpush1.bf16.msra.mxu0 %v3438
        %4044 = vmatprep.subr.bf16.mxu0 %v3443
        %4045 = vmatpush1.bf16.msra.mxu0 %v3442
        %4046 = vmatprep.subr.bf16.mxu0 %v3447
        %4047 = vmatpush1.bf16.msra.mxu0 %v3446
        %4048 = vmatprep.subr.bf16.mxu0 %v3451
        %4049 = vmatpush1.bf16.msra.mxu0 %v3450
        %4050 = vmatprep.subr.bf16.mxu0 %v3455
        %4051 = vmatpush1.bf16.msra.mxu0 %v3454
        %4052 = vmatprep.subr.bf16.mxu0 %v3459
        %4053 = vmatpush1.bf16.msra.mxu0 %v3458
        %4054 = vmatprep.subr.bf16.mxu0 %v3463
        %4055 = vmatpush1.bf16.msra.mxu0 %v3462
        %4056 = vmatprep.subr.bf16.mxu0 %v3467
        %4057 = vmatpush1.bf16.msra.mxu0 %v3466
        %4058 = vmatprep.subr.bf16.mxu0 %v3471
        %4059 = vmatpush1.bf16.msra.mxu0 %v3470
        %4060 = vmatprep.subr.bf16.mxu0 %v3475
        %4061 = vmatpush1.bf16.msra.mxu0 %v3474
        %4062 = vmatprep.subr.bf16.mxu0 %v3479
        %4063 = vmatpush1.bf16.msra.mxu0 %v3478
        %4064 = vmatprep.subr.bf16.mxu0 %v3483
        %4065 = vmatpush1.bf16.msra.mxu0 %v3482
        %4066 = vmatprep.subr.bf16.mxu0 %v3487
        %4067 = vmatpush1.bf16.msra.mxu0 %v3486
        %4068 = vmatprep.mubr.bf16.mxu0 %v2193
        %4069 = vmatmul.mubr.bf16.gmra.mrb[0].mxu0 %v2192
        %v4070 = vpop.f32.mrb[0].mxu0
        %v4071 = vadd.f32 %v3958, %v4070
        %v4072 = vpop.f32.mrb[0].mxu0
        %v4073 = vadd.f32 %v3960, %v4072
        %v4074 = vpop.f32.mrb[0].mxu0
        %v4075 = vadd.f32 %v3962, %v4074
        %v4076 = vpop.f32.mrb[0].mxu0
        %v4077 = vadd.f32 %v3964, %v4076
        %4078 = vmatprep.mubr.bf16.mxu0 %v2201
        %4079 = vmatmul.mubr.bf16.gmra.mrb[0].mxu0 %v2200
        %v4080 = vpop.f32.mrb[0].mxu0
        %v4081 = vadd.f32 %v3968, %v4080
        %v4082 = vpop.f32.mrb[0].mxu0
        %v4083 = vadd.f32 %v3970, %v4082
        %v4084 = vpop.f32.mrb[0].mxu0
        %v4085 = vadd.f32 %v3972, %v4084
        %v4086 = vpop.f32.mrb[0].mxu0
        %v4087 = vadd.f32 %v3974, %v4086
        %4088 = vmatprep.mubr.bf16.mxu0 %v2209
        %4089 = vmatmul.mubr.bf16.gmra.mrb[0].mxu0 %v2208
        %v4090 = vpop.f32.mrb[0].mxu0
        %v4091 = vadd.f32 %v3978, %v4090
        %v4092 = vpop.f32.mrb[0].mxu0
        %v4093 = vadd.f32 %v3980, %v4092
        %v4094 = vpop.f32.mrb[0].mxu0
        %v4095 = vadd.f32 %v3982, %v4094
        %v4096 = vpop.f32.mrb[0].mxu0
        %v4097 = vadd.f32 %v3984, %v4096
        %4098 = vmatprep.mubr.bf16.mxu0 %v2217
        %4099 = vmatmul.mubr.bf16.gmra.mrb[0].mxu0 %v2216
        %v4100 = vpop.f32.mrb[0].mxu0
        %v4101 = vadd.f32 %v3988, %v4100
        %v4102 = vpop.f32.mrb[0].mxu0
        %v4103 = vadd.f32 %v3990, %v4102
        %v4104 = vpop.f32.mrb[0].mxu0
        %v4105 = vadd.f32 %v3992, %v4104
        %v4106 = vpop.f32.mrb[0].mxu0
        %v4107 = vadd.f32 %v3994, %v4106
        %4108 = vmatprep.mubr.bf16.mxu0 %v2225
        %4109 = vmatmul.mubr.bf16.gmra.mrb[0].mxu0 %v2224
        %v4110 = vpop.f32.mrb[0].mxu0
        %v4111 = vadd.f32 %v3998, %v4110
        %v4112 = vpop.f32.mrb[0].mxu0
        %v4113 = vadd.f32 %v4000, %v4112
        %v4114 = vpop.f32.mrb[0].mxu0
        %v4115 = vadd.f32 %v4002, %v4114
        %v4116 = vpop.f32.mrb[0].mxu0
        %v4117 = vadd.f32 %v4004, %v4116
        %4118 = vmatprep.mubr.bf16.mxu0 %v2233
        %4119 = vmatmul.mubr.bf16.gmra.mrb[0].mxu0 %v2232
        %v4120 = vpop.f32.mrb[0].mxu0
        %v4121 = vadd.f32 %v4008, %v4120
        %v4122 = vpop.f32.mrb[0].mxu0
        %v4123 = vadd.f32 %v4010, %v4122
        %v4124 = vpop.f32.mrb[0].mxu0
        %v4125 = vadd.f32 %v4012, %v4124
        %v4126 = vpop.f32.mrb[0].mxu0
        %v4127 = vadd.f32 %v4014, %v4126
        %4128 = vmatprep.mubr.bf16.mxu0 %v2241
        %4129 = vmatmul.mubr.bf16.gmra.mrb[0].mxu0 %v2240
        %v4130 = vpop.f32.mrb[0].mxu0
        %v4131 = vadd.f32 %v4018, %v4130
        %v4132 = vpop.f32.mrb[0].mxu0
        %v4133 = vadd.f32 %v4020, %v4132
        %v4134 = vpop.f32.mrb[0].mxu0
        %v4135 = vadd.f32 %v4022, %v4134
        %v4136 = vpop.f32.mrb[0].mxu0
        %v4137 = vadd.f32 %v4024, %v4136
        %4138 = vmatprep.mubr.bf16.mxu0 %v2249
        %4139 = vmatmul.mubr.bf16.gmra.mrb[0].mxu0 %v2248
        %v4140 = vpop.f32.mrb[0].mxu0
        %v4141 = vadd.f32 %v4028, %v4140
        %v4142 = vpop.f32.mrb[0].mxu0
        %v4143 = vadd.f32 %v4030, %v4142
        %v4144 = vpop.f32.mrb[0].mxu0
        %v4145 = vadd.f32 %v4032, %v4144
        %v4146 = vpop.f32.mrb[0].mxu0
        %v4147 = vadd.f32 %v4034, %v4146
        %4148 = vdwg.mxu0
        %4149 = vmatprep.subr.bf16.mxu0 %v3491
        %4150 = vmatpush1.bf16.msra.mxu0 %v3490
        %4151 = vmatprep.subr.bf16.mxu0 %v3495
        %4152 = vmatpush1.bf16.msra.mxu0 %v3494
        %4153 = vmatprep.subr.bf16.mxu0 %v3499
        %4154 = vmatpush1.bf16.msra.mxu0 %v3498
        %4155 = vmatprep.subr.bf16.mxu0 %v3503
        %4156 = vmatpush1.bf16.msra.mxu0 %v3502
        %4157 = vmatprep.subr.bf16.mxu0 %v3507
        %4158 = vmatpush1.bf16.msra.mxu0 %v3506
        %4159 = vmatprep.subr.bf16.mxu0 %v3511
        %4160 = vmatpush1.bf16.msra.mxu0 %v3510
        %4161 = vmatprep.subr.bf16.mxu0 %v3515
        %4162 = vmatpush1.bf16.msra.mxu0 %v3514
        %4163 = vmatprep.subr.bf16.mxu0 %v3519
        %4164 = vmatpush1.bf16.msra.mxu0 %v3518
        %4165 = vmatprep.subr.bf16.mxu0 %v3523
        %4166 = vmatpush1.bf16.msra.mxu0 %v3522
        %4167 = vmatprep.subr.bf16.mxu0 %v3527
        %4168 = vmatpush1.bf16.msra.mxu0 %v3526
        %4169 = vmatprep.subr.bf16.mxu0 %v3531
        %4170 = vmatpush1.bf16.msra.mxu0 %v3530
        %4171 = vmatprep.subr.bf16.mxu0 %v3535
        %4172 = vmatpush1.bf16.msra.mxu0 %v3534
        %4173 = vmatprep.subr.bf16.mxu0 %v3539
        %4174 = vmatpush1.bf16.msra.mxu0 %v3538
        %4175 = vmatprep.subr.bf16.mxu0 %v3543
        %4176 = vmatpush1.bf16.msra.mxu0 %v3542
        %4177 = vmatprep.subr.bf16.mxu0 %v3547
        %4178 = vmatpush1.bf16.msra.mxu0 %v3546
        %4179 = vmatprep.subr.bf16.mxu0 %v3551
        %4180 = vmatpush1.bf16.msra.mxu0 %v3550
        %4181 = vmatprep.mubr.bf16.mxu0 %v2195
        %4182 = vmatmul.mubr.bf16.gmra.mrb[0].mxu0 %v2194
        %v4183 = vpop.f32.mrb[0].mxu0
        %v4184 = vadd.f32 %v4071, %v4183
        %v4185 = vpop.f32.mrb[0].mxu0
        %v4186 = vadd.f32 %v4073, %v4185
        %v4187 = vpop.f32.mrb[0].mxu0
        %v4188 = vadd.f32 %v4075, %v4187
        %v4189 = vpop.f32.mrb[0].mxu0
        %v4190 = vadd.f32 %v4077, %v4189
        %4191 = vmatprep.mubr.bf16.mxu0 %v2203
        %4192 = vmatmul.mubr.bf16.gmra.mrb[0].mxu0 %v2202
        %v4193 = vpop.f32.mrb[0].mxu0
        %v4194 = vadd.f32 %v4081, %v4193
        %v4195 = vpop.f32.mrb[0].mxu0
        %v4196 = vadd.f32 %v4083, %v4195
        %v4197 = vpop.f32.mrb[0].mxu0
        %v4198 = vadd.f32 %v4085, %v4197
        %v4199 = vpop.f32.mrb[0].mxu0
        %v4200 = vadd.f32 %v4087, %v4199
        %4201 = vmatprep.mubr.bf16.mxu0 %v2211
        %4202 = vmatmul.mubr.bf16.gmra.mrb[0].mxu0 %v2210
        %v4203 = vpop.f32.mrb[0].mxu0
        %v4204 = vadd.f32 %v4091, %v4203
        %v4205 = vpop.f32.mrb[0].mxu0
        %v4206 = vadd.f32 %v4093, %v4205
        %v4207 = vpop.f32.mrb[0].mxu0
        %v4208 = vadd.f32 %v4095, %v4207
        %v4209 = vpop.f32.mrb[0].mxu0
        %v4210 = vadd.f32 %v4097, %v4209
        %4211 = vmatprep.mubr.bf16.mxu0 %v2219
        %4212 = vmatmul.mubr.bf16.gmra.mrb[0].mxu0 %v2218
        %v4213 = vpop.f32.mrb[0].mxu0
        %v4214 = vadd.f32 %v4101, %v4213
        %v4215 = vpop.f32.mrb[0].mxu0
        %v4216 = vadd.f32 %v4103, %v4215
        %v4217 = vpop.f32.mrb[0].mxu0
        %v4218 = vadd.f32 %v4105, %v4217
        %v4219 = vpop.f32.mrb[0].mxu0
        %v4220 = vadd.f32 %v4107, %v4219
        %4221 = vmatprep.mubr.bf16.mxu0 %v2227
        %4222 = vmatmul.mubr.bf16.gmra.mrb[0].mxu0 %v2226
        %v4223 = vpop.f32.mrb[0].mxu0
        %v4224 = vadd.f32 %v4111, %v4223
        %v4225 = vpop.f32.mrb[0].mxu0
        %v4226 = vadd.f32 %v4113, %v4225
        %v4227 = vpop.f32.mrb[0].mxu0
        %v4228 = vadd.f32 %v4115, %v4227
        %v4229 = vpop.f32.mrb[0].mxu0
        %v4230 = vadd.f32 %v4117, %v4229
        %4231 = vmatprep.mubr.bf16.mxu0 %v2235
        %4232 = vmatmul.mubr.bf16.gmra.mrb[0].mxu0 %v2234
        %v4233 = vpop.f32.mrb[0].mxu0
        %v4234 = vadd.f32 %v4121, %v4233
        %v4235 = vpop.f32.mrb[0].mxu0
        %v4236 = vadd.f32 %v4123, %v4235
        %v4237 = vpop.f32.mrb[0].mxu0
        %v4238 = vadd.f32 %v4125, %v4237
        %v4239 = vpop.f32.mrb[0].mxu0
        %v4240 = vadd.f32 %v4127, %v4239
        %4241 = vmatprep.mubr.bf16.mxu0 %v2243
        %4242 = vmatmul.mubr.bf16.gmra.mrb[0].mxu0 %v2242
        %v4243 = vpop.f32.mrb[0].mxu0
        %v4244 = vadd.f32 %v4131, %v4243
        %v4245 = vpop.f32.mrb[0].mxu0
        %v4246 = vadd.f32 %v4133, %v4245
        %v4247 = vpop.f32.mrb[0].mxu0
        %v4248 = vadd.f32 %v4135, %v4247
        %v4249 = vpop.f32.mrb[0].mxu0
        %v4250 = vadd.f32 %v4137, %v4249
        %4251 = vmatprep.mubr.bf16.mxu0 %v2251
        %4252 = vmatmul.mubr.bf16.gmra.mrb[0].mxu0 %v2250
        %v4253 = vpop.f32.mrb[0].mxu0
        %v4254 = vadd.f32 %v4141, %v4253
        %v4255 = vpop.f32.mrb[0].mxu0
        %v4256 = vadd.f32 %v4143, %v4255
        %v4257 = vpop.f32.mrb[0].mxu0
        %v4258 = vadd.f32 %v4145, %v4257
        %v4259 = vpop.f32.mrb[0].mxu0
        %v4260 = vadd.f32 %v4147, %v4259
        %4261 = vdwg.mxu0
        %4262 = vmatprep.subr.bf16.mxu0 %v3301
        %4263 = vmatpush1.bf16.msra.mxu0 %v3300
        %4264 = vmatprep.subr.bf16.mxu0 %v3305
        %4265 = vmatpush1.bf16.msra.mxu0 %v3304
        %4266 = vmatprep.subr.bf16.mxu0 %v3309
        %4267 = vmatpush1.bf16.msra.mxu0 %v3308
        %4268 = vmatprep.subr.bf16.mxu0 %v3313
        %4269 = vmatpush1.bf16.msra.mxu0 %v3312
        %4270 = vmatprep.subr.bf16.mxu0 %v3317
        %4271 = vmatpush1.bf16.msra.mxu0 %v3316
        %4272 = vmatprep.subr.bf16.mxu0 %v3321
        %4273 = vmatpush1.bf16.msra.mxu0 %v3320
        %4274 = vmatprep.subr.bf16.mxu0 %v3325
        %4275 = vmatpush1.bf16.msra.mxu0 %v3324
        %4276 = vmatprep.subr.bf16.mxu0 %v3329
        %4277 = vmatpush1.bf16.msra.mxu0 %v3328
        %4278 = vmatprep.subr.bf16.mxu0 %v3333
        %4279 = vmatpush1.bf16.msra.mxu0 %v3332
        %4280 = vmatprep.subr.bf16.mxu0 %v3337
        %4281 = vmatpush1.bf16.msra.mxu0 %v3336
        %4282 = vmatprep.subr.bf16.mxu0 %v3341
        %4283 = vmatpush1.bf16.msra.mxu0 %v3340
        %4284 = vmatprep.subr.bf16.mxu0 %v3345
        %4285 = vmatpush1.bf16.msra.mxu0 %v3344
        %4286 = vmatprep.subr.bf16.mxu0 %v3349
        %4287 = vmatpush1.bf16.msra.mxu0 %v3348
        %4288 = vmatprep.subr.bf16.mxu0 %v3353
        %4289 = vmatpush1.bf16.msra.mxu0 %v3352
        %4290 = vmatprep.subr.bf16.mxu0 %v3357
        %4291 = vmatpush1.bf16.msra.mxu0 %v3356
        %4292 = vmatprep.subr.bf16.mxu0 %v3361
        %4293 = vmatpush1.bf16.msra.mxu0 %v3360
        %4294 = vmatprep.mubr.bf16.mxu0 %v2189
        %4295 = vmatmul.mubr.bf16.gmra.mrb[0].mxu0 %v2188
        %v4296 = vpop.f32.mrb[0].mxu0
        %v4297 = vadd.f32 %v2521, %v4296
        %v4298 = vpop.f32.mrb[0].mxu0
        %v4299 = vadd.f32 %v2525, %v4298
        %v4300 = vpop.f32.mrb[0].mxu0
        %v4301 = vadd.f32 %v2521, %v4300
        %v4302 = vpop.f32.mrb[0].mxu0
        %v4303 = vadd.f32 %v2525, %v4302
        %4304 = vmatprep.mubr.bf16.mxu0 %v2197
        %4305 = vmatmul.mubr.bf16.gmra.mrb[0].mxu0 %v2196
        %v4306 = vpop.f32.mrb[0].mxu0
        %v4307 = vadd.f32 %v2521, %v4306
        %v4308 = vpop.f32.mrb[0].mxu0
        %v4309 = vadd.f32 %v2525, %v4308
        %v4310 = vpop.f32.mrb[0].mxu0
        %v4311 = vadd.f32 %v2521, %v4310
        %v4312 = vpop.f32.mrb[0].mxu0
        %v4313 = vadd.f32 %v2525, %v4312
        %4314 = vmatprep.mubr.bf16.mxu0 %v2205
        %4315 = vmatmul.mubr.bf16.gmra.mrb[0].mxu0 %v2204
        %v4316 = vpop.f32.mrb[0].mxu0
        %v4317 = vadd.f32 %v2521, %v4316
        %v4318 = vpop.f32.mrb[0].mxu0
        %v4319 = vadd.f32 %v2525, %v4318
        %v4320 = vpop.f32.mrb[0].mxu0
        %v4321 = vadd.f32 %v2521, %v4320
        %v4322 = vpop.f32.mrb[0].mxu0
        %v4323 = vadd.f32 %v2525, %v4322
        %4324 = vmatprep.mubr.bf16.mxu0 %v2213
        %4325 = vmatmul.mubr.bf16.gmra.mrb[0].mxu0 %v2212
        %v4326 = vpop.f32.mrb[0].mxu0
        %v4327 = vadd.f32 %v2521, %v4326
        %v4328 = vpop.f32.mrb[0].mxu0
        %v4329 = vadd.f32 %v2525, %v4328
        %v4330 = vpop.f32.mrb[0].mxu0
        %v4331 = vadd.f32 %v2521, %v4330
        %v4332 = vpop.f32.mrb[0].mxu0
        %v4333 = vadd.f32 %v2525, %v4332
        %4334 = vmatprep.mubr.bf16.mxu0 %v2221
        %4335 = vmatmul.mubr.bf16.gmra.mrb[0].mxu0 %v2220
        %v4336 = vpop.f32.mrb[0].mxu0
        %v4337 = vadd.f32 %v2521, %v4336
        %v4338 = vpop.f32.mrb[0].mxu0
        %v4339 = vadd.f32 %v2525, %v4338
        %v4340 = vpop.f32.mrb[0].mxu0
        %v4341 = vadd.f32 %v2521, %v4340
        %v4342 = vpop.f32.mrb[0].mxu0
        %v4343 = vadd.f32 %v2525, %v4342
        %4344 = vmatprep.mubr.bf16.mxu0 %v2229
        %4345 = vmatmul.mubr.bf16.gmra.mrb[0].mxu0 %v2228
        %v4346 = vpop.f32.mrb[0].mxu0
        %v4347 = vadd.f32 %v2521, %v4346
        %v4348 = vpop.f32.mrb[0].mxu0
        %v4349 = vadd.f32 %v2525, %v4348
        %v4350 = vpop.f32.mrb[0].mxu0
        %v4351 = vadd.f32 %v2521, %v4350
        %v4352 = vpop.f32.mrb[0].mxu0
        %v4353 = vadd.f32 %v2525, %v4352
        %4354 = vmatprep.mubr.bf16.mxu0 %v2237
        %4355 = vmatmul.mubr.bf16.gmra.mrb[0].mxu0 %v2236
        %v4356 = vpop.f32.mrb[0].mxu0
        %v4357 = vadd.f32 %v2521, %v4356
        %v4358 = vpop.f32.mrb[0].mxu0
        %v4359 = vadd.f32 %v2525, %v4358
        %v4360 = vpop.f32.mrb[0].mxu0
        %v4361 = vadd.f32 %v2521, %v4360
        %v4362 = vpop.f32.mrb[0].mxu0
        %v4363 = vadd.f32 %v2525, %v4362
        %4364 = vmatprep.mubr.bf16.mxu0 %v2245
        %4365 = vmatmul.mubr.bf16.gmra.mrb[0].mxu0 %v2244
        %v4366 = vpop.f32.mrb[0].mxu0
        %v4367 = vadd.f32 %v2521, %v4366
        %v4368 = vpop.f32.mrb[0].mxu0
        %v4369 = vadd.f32 %v2525, %v4368
        %v4370 = vpop.f32.mrb[0].mxu0
        %v4371 = vadd.f32 %v2521, %v4370
        %v4372 = vpop.f32.mrb[0].mxu0
        %v4373 = vadd.f32 %v2525, %v4372
        %4374 = vdwg.mxu0
        %4375 = vmatprep.subr.bf16.mxu0 %v3365
        %4376 = vmatpush1.bf16.msra.mxu0 %v3364
        %4377 = vmatprep.subr.bf16.mxu0 %v3369
        %4378 = vmatpush1.bf16.msra.mxu0 %v3368
        %4379 = vmatprep.subr.bf16.mxu0 %v3373
        %4380 = vmatpush1.bf16.msra.mxu0 %v3372
        %4381 = vmatprep.subr.bf16.mxu0 %v3377
        %4382 = vmatpush1.bf16.msra.mxu0 %v3376
        %4383 = vmatprep.subr.bf16.mxu0 %v3381
        %4384 = vmatpush1.bf16.msra.mxu0 %v3380
        %4385 = vmatprep.subr.bf16.mxu0 %v3385
        %4386 = vmatpush1.bf16.msra.mxu0 %v3384
        %4387 = vmatprep.subr.bf16.mxu0 %v3389
        %4388 = vmatpush1.bf16.msra.mxu0 %v3388
        %4389 = vmatprep.subr.bf16.mxu0 %v3393
        %4390 = vmatpush1.bf16.msra.mxu0 %v3392
        %4391 = vmatprep.subr.bf16.mxu0 %v3397
        %4392 = vmatpush1.bf16.msra.mxu0 %v3396
        %4393 = vmatprep.subr.bf16.mxu0 %v3401
        %4394 = vmatpush1.bf16.msra.mxu0 %v3400
        %4395 = vmatprep.subr.bf16.mxu0 %v3405
        %4396 = vmatpush1.bf16.msra.mxu0 %v3404
        %4397 = vmatprep.subr.bf16.mxu0 %v3409
        %4398 = vmatpush1.bf16.msra.mxu0 %v3408
        %4399 = vmatprep.subr.bf16.mxu0 %v3413
        %4400 = vmatpush1.bf16.msra.mxu0 %v3412
        %4401 = vmatprep.subr.bf16.mxu0 %v3417
        %4402 = vmatpush1.bf16.msra.mxu0 %v3416
        %4403 = vmatprep.subr.bf16.mxu0 %v3421
        %4404 = vmatpush1.bf16.msra.mxu0 %v3420
        %4405 = vmatprep.subr.bf16.mxu0 %v3425
        %4406 = vmatpush1.bf16.msra.mxu0 %v3424
        %4407 = vmatprep.mubr.bf16.mxu0 %v2191
        %4408 = vmatmul.mubr.bf16.gmra.mrb[0].mxu0 %v2190
        %v4409 = vpop.f32.mrb[0].mxu0
        %v4410 = vadd.f32 %v4297, %v4409
        %v4411 = vpop.f32.mrb[0].mxu0
        %v4412 = vadd.f32 %v4299, %v4411
        %v4413 = vpop.f32.mrb[0].mxu0
        %v4414 = vadd.f32 %v4301, %v4413
        %v4415 = vpop.f32.mrb[0].mxu0
        %v4416 = vadd.f32 %v4303, %v4415
        %4417 = vmatprep.mubr.bf16.mxu0 %v2199
        %4418 = vmatmul.mubr.bf16.gmra.mrb[0].mxu0 %v2198
        %v4419 = vpop.f32.mrb[0].mxu0
        %v4420 = vadd.f32 %v4307, %v4419
        %v4421 = vpop.f32.mrb[0].mxu0
        %v4422 = vadd.f32 %v4309, %v4421
        %v4423 = vpop.f32.mrb[0].mxu0
        %v4424 = vadd.f32 %v4311, %v4423
        %v4425 = vpop.f32.mrb[0].mxu0
        %v4426 = vadd.f32 %v4313, %v4425
        %4427 = vmatprep.mubr.bf16.mxu0 %v2207
        %4428 = vmatmul.mubr.bf16.gmra.mrb[0].mxu0 %v2206
        %v4429 = vpop.f32.mrb[0].mxu0
        %v4430 = vadd.f32 %v4317, %v4429
        %v4431 = vpop.f32.mrb[0].mxu0
        %v4432 = vadd.f32 %v4319, %v4431
        %v4433 = vpop.f32.mrb[0].mxu0
        %v4434 = vadd.f32 %v4321, %v4433
        %v4435 = vpop.f32.mrb[0].mxu0
        %v4436 = vadd.f32 %v4323, %v4435
        %4437 = vmatprep.mubr.bf16.mxu0 %v2215
        %4438 = vmatmul.mubr.bf16.gmra.mrb[0].mxu0 %v2214
        %v4439 = vpop.f32.mrb[0].mxu0
        %v4440 = vadd.f32 %v4327, %v4439
        %v4441 = vpop.f32.mrb[0].mxu0
        %v4442 = vadd.f32 %v4329, %v4441
        %v4443 = vpop.f32.mrb[0].mxu0
        %v4444 = vadd.f32 %v4331, %v4443
        %v4445 = vpop.f32.mrb[0].mxu0
        %v4446 = vadd.f32 %v4333, %v4445
        %4447 = vmatprep.mubr.bf16.mxu0 %v2223
        %4448 = vmatmul.mubr.bf16.gmra.mrb[0].mxu0 %v2222
        %v4449 = vpop.f32.mrb[0].mxu0
        %v4450 = vadd.f32 %v4337, %v4449
        %v4451 = vpop.f32.mrb[0].mxu0
        %v4452 = vadd.f32 %v4339, %v4451
        %v4453 = vpop.f32.mrb[0].mxu0
        %v4454 = vadd.f32 %v4341, %v4453
        %v4455 = vpop.f32.mrb[0].mxu0
        %v4456 = vadd.f32 %v4343, %v4455
        %4457 = vmatprep.mubr.bf16.mxu0 %v2231
        %4458 = vmatmul.mubr.bf16.gmra.mrb[0].mxu0 %v2230
        %v4459 = vpop.f32.mrb[0].mxu0
        %v4460 = vadd.f32 %v4347, %v4459
        %v4461 = vpop.f32.mrb[0].mxu0
        %v4462 = vadd.f32 %v4349, %v4461
        %v4463 = vpop.f32.mrb[0].mxu0
        %v4464 = vadd.f32 %v4351, %v4463
        %v4465 = vpop.f32.mrb[0].mxu0
        %v4466 = vadd.f32 %v4353, %v4465
        %4467 = vmatprep.mubr.bf16.mxu0 %v2239
        %4468 = vmatmul.mubr.bf16.gmra.mrb[0].mxu0 %v2238
        %v4469 = vpop.f32.mrb[0].mxu0
        %v4470 = vadd.f32 %v4357, %v4469
        %v4471 = vpop.f32.mrb[0].mxu0
        %v4472 = vadd.f32 %v4359, %v4471
        %v4473 = vpop.f32.mrb[0].mxu0
        %v4474 = vadd.f32 %v4361, %v4473
        %v4475 = vpop.f32.mrb[0].mxu0
        %v4476 = vadd.f32 %v4363, %v4475
        %4477 = vmatprep.mubr.bf16.mxu0 %v2247
        %4478 = vmatmul.mubr.bf16.gmra.mrb[0].mxu0 %v2246
        %v4479 = vpop.f32.mrb[0].mxu0
        %v4480 = vadd.f32 %v4367, %v4479
        %v4481 = vpop.f32.mrb[0].mxu0
        %v4482 = vadd.f32 %v4369, %v4481
        %v4483 = vpop.f32.mrb[0].mxu0
        %v4484 = vadd.f32 %v4371, %v4483
        %v4485 = vpop.f32.mrb[0].mxu0
        %v4486 = vadd.f32 %v4373, %v4485
        %4487 = vdwg.mxu0
        %4488 = vmatprep.subr.bf16.mxu0 %v3429
        %4489 = vmatpush1.bf16.msra.mxu0 %v3428
        %4490 = vmatprep.subr.bf16.mxu0 %v3433
        %4491 = vmatpush1.bf16.msra.mxu0 %v3432
        %4492 = vmatprep.subr.bf16.mxu0 %v3437
        %4493 = vmatpush1.bf16.msra.mxu0 %v3436
        %4494 = vmatprep.subr.bf16.mxu0 %v3441
        %4495 = vmatpush1.bf16.msra.mxu0 %v3440
        %4496 = vmatprep.subr.bf16.mxu0 %v3445
        %4497 = vmatpush1.bf16.msra.mxu0 %v3444
        %4498 = vmatprep.subr.bf16.mxu0 %v3449
        %4499 = vmatpush1.bf16.msra.mxu0 %v3448
        %4500 = vmatprep.subr.bf16.mxu0 %v3453
        %4501 = vmatpush1.bf16.msra.mxu0 %v3452
        %4502 = vmatprep.subr.bf16.mxu0 %v3457
        %4503 = vmatpush1.bf16.msra.mxu0 %v3456
        %4504 = vmatprep.subr.bf16.mxu0 %v3461
        %4505 = vmatpush1.bf16.msra.mxu0 %v3460
        %4506 = vmatprep.subr.bf16.mxu0 %v3465
        %4507 = vmatpush1.bf16.msra.mxu0 %v3464
        %4508 = vmatprep.subr.bf16.mxu0 %v3469
        %4509 = vmatpush1.bf16.msra.mxu0 %v3468
        %4510 = vmatprep.subr.bf16.mxu0 %v3473
        %4511 = vmatpush1.bf16.msra.mxu0 %v3472
        %4512 = vmatprep.subr.bf16.mxu0 %v3477
        %4513 = vmatpush1.bf16.msra.mxu0 %v3476
        %4514 = vmatprep.subr.bf16.mxu0 %v3481
        %4515 = vmatpush1.bf16.msra.mxu0 %v3480
        %4516 = vmatprep.subr.bf16.mxu0 %v3485
        %4517 = vmatpush1.bf16.msra.mxu0 %v3484
        %4518 = vmatprep.subr.bf16.mxu0 %v3489
        %4519 = vmatpush1.bf16.msra.mxu0 %v3488
        %4520 = vmatprep.mubr.bf16.mxu0 %v2193
        %4521 = vmatmul.mubr.bf16.gmra.mrb[0].mxu0 %v2192
        %v4522 = vpop.f32.mrb[0].mxu0
        %v4523 = vadd.f32 %v4410, %v4522
        %v4524 = vpop.f32.mrb[0].mxu0
        %v4525 = vadd.f32 %v4412, %v4524
        %v4526 = vpop.f32.mrb[0].mxu0
        %v4527 = vadd.f32 %v4414, %v4526
        %v4528 = vpop.f32.mrb[0].mxu0
        %v4529 = vadd.f32 %v4416, %v4528
        %4530 = vmatprep.mubr.bf16.mxu0 %v2201
        %4531 = vmatmul.mubr.bf16.gmra.mrb[0].mxu0 %v2200
        %v4532 = vpop.f32.mrb[0].mxu0
        %v4533 = vadd.f32 %v4420, %v4532
        %v4534 = vpop.f32.mrb[0].mxu0
        %v4535 = vadd.f32 %v4422, %v4534
        %v4536 = vpop.f32.mrb[0].mxu0
        %v4537 = vadd.f32 %v4424, %v4536
        %v4538 = vpop.f32.mrb[0].mxu0
        %v4539 = vadd.f32 %v4426, %v4538
        %4540 = vmatprep.mubr.bf16.mxu0 %v2209
        %4541 = vmatmul.mubr.bf16.gmra.mrb[0].mxu0 %v2208
        %v4542 = vpop.f32.mrb[0].mxu0
        %v4543 = vadd.f32 %v4430, %v4542
        %v4544 = vpop.f32.mrb[0].mxu0
        %v4545 = vadd.f32 %v4432, %v4544
        %v4546 = vpop.f32.mrb[0].mxu0
        %v4547 = vadd.f32 %v4434, %v4546
        %v4548 = vpop.f32.mrb[0].mxu0
        %v4549 = vadd.f32 %v4436, %v4548
        %4550 = vmatprep.mubr.bf16.mxu0 %v2217
        %4551 = vmatmul.mubr.bf16.gmra.mrb[0].mxu0 %v2216
        %v4552 = vpop.f32.mrb[0].mxu0
        %v4553 = vadd.f32 %v4440, %v4552
        %v4554 = vpop.f32.mrb[0].mxu0
        %v4555 = vadd.f32 %v4442, %v4554
        %v4556 = vpop.f32.mrb[0].mxu0
        %v4557 = vadd.f32 %v4444, %v4556
        %v4558 = vpop.f32.mrb[0].mxu0
        %v4559 = vadd.f32 %v4446, %v4558
        %4560 = vmatprep.mubr.bf16.mxu0 %v2225
        %4561 = vmatmul.mubr.bf16.gmra.mrb[0].mxu0 %v2224
        %v4562 = vpop.f32.mrb[0].mxu0
        %v4563 = vadd.f32 %v4450, %v4562
        %v4564 = vpop.f32.mrb[0].mxu0
        %v4565 = vadd.f32 %v4452, %v4564
        %v4566 = vpop.f32.mrb[0].mxu0
        %v4567 = vadd.f32 %v4454, %v4566
        %v4568 = vpop.f32.mrb[0].mxu0
        %v4569 = vadd.f32 %v4456, %v4568
        %4570 = vmatprep.mubr.bf16.mxu0 %v2233
        %4571 = vmatmul.mubr.bf16.gmra.mrb[0].mxu0 %v2232
        %v4572 = vpop.f32.mrb[0].mxu0
        %v4573 = vadd.f32 %v4460, %v4572
        %v4574 = vpop.f32.mrb[0].mxu0
        %v4575 = vadd.f32 %v4462, %v4574
        %v4576 = vpop.f32.mrb[0].mxu0
        %v4577 = vadd.f32 %v4464, %v4576
        %v4578 = vpop.f32.mrb[0].mxu0
        %v4579 = vadd.f32 %v4466, %v4578
        %4580 = vmatprep.mubr.bf16.mxu0 %v2241
        %4581 = vmatmul.mubr.bf16.gmra.mrb[0].mxu0 %v2240
        %v4582 = vpop.f32.mrb[0].mxu0
        %v4583 = vadd.f32 %v4470, %v4582
        %v4584 = vpop.f32.mrb[0].mxu0
        %v4585 = vadd.f32 %v4472, %v4584
        %v4586 = vpop.f32.mrb[0].mxu0
        %v4587 = vadd.f32 %v4474, %v4586
        %v4588 = vpop.f32.mrb[0].mxu0
        %v4589 = vadd.f32 %v4476, %v4588
        %4590 = vmatprep.mubr.bf16.mxu0 %v2249
        %4591 = vmatmul.mubr.bf16.gmra.mrb[0].mxu0 %v2248
        %v4592 = vpop.f32.mrb[0].mxu0
        %v4593 = vadd.f32 %v4480, %v4592
        %v4594 = vpop.f32.mrb[0].mxu0
        %v4595 = vadd.f32 %v4482, %v4594
        %v4596 = vpop.f32.mrb[0].mxu0
        %v4597 = vadd.f32 %v4484, %v4596
        %v4598 = vpop.f32.mrb[0].mxu0
        %v4599 = vadd.f32 %v4486, %v4598
        %4600 = vdwg.mxu0
        %4601 = vmatprep.subr.bf16.mxu0 %v3493
        %4602 = vmatpush1.bf16.msra.mxu0 %v3492
        %4603 = vmatprep.subr.bf16.mxu0 %v3497
        %4604 = vmatpush1.bf16.msra.mxu0 %v3496
        %4605 = vmatprep.subr.bf16.mxu0 %v3501
        %4606 = vmatpush1.bf16.msra.mxu0 %v3500
        %4607 = vmatprep.subr.bf16.mxu0 %v3505
        %4608 = vmatpush1.bf16.msra.mxu0 %v3504
        %4609 = vmatprep.subr.bf16.mxu0 %v3509
        %4610 = vmatpush1.bf16.msra.mxu0 %v3508
        %4611 = vmatprep.subr.bf16.mxu0 %v3513
        %4612 = vmatpush1.bf16.msra.mxu0 %v3512
        %4613 = vmatprep.subr.bf16.mxu0 %v3517
        %4614 = vmatpush1.bf16.msra.mxu0 %v3516
        %4615 = vmatprep.subr.bf16.mxu0 %v3521
        %4616 = vmatpush1.bf16.msra.mxu0 %v3520
        %4617 = vmatprep.subr.bf16.mxu0 %v3525
        %4618 = vmatpush1.bf16.msra.mxu0 %v3524
        %4619 = vmatprep.subr.bf16.mxu0 %v3529
        %4620 = vmatpush1.bf16.msra.mxu0 %v3528
        %4621 = vmatprep.subr.bf16.mxu0 %v3533
        %4622 = vmatpush1.bf16.msra.mxu0 %v3532
        %4623 = vmatprep.subr.bf16.mxu0 %v3537
        %4624 = vmatpush1.bf16.msra.mxu0 %v3536
        %4625 = vmatprep.subr.bf16.mxu0 %v3541
        %4626 = vmatpush1.bf16.msra.mxu0 %v3540
        %4627 = vmatprep.subr.bf16.mxu0 %v3545
        %4628 = vmatpush1.bf16.msra.mxu0 %v3544
        %4629 = vmatprep.subr.bf16.mxu0 %v3549
        %4630 = vmatpush1.bf16.msra.mxu0 %v3548
        %4631 = vmatprep.subr.bf16.mxu0 %v3553
        %4632 = vmatpush1.bf16.msra.mxu0 %v3552
        %4633 = vmatprep.mubr.bf16.mxu0 %v2195
        %4634 = vmatmul.mubr.bf16.gmra.mrb[0].mxu0 %v2194
        %v4635 = vpop.f32.mrb[0].mxu0
        %v4636 = vadd.f32 %v4523, %v4635
        %v4637 = vpop.f32.mrb[0].mxu0
        %v4638 = vadd.f32 %v4525, %v4637
        %v4639 = vpop.f32.mrb[0].mxu0
        %v4640 = vadd.f32 %v4527, %v4639
        %v4641 = vpop.f32.mrb[0].mxu0
        %v4642 = vadd.f32 %v4529, %v4641
        %4643 = vmatprep.mubr.bf16.mxu0 %v2203
        %4644 = vmatmul.mubr.bf16.gmra.mrb[0].mxu0 %v2202
        %v4645 = vpop.f32.mrb[0].mxu0
        %v4646 = vadd.f32 %v4533, %v4645
        %v4647 = vpop.f32.mrb[0].mxu0
        %v4648 = vadd.f32 %v4535, %v4647
        %v4649 = vpop.f32.mrb[0].mxu0
        %v4650 = vadd.f32 %v4537, %v4649
        %v4651 = vpop.f32.mrb[0].mxu0
        %v4652 = vadd.f32 %v4539, %v4651
        %4653 = vmatprep.mubr.bf16.mxu0 %v2211
        %4654 = vmatmul.mubr.bf16.gmra.mrb[0].mxu0 %v2210
        %v4655 = vpop.f32.mrb[0].mxu0
        %v4656 = vadd.f32 %v4543, %v4655
        %v4657 = vpop.f32.mrb[0].mxu0
        %v4658 = vadd.f32 %v4545, %v4657
        %v4659 = vpop.f32.mrb[0].mxu0
        %v4660 = vadd.f32 %v4547, %v4659
        %v4661 = vpop.f32.mrb[0].mxu0
        %v4662 = vadd.f32 %v4549, %v4661
        %4663 = vmatprep.mubr.bf16.mxu0 %v2219
        %4664 = vmatmul.mubr.bf16.gmra.mrb[0].mxu0 %v2218
        %v4665 = vpop.f32.mrb[0].mxu0
        %v4666 = vadd.f32 %v4553, %v4665
        %v4667 = vpop.f32.mrb[0].mxu0
        %v4668 = vadd.f32 %v4555, %v4667
        %v4669 = vpop.f32.mrb[0].mxu0
        %v4670 = vadd.f32 %v4557, %v4669
        %v4671 = vpop.f32.mrb[0].mxu0
        %v4672 = vadd.f32 %v4559, %v4671
        %4673 = vmatprep.mubr.bf16.mxu0 %v2227
        %4674 = vmatmul.mubr.bf16.gmra.mrb[0].mxu0 %v2226
        %v4675 = vpop.f32.mrb[0].mxu0
        %v4676 = vadd.f32 %v4563, %v4675
        %v4677 = vpop.f32.mrb[0].mxu0
        %v4678 = vadd.f32 %v4565, %v4677
        %v4679 = vpop.f32.mrb[0].mxu0
        %v4680 = vadd.f32 %v4567, %v4679
        %v4681 = vpop.f32.mrb[0].mxu0
        %v4682 = vadd.f32 %v4569, %v4681
        %4683 = vmatprep.mubr.bf16.mxu0 %v2235
        %4684 = vmatmul.mubr.bf16.gmra.mrb[0].mxu0 %v2234
        %v4685 = vpop.f32.mrb[0].mxu0
        %v4686 = vadd.f32 %v4573, %v4685
        %v4687 = vpop.f32.mrb[0].mxu0
        %v4688 = vadd.f32 %v4575, %v4687
        %v4689 = vpop.f32.mrb[0].mxu0
        %v4690 = vadd.f32 %v4577, %v4689
        %v4691 = vpop.f32.mrb[0].mxu0
        %v4692 = vadd.f32 %v4579, %v4691
        %4693 = vmatprep.mubr.bf16.mxu0 %v2243
        %4694 = vmatmul.mubr.bf16.gmra.mrb[0].mxu0 %v2242
        %v4695 = vpop.f32.mrb[0].mxu0
        %v4696 = vadd.f32 %v4583, %v4695
        %v4697 = vpop.f32.mrb[0].mxu0
        %v4698 = vadd.f32 %v4585, %v4697
        %v4699 = vpop.f32.mrb[0].mxu0
        %v4700 = vadd.f32 %v4587, %v4699
        %v4701 = vpop.f32.mrb[0].mxu0
        %v4702 = vadd.f32 %v4589, %v4701
        %4703 = vmatprep.mubr.bf16.mxu0 %v2251
        %4704 = vmatmul.mubr.bf16.gmra.mrb[0].mxu0 %v2250
        %v4705 = vpop.f32.mrb[0].mxu0
        %v4706 = vadd.f32 %v4593, %v4705
        %v4707 = vpop.f32.mrb[0].mxu0
        %v4708 = vadd.f32 %v4595, %v4707
        %v4709 = vpop.f32.mrb[0].mxu0
        %v4710 = vadd.f32 %v4597, %v4709
        %v4711 = vpop.f32.mrb[0].mxu0
        %v4712 = vadd.f32 %v4599, %v4711
        %4713 = vdwg.mxu0
        %vm4714 = vcmp.gt.f32.partialorder %v4184, 0.0
        %vm4715 = vcmp.gt.f32.partialorder %v4186, 0.0
        %vm4716 = vcmp.gt.f32.partialorder %v4636, 0.0
        %vm4717 = vcmp.gt.f32.partialorder %v4638, 0.0
        %vm4718 = vcmp.gt.f32.partialorder %v4188, 0.0
        %vm4719 = vcmp.gt.f32.partialorder %v4190, 0.0
        %vm4720 = vcmp.gt.f32.partialorder %v4640, 0.0
        %vm4721 = vcmp.gt.f32.partialorder %v4642, 0.0
        %vm4722 = vcmp.gt.f32.partialorder %v4194, 0.0
        %vm4723 = vcmp.gt.f32.partialorder %v4196, 0.0
        %vm4724 = vcmp.gt.f32.partialorder %v4646, 0.0
        %vm4725 = vcmp.gt.f32.partialorder %v4648, 0.0
        %vm4726 = vcmp.gt.f32.partialorder %v4198, 0.0
        %vm4727 = vcmp.gt.f32.partialorder %v4200, 0.0
        %vm4728 = vcmp.gt.f32.partialorder %v4650, 0.0
        %vm4729 = vcmp.gt.f32.partialorder %v4652, 0.0
        %vm4730 = vcmp.gt.f32.partialorder %v4204, 0.0
        %vm4731 = vcmp.gt.f32.partialorder %v4206, 0.0
        %vm4732 = vcmp.gt.f32.partialorder %v4656, 0.0
        %vm4733 = vcmp.gt.f32.partialorder %v4658, 0.0
        %vm4734 = vcmp.gt.f32.partialorder %v4208, 0.0
        %vm4735 = vcmp.gt.f32.partialorder %v4210, 0.0
        %vm4736 = vcmp.gt.f32.partialorder %v4660, 0.0
        %vm4737 = vcmp.gt.f32.partialorder %v4662, 0.0
        %vm4738 = vcmp.gt.f32.partialorder %v4214, 0.0
        %vm4739 = vcmp.gt.f32.partialorder %v4216, 0.0
        %vm4740 = vcmp.gt.f32.partialorder %v4666, 0.0
        %vm4741 = vcmp.gt.f32.partialorder %v4668, 0.0
        %vm4742 = vcmp.gt.f32.partialorder %v4218, 0.0
        %vm4743 = vcmp.gt.f32.partialorder %v4220, 0.0
        %vm4744 = vcmp.gt.f32.partialorder %v4670, 0.0
        %vm4745 = vcmp.gt.f32.partialorder %v4672, 0.0
        %vm4746 = vcmp.gt.f32.partialorder %v4224, 0.0
        %vm4747 = vcmp.gt.f32.partialorder %v4226, 0.0
        %vm4748 = vcmp.gt.f32.partialorder %v4676, 0.0
        %vm4749 = vcmp.gt.f32.partialorder %v4678, 0.0
        %vm4750 = vcmp.gt.f32.partialorder %v4228, 0.0
        %vm4751 = vcmp.gt.f32.partialorder %v4230, 0.0
        %vm4752 = vcmp.gt.f32.partialorder %v4680, 0.0
        %vm4753 = vcmp.gt.f32.partialorder %v4682, 0.0
        %vm4754 = vcmp.gt.f32.partialorder %v4234, 0.0
        %vm4755 = vcmp.gt.f32.partialorder %v4236, 0.0
        %vm4756 = vcmp.gt.f32.partialorder %v4686, 0.0
        %vm4757 = vcmp.gt.f32.partialorder %v4688, 0.0
        %vm4758 = vcmp.gt.f32.partialorder %v4238, 0.0
        %vm4759 = vcmp.gt.f32.partialorder %v4240, 0.0
        %vm4760 = vcmp.gt.f32.partialorder %v4690, 0.0
        %vm4761 = vcmp.gt.f32.partialorder %v4692, 0.0
        %vm4762 = vcmp.gt.f32.partialorder %v4244, 0.0
        %vm4763 = vcmp.gt.f32.partialorder %v4246, 0.0
        %vm4764 = vcmp.gt.f32.partialorder %v4696, 0.0
        %vm4765 = vcmp.gt.f32.partialorder %v4698, 0.0
        %vm4766 = vcmp.gt.f32.partialorder %v4248, 0.0
        %vm4767 = vcmp.gt.f32.partialorder %v4250, 0.0
        %vm4768 = vcmp.gt.f32.partialorder %v4700, 0.0
        %vm4769 = vcmp.gt.f32.partialorder %v4702, 0.0
        %vm4770 = vcmp.gt.f32.partialorder %v4254, 0.0
        %vm4771 = vcmp.gt.f32.partialorder %v4256, 0.0
        %vm4772 = vcmp.gt.f32.partialorder %v4706, 0.0
        %vm4773 = vcmp.gt.f32.partialorder %v4708, 0.0
        %vm4774 = vcmp.gt.f32.partialorder %v4258, 0.0
        %vm4775 = vcmp.gt.f32.partialorder %v4260, 0.0
        %vm4776 = vcmp.gt.f32.partialorder %v4710, 0.0
        %vm4777 = vcmp.gt.f32.partialorder %v4712, 0.0
        %v4778 = vmul.f32 %v4184, 0.01
        %v4779 = vmul.f32 %v4186, 0.01
        %v4780 = vmul.f32 %v4636, 0.01
        %v4781 = vmul.f32 %v4638, 0.01
        %v4782 = vmul.f32 %v4188, 0.01
        %v4783 = vmul.f32 %v4190, 0.01
        %v4784 = vmul.f32 %v4640, 0.01
        %v4785 = vmul.f32 %v4642, 0.01
        %v4786 = vmul.f32 %v4194, 0.01
        %v4787 = vmul.f32 %v4196, 0.01
        %v4788 = vmul.f32 %v4646, 0.01
        %v4789 = vmul.f32 %v4648, 0.01
        %v4790 = vmul.f32 %v4198, 0.01
        %v4791 = vmul.f32 %v4200, 0.01
        %v4792 = vmul.f32 %v4650, 0.01
        %v4793 = vmul.f32 %v4652, 0.01
        %v4794 = vmul.f32 %v4204, 0.01
        %v4795 = vmul.f32 %v4206, 0.01
        %v4796 = vmul.f32 %v4656, 0.01
        %v4797 = vmul.f32 %v4658, 0.01
        %v4798 = vmul.f32 %v4208, 0.01
        %v4799 = vmul.f32 %v4210, 0.01
        %v4800 = vmul.f32 %v4660, 0.01
        %v4801 = vmul.f32 %v4662, 0.01
        %v4802 = vmul.f32 %v4214, 0.01
        %v4803 = vmul.f32 %v4216, 0.01
        %v4804 = vmul.f32 %v4666, 0.01
        %v4805 = vmul.f32 %v4668, 0.01
        %v4806 = vmul.f32 %v4218, 0.01
        %v4807 = vmul.f32 %v4220, 0.01
        %v4808 = vmul.f32 %v4670, 0.01
        %v4809 = vmul.f32 %v4672, 0.01
        %v4810 = vmul.f32 %v4224, 0.01
        %v4811 = vmul.f32 %v4226, 0.01
        %v4812 = vmul.f32 %v4676, 0.01
        %v4813 = vmul.f32 %v4678, 0.01
        %v4814 = vmul.f32 %v4228, 0.01
        %v4815 = vmul.f32 %v4230, 0.01
        %v4816 = vmul.f32 %v4680, 0.01
        %v4817 = vmul.f32 %v4682, 0.01
        %v4818 = vmul.f32 %v4234, 0.01
        %v4819 = vmul.f32 %v4236, 0.01
        %v4820 = vmul.f32 %v4686, 0.01
        %v4821 = vmul.f32 %v4688, 0.01
        %v4822 = vmul.f32 %v4238, 0.01
        %v4823 = vmul.f32 %v4240, 0.01
        %v4824 = vmul.f32 %v4690, 0.01
        %v4825 = vmul.f32 %v4692, 0.01
        %v4826 = vmul.f32 %v4244, 0.01
        %v4827 = vmul.f32 %v4246, 0.01
        %v4828 = vmul.f32 %v4696, 0.01
        %v4829 = vmul.f32 %v4698, 0.01
        %v4830 = vmul.f32 %v4248, 0.01
        %v4831 = vmul.f32 %v4250, 0.01
        %v4832 = vmul.f32 %v4700, 0.01
        %v4833 = vmul.f32 %v4702, 0.01
        %v4834 = vmul.f32 %v4254, 0.01
        %v4835 = vmul.f32 %v4256, 0.01
        %v4836 = vmul.f32 %v4706, 0.01
        %v4837 = vmul.f32 %v4708, 0.01
        %v4838 = vmul.f32 %v4258, 0.01
        %v4839 = vmul.f32 %v4260, 0.01
        %v4840 = vmul.f32 %v4710, 0.01
        %v4841 = vmul.f32 %v4712, 0.01
        %v4842 = vsel %vm4714, %v4184, %v4778
        %v4843 = vsel %vm4715, %v4186, %v4779
        %v4844 = vsel %vm4716, %v4636, %v4780
        %v4845 = vsel %vm4717, %v4638, %v4781
        %v4846 = vsel %vm4718, %v4188, %v4782
        %v4847 = vsel %vm4719, %v4190, %v4783
        %v4848 = vsel %vm4720, %v4640, %v4784
        %v4849 = vsel %vm4721, %v4642, %v4785
        %v4850 = vsel %vm4722, %v4194, %v4786
        %v4851 = vsel %vm4723, %v4196, %v4787
        %v4852 = vsel %vm4724, %v4646, %v4788
        %v4853 = vsel %vm4725, %v4648, %v4789
        %v4854 = vsel %vm4726, %v4198, %v4790
        %v4855 = vsel %vm4727, %v4200, %v4791
        %v4856 = vsel %vm4728, %v4650, %v4792
        %v4857 = vsel %vm4729, %v4652, %v4793
        %v4858 = vsel %vm4730, %v4204, %v4794
        %v4859 = vsel %vm4731, %v4206, %v4795
        %v4860 = vsel %vm4732, %v4656, %v4796
        %v4861 = vsel %vm4733, %v4658, %v4797
        %v4862 = vsel %vm4734, %v4208, %v4798
        %v4863 = vsel %vm4735, %v4210, %v4799
        %v4864 = vsel %vm4736, %v4660, %v4800
        %v4865 = vsel %vm4737, %v4662, %v4801
        %v4866 = vsel %vm4738, %v4214, %v4802
        %v4867 = vsel %vm4739, %v4216, %v4803
        %v4868 = vsel %vm4740, %v4666, %v4804
        %v4869 = vsel %vm4741, %v4668, %v4805
        %v4870 = vsel %vm4742, %v4218, %v4806
        %v4871 = vsel %vm4743, %v4220, %v4807
        %v4872 = vsel %vm4744, %v4670, %v4808
        %v4873 = vsel %vm4745, %v4672, %v4809
        %v4874 = vsel %vm4746, %v4224, %v4810
        %v4875 = vsel %vm4747, %v4226, %v4811
        %v4876 = vsel %vm4748, %v4676, %v4812
        %v4877 = vsel %vm4749, %v4678, %v4813
        %v4878 = vsel %vm4750, %v4228, %v4814
        %v4879 = vsel %vm4751, %v4230, %v4815
        %v4880 = vsel %vm4752, %v4680, %v4816
        %v4881 = vsel %vm4753, %v4682, %v4817
        %v4882 = vsel %vm4754, %v4234, %v4818
        %v4883 = vsel %vm4755, %v4236, %v4819
        %v4884 = vsel %vm4756, %v4686, %v4820
        %v4885 = vsel %vm4757, %v4688, %v4821
        %v4886 = vsel %vm4758, %v4238, %v4822
        %v4887 = vsel %vm4759, %v4240, %v4823
        %v4888 = vsel %vm4760, %v4690, %v4824
        %v4889 = vsel %vm4761, %v4692, %v4825
        %v4890 = vsel %vm4762, %v4244, %v4826
        %v4891 = vsel %vm4763, %v4246, %v4827
        %v4892 = vsel %vm4764, %v4696, %v4828
        %v4893 = vsel %vm4765, %v4698, %v4829
        %v4894 = vsel %vm4766, %v4248, %v4830
        %v4895 = vsel %vm4767, %v4250, %v4831
        %v4896 = vsel %vm4768, %v4700, %v4832
        %v4897 = vsel %vm4769, %v4702, %v4833
        %v4898 = vsel %vm4770, %v4254, %v4834
        %v4899 = vsel %vm4771, %v4256, %v4835
        %v4900 = vsel %vm4772, %v4706, %v4836
        %v4901 = vsel %vm4773, %v4708, %v4837
        %v4902 = vsel %vm4774, %v4258, %v4838
        %v4903 = vsel %vm4775, %v4260, %v4839
        %v4904 = vsel %vm4776, %v4710, %v4840
        %v4905 = vsel %vm4777, %v4712, %v4841
        %v4906 = vpack.c.bf16 %v4846, %v4842
        %v4907 = vpack.c.bf16 %v4847, %v4843
        %v4908 = vpack.c.bf16 %v4848, %v4844
        %v4909 = vpack.c.bf16 %v4849, %v4845
        %v4910 = vpack.c.bf16 %v4854, %v4850
        %v4911 = vpack.c.bf16 %v4855, %v4851
        %v4912 = vpack.c.bf16 %v4856, %v4852
        %v4913 = vpack.c.bf16 %v4857, %v4853
        %v4914 = vpack.c.bf16 %v4862, %v4858
        %v4915 = vpack.c.bf16 %v4863, %v4859
        %v4916 = vpack.c.bf16 %v4864, %v4860
        %v4917 = vpack.c.bf16 %v4865, %v4861
        %v4918 = vpack.c.bf16 %v4870, %v4866
        %v4919 = vpack.c.bf16 %v4871, %v4867
        %v4920 = vpack.c.bf16 %v4872, %v4868
        %v4921 = vpack.c.bf16 %v4873, %v4869
        %v4922 = vpack.c.bf16 %v4878, %v4874
        %v4923 = vpack.c.bf16 %v4879, %v4875
        %v4924 = vpack.c.bf16 %v4880, %v4876
        %v4925 = vpack.c.bf16 %v4881, %v4877
        %v4926 = vpack.c.bf16 %v4886, %v4882
        %v4927 = vpack.c.bf16 %v4887, %v4883
        %v4928 = vpack.c.bf16 %v4888, %v4884
        %v4929 = vpack.c.bf16 %v4889, %v4885
        %v4930 = vpack.c.bf16 %v4894, %v4890
        %v4931 = vpack.c.bf16 %v4895, %v4891
        %v4932 = vpack.c.bf16 %v4896, %v4892
        %v4933 = vpack.c.bf16 %v4897, %v4893
        %v4934 = vpack.c.bf16 %v4902, %v4898
        %v4935 = vpack.c.bf16 %v4903, %v4899
        %v4936 = vpack.c.bf16 %v4904, %v4900
        %v4937 = vpack.c.bf16 %v4905, %v4901
        %v4938 = vld [vmem:[#allocation10] sm:$0xff]
        %v4939 = vld [vmem:[#allocation10 + $0x8] sm:$0xff]
        %v4940 = vld [vmem:[#allocation10 + $0x10] sm:$0xff]
        %v4941 = vld [vmem:[#allocation10 + $0x18] sm:$0xff]
        %v4942 = vld [vmem:[#allocation10 + $0x20] sm:$0xff]
        %v4943 = vld [vmem:[#allocation10 + $0x28] sm:$0xff]
        %v4944 = vld [vmem:[#allocation10 + $0x30] sm:$0xff]
        %v4945 = vld [vmem:[#allocation10 + $0x38] sm:$0xff]
        %v4946 = vld [vmem:[#allocation10 + $0x40] sm:$0xff]
        %v4947 = vld [vmem:[#allocation10 + $0x48] sm:$0xff]
        %v4948 = vld [vmem:[#allocation10 + $0x50] sm:$0xff]
        %v4949 = vld [vmem:[#allocation10 + $0x58] sm:$0xff]
        %v4950 = vld [vmem:[#allocation10 + $0x60] sm:$0xff]
        %v4951 = vld [vmem:[#allocation10 + $0x68] sm:$0xff]
        %v4952 = vld [vmem:[#allocation10 + $0x70] sm:$0xff]
        %v4953 = vld [vmem:[#allocation10 + $0x78] sm:$0xff]
        %v4954 = vld [vmem:[#allocation10 + $0x80] sm:$0xff]
        %v4955 = vld [vmem:[#allocation10 + $0x88] sm:$0xff]
        %v4956 = vld [vmem:[#allocation10 + $0x90] sm:$0xff]
        %v4957 = vld [vmem:[#allocation10 + $0x98] sm:$0xff]
        %v4958 = vld [vmem:[#allocation10 + $0xa0] sm:$0xff]
        %v4959 = vld [vmem:[#allocation10 + $0xa8] sm:$0xff]
        %v4960 = vld [vmem:[#allocation10 + $0xb0] sm:$0xff]
        %v4961 = vld [vmem:[#allocation10 + $0xb8] sm:$0xff]
        %v4962 = vld [vmem:[#allocation10 + $0xc0] sm:$0xff]
        %v4963 = vld [vmem:[#allocation10 + $0xc8] sm:$0xff]
        %v4964 = vld [vmem:[#allocation10 + $0xd0] sm:$0xff]
        %v4965 = vld [vmem:[#allocation10 + $0xd8] sm:$0xff]
        %v4966 = vld [vmem:[#allocation10 + $0xe0] sm:$0xff]
        %v4967 = vld [vmem:[#allocation10 + $0xe8] sm:$0xff]
        %v4968 = vld [vmem:[#allocation10 + $0xf0] sm:$0xff]
        %v4969 = vld [vmem:[#allocation10 + $0xf8] sm:$0xff]
        %v4970 = vld [vmem:[#allocation10 + $0x100] sm:$0xff]
        %v4971 = vld [vmem:[#allocation10 + $0x108] sm:$0xff]
        %v4972 = vld [vmem:[#allocation10 + $0x110] sm:$0xff]
        %v4973 = vld [vmem:[#allocation10 + $0x118] sm:$0xff]
        %v4974 = vld [vmem:[#allocation10 + $0x120] sm:$0xff]
        %v4975 = vld [vmem:[#allocation10 + $0x128] sm:$0xff]
        %v4976 = vld [vmem:[#allocation10 + $0x130] sm:$0xff]
        %v4977 = vld [vmem:[#allocation10 + $0x138] sm:$0xff]
        %v4978 = vld [vmem:[#allocation10 + $0x140] sm:$0xff]
        %v4979 = vld [vmem:[#allocation10 + $0x148] sm:$0xff]
        %v4980 = vld [vmem:[#allocation10 + $0x150] sm:$0xff]
        %v4981 = vld [vmem:[#allocation10 + $0x158] sm:$0xff]
        %v4982 = vld [vmem:[#allocation10 + $0x160] sm:$0xff]
        %v4983 = vld [vmem:[#allocation10 + $0x168] sm:$0xff]
        %v4984 = vld [vmem:[#allocation10 + $0x170] sm:$0xff]
        %v4985 = vld [vmem:[#allocation10 + $0x178] sm:$0xff]
        %v4986 = vld [vmem:[#allocation10 + $0x180] sm:$0xff]
        %v4987 = vld [vmem:[#allocation10 + $0x188] sm:$0xff]
        %v4988 = vld [vmem:[#allocation10 + $0x190] sm:$0xff]
        %v4989 = vld [vmem:[#allocation10 + $0x198] sm:$0xff]
        %v4990 = vld [vmem:[#allocation10 + $0x1a0] sm:$0xff]
        %v4991 = vld [vmem:[#allocation10 + $0x1a8] sm:$0xff]
        %v4992 = vld [vmem:[#allocation10 + $0x1b0] sm:$0xff]
        %v4993 = vld [vmem:[#allocation10 + $0x1b8] sm:$0xff]
        %v4994 = vld [vmem:[#allocation10 + $0x1c0] sm:$0xff]
        %v4995 = vld [vmem:[#allocation10 + $0x1c8] sm:$0xff]
        %v4996 = vld [vmem:[#allocation10 + $0x1d0] sm:$0xff]
        %v4997 = vld [vmem:[#allocation10 + $0x1d8] sm:$0xff]
        %v4998 = vld [vmem:[#allocation10 + $0x1e0] sm:$0xff]
        %v4999 = vld [vmem:[#allocation10 + $0x1e8] sm:$0xff]
        %v5000 = vld [vmem:[#allocation10 + $0x1f0] sm:$0xff]
        %v5001 = vld [vmem:[#allocation10 + $0x1f8] sm:$0xff]
        %v5002 = vld [vmem:[%s6] sm:$0x3]
        %v5004 = vlaneseq
        %v5005 = vshrl.u32 %v5004, 7
        %v5006 = vsub.s32 0, %v5005
        %v5007 = vrot.slane %v5002, %v5006
        %v5008 = vlaneseq
        %v5009 = vshrl.u32 %v5008, 7
        %v5010 = vsub.s32 1, %v5009
        %v5011 = vrot.slane %v5002, %v5010
        %v5078 = vunpack.c.l.b16 %v4938
        %v5079 = vunpack.c.h.b16 %v4938
        %v5080 = vunpack.c.l.b16 %v4939
        %v5081 = vunpack.c.h.b16 %v4939
        %v5082 = vunpack.c.l.b16 %v4940
        %v5083 = vunpack.c.h.b16 %v4940
        %v5084 = vunpack.c.l.b16 %v4941
        %v5085 = vunpack.c.h.b16 %v4941
        %v5086 = vunpack.c.l.b16 %v4942
        %v5087 = vunpack.c.h.b16 %v4942
        %v5088 = vunpack.c.l.b16 %v4943
        %v5089 = vunpack.c.h.b16 %v4943
        %v5090 = vunpack.c.l.b16 %v4944
        %v5091 = vunpack.c.h.b16 %v4944
        %v5092 = vunpack.c.l.b16 %v4945
        %v5093 = vunpack.c.h.b16 %v4945
        %v5094 = vunpack.c.l.b16 %v4946
        %v5095 = vunpack.c.h.b16 %v4946
        %v5096 = vunpack.c.l.b16 %v4947
        %v5097 = vunpack.c.h.b16 %v4947
        %v5098 = vunpack.c.l.b16 %v4948
        %v5099 = vunpack.c.h.b16 %v4948
        %v5100 = vunpack.c.l.b16 %v4949
        %v5101 = vunpack.c.h.b16 %v4949
        %v5102 = vunpack.c.l.b16 %v4950
        %v5103 = vunpack.c.h.b16 %v4950
        %v5104 = vunpack.c.l.b16 %v4951
        %v5105 = vunpack.c.h.b16 %v4951
        %v5106 = vunpack.c.l.b16 %v4952
        %v5107 = vunpack.c.h.b16 %v4952
        %v5108 = vunpack.c.l.b16 %v4953
        %v5109 = vunpack.c.h.b16 %v4953
        %v5110 = vunpack.c.l.b16 %v4954
        %v5111 = vunpack.c.h.b16 %v4954
        %v5112 = vunpack.c.l.b16 %v4955
        %v5113 = vunpack.c.h.b16 %v4955
        %v5114 = vunpack.c.l.b16 %v4956
        %v5115 = vunpack.c.h.b16 %v4956
        %v5116 = vunpack.c.l.b16 %v4957
        %v5117 = vunpack.c.h.b16 %v4957
        %v5118 = vunpack.c.l.b16 %v4958
        %v5119 = vunpack.c.h.b16 %v4958
        %v5120 = vunpack.c.l.b16 %v4959
        %v5121 = vunpack.c.h.b16 %v4959
        %v5122 = vunpack.c.l.b16 %v4960
        %v5123 = vunpack.c.h.b16 %v4960
        %v5124 = vunpack.c.l.b16 %v4961
        %v5125 = vunpack.c.h.b16 %v4961
        %v5126 = vunpack.c.l.b16 %v4962
        %v5127 = vunpack.c.h.b16 %v4962
        %v5128 = vunpack.c.l.b16 %v4963
        %v5129 = vunpack.c.h.b16 %v4963
        %v5130 = vunpack.c.l.b16 %v4964
        %v5131 = vunpack.c.h.b16 %v4964
        %v5132 = vunpack.c.l.b16 %v4965
        %v5133 = vunpack.c.h.b16 %v4965
        %v5134 = vunpack.c.l.b16 %v4966
        %v5135 = vunpack.c.h.b16 %v4966
        %v5136 = vunpack.c.l.b16 %v4967
        %v5137 = vunpack.c.h.b16 %v4967
        %v5138 = vunpack.c.l.b16 %v4968
        %v5139 = vunpack.c.h.b16 %v4968
        %v5140 = vunpack.c.l.b16 %v4969
        %v5141 = vunpack.c.h.b16 %v4969
        %v5142 = vunpack.c.l.b16 %v4970
        %v5143 = vunpack.c.h.b16 %v4970
        %v5144 = vunpack.c.l.b16 %v4971
        %v5145 = vunpack.c.h.b16 %v4971
        %v5146 = vunpack.c.l.b16 %v4972
        %v5147 = vunpack.c.h.b16 %v4972
        %v5148 = vunpack.c.l.b16 %v4973
        %v5149 = vunpack.c.h.b16 %v4973
        %v5150 = vunpack.c.l.b16 %v4974
        %v5151 = vunpack.c.h.b16 %v4974
        %v5152 = vunpack.c.l.b16 %v4975
        %v5153 = vunpack.c.h.b16 %v4975
        %v5154 = vunpack.c.l.b16 %v4976
        %v5155 = vunpack.c.h.b16 %v4976
        %v5156 = vunpack.c.l.b16 %v4977
        %v5157 = vunpack.c.h.b16 %v4977
        %v5158 = vunpack.c.l.b16 %v4978
        %v5159 = vunpack.c.h.b16 %v4978
        %v5160 = vunpack.c.l.b16 %v4979
        %v5161 = vunpack.c.h.b16 %v4979
        %v5162 = vunpack.c.l.b16 %v4980
        %v5163 = vunpack.c.h.b16 %v4980
        %v5164 = vunpack.c.l.b16 %v4981
        %v5165 = vunpack.c.h.b16 %v4981
        %v5166 = vunpack.c.l.b16 %v4982
        %v5167 = vunpack.c.h.b16 %v4982
        %v5168 = vunpack.c.l.b16 %v4983
        %v5169 = vunpack.c.h.b16 %v4983
        %v5170 = vunpack.c.l.b16 %v4984
        %v5171 = vunpack.c.h.b16 %v4984
        %v5172 = vunpack.c.l.b16 %v4985
        %v5173 = vunpack.c.h.b16 %v4985
        %v5174 = vunpack.c.l.b16 %v4986
        %v5175 = vunpack.c.h.b16 %v4986
        %v5176 = vunpack.c.l.b16 %v4987
        %v5177 = vunpack.c.h.b16 %v4987
        %v5178 = vunpack.c.l.b16 %v4988
        %v5179 = vunpack.c.h.b16 %v4988
        %v5180 = vunpack.c.l.b16 %v4989
        %v5181 = vunpack.c.h.b16 %v4989
        %v5182 = vunpack.c.l.b16 %v4990
        %v5183 = vunpack.c.h.b16 %v4990
        %v5184 = vunpack.c.l.b16 %v4991
        %v5185 = vunpack.c.h.b16 %v4991
        %v5186 = vunpack.c.l.b16 %v4992
        %v5187 = vunpack.c.h.b16 %v4992
        %v5188 = vunpack.c.l.b16 %v4993
        %v5189 = vunpack.c.h.b16 %v4993
        %v5190 = vunpack.c.l.b16 %v4994
        %v5191 = vunpack.c.h.b16 %v4994
        %v5192 = vunpack.c.l.b16 %v4995
        %v5193 = vunpack.c.h.b16 %v4995
        %v5194 = vunpack.c.l.b16 %v4996
        %v5195 = vunpack.c.h.b16 %v4996
        %v5196 = vunpack.c.l.b16 %v4997
        %v5197 = vunpack.c.h.b16 %v4997
        %v5198 = vunpack.c.l.b16 %v4998
        %v5199 = vunpack.c.h.b16 %v4998
        %v5200 = vunpack.c.l.b16 %v4999
        %v5201 = vunpack.c.h.b16 %v4999
        %v5202 = vunpack.c.l.b16 %v5000
        %v5203 = vunpack.c.h.b16 %v5000
        %v5204 = vunpack.c.l.b16 %v5001
        %v5205 = vunpack.c.h.b16 %v5001
        %v5206 = vpack.c.b16 %v5080, %v5078
        %v5207 = vpack.c.b16 %v5081, %v5079
        %v5208 = vpack.c.b16 %v5084, %v5082
        %v5209 = vpack.c.b16 %v5085, %v5083
        %v5210 = vpack.c.b16 %v5088, %v5086
        %v5211 = vpack.c.b16 %v5089, %v5087
        %v5212 = vpack.c.b16 %v5092, %v5090
        %v5213 = vpack.c.b16 %v5093, %v5091
        %v5214 = vpack.c.b16 %v5096, %v5094
        %v5215 = vpack.c.b16 %v5097, %v5095
        %v5216 = vpack.c.b16 %v5100, %v5098
        %v5217 = vpack.c.b16 %v5101, %v5099
        %v5218 = vpack.c.b16 %v5104, %v5102
        %v5219 = vpack.c.b16 %v5105, %v5103
        %v5220 = vpack.c.b16 %v5108, %v5106
        %v5221 = vpack.c.b16 %v5109, %v5107
        %v5222 = vpack.c.b16 %v5112, %v5110
        %v5223 = vpack.c.b16 %v5113, %v5111
        %v5224 = vpack.c.b16 %v5116, %v5114
        %v5225 = vpack.c.b16 %v5117, %v5115
        %v5226 = vpack.c.b16 %v5120, %v5118
        %v5227 = vpack.c.b16 %v5121, %v5119
        %v5228 = vpack.c.b16 %v5124, %v5122
        %v5229 = vpack.c.b16 %v5125, %v5123
        %v5230 = vpack.c.b16 %v5128, %v5126
        %v5231 = vpack.c.b16 %v5129, %v5127
        %v5232 = vpack.c.b16 %v5132, %v5130
        %v5233 = vpack.c.b16 %v5133, %v5131
        %v5234 = vpack.c.b16 %v5136, %v5134
        %v5235 = vpack.c.b16 %v5137, %v5135
        %v5236 = vpack.c.b16 %v5140, %v5138
        %v5237 = vpack.c.b16 %v5141, %v5139
        %v5238 = vpack.c.b16 %v5144, %v5142
        %v5239 = vpack.c.b16 %v5145, %v5143
        %v5240 = vpack.c.b16 %v5148, %v5146
        %v5241 = vpack.c.b16 %v5149, %v5147
        %v5242 = vpack.c.b16 %v5152, %v5150
        %v5243 = vpack.c.b16 %v5153, %v5151
        %v5244 = vpack.c.b16 %v5156, %v5154
        %v5245 = vpack.c.b16 %v5157, %v5155
        %v5246 = vpack.c.b16 %v5160, %v5158
        %v5247 = vpack.c.b16 %v5161, %v5159
        %v5248 = vpack.c.b16 %v5164, %v5162
        %v5249 = vpack.c.b16 %v5165, %v5163
        %v5250 = vpack.c.b16 %v5168, %v5166
        %v5251 = vpack.c.b16 %v5169, %v5167
        %v5252 = vpack.c.b16 %v5172, %v5170
        %v5253 = vpack.c.b16 %v5173, %v5171
        %v5254 = vpack.c.b16 %v5176, %v5174
        %v5255 = vpack.c.b16 %v5177, %v5175
        %v5256 = vpack.c.b16 %v5180, %v5178
        %v5257 = vpack.c.b16 %v5181, %v5179
        %v5258 = vpack.c.b16 %v5184, %v5182
        %v5259 = vpack.c.b16 %v5185, %v5183
        %v5260 = vpack.c.b16 %v5188, %v5186
        %v5261 = vpack.c.b16 %v5189, %v5187
        %v5262 = vpack.c.b16 %v5192, %v5190
        %v5263 = vpack.c.b16 %v5193, %v5191
        %v5264 = vpack.c.b16 %v5196, %v5194
        %v5265 = vpack.c.b16 %v5197, %v5195
        %v5266 = vpack.c.b16 %v5200, %v5198
        %v5267 = vpack.c.b16 %v5201, %v5199
        %v5268 = vpack.c.b16 %v5204, %v5202
        %v5269 = vpack.c.b16 %v5205, %v5203
        %5334 = vmatprep.subr.bf16.mxu0 %v5207
        %5335 = vmatpush1.bf16.msra.mxu0 %v5206
        %5336 = vmatprep.subr.bf16.mxu0 %v5209
        %5337 = vmatpush1.bf16.msra.mxu0 %v5208
        %5338 = vmatprep.subr.bf16.mxu0 %v5211
        %5339 = vmatpush1.bf16.msra.mxu0 %v5210
        %5340 = vmatprep.subr.bf16.mxu0 %v5213
        %5341 = vmatpush1.bf16.msra.mxu0 %v5212
        %5342 = vmatprep.subr.bf16.mxu0 %v5215
        %5343 = vmatpush1.bf16.msra.mxu0 %v5214
        %5344 = vmatprep.subr.bf16.mxu0 %v5217
        %5345 = vmatpush1.bf16.msra.mxu0 %v5216
        %5346 = vmatprep.subr.bf16.mxu0 %v5219
        %5347 = vmatpush1.bf16.msra.mxu0 %v5218
        %5348 = vmatprep.subr.bf16.mxu0 %v5221
        %5349 = vmatpush1.bf16.msra.mxu0 %v5220
        %5350 = vmatprep.subr.bf16.mxu0 %v5223
        %5351 = vmatpush1.bf16.msra.mxu0 %v5222
        %5352 = vmatprep.subr.bf16.mxu0 %v5225
        %5353 = vmatpush1.bf16.msra.mxu0 %v5224
        %5354 = vmatprep.subr.bf16.mxu0 %v5227
        %5355 = vmatpush1.bf16.msra.mxu0 %v5226
        %5356 = vmatprep.subr.bf16.mxu0 %v5229
        %5357 = vmatpush1.bf16.msra.mxu0 %v5228
        %5358 = vmatprep.subr.bf16.mxu0 %v5231
        %5359 = vmatpush1.bf16.msra.mxu0 %v5230
        %5360 = vmatprep.subr.bf16.mxu0 %v5233
        %5361 = vmatpush1.bf16.msra.mxu0 %v5232
        %5362 = vmatprep.subr.bf16.mxu0 %v5235
        %5363 = vmatpush1.bf16.msra.mxu0 %v5234
        %5364 = vmatprep.subr.bf16.mxu0 %v5237
        %5365 = vmatpush1.bf16.msra.mxu0 %v5236
        %5366 = vmatprep.mubr.bf16.mxu0 %v4907
        %5367 = vmatmul.mubr.bf16.gmra.mrb[0].mxu0 %v4906
        %v5368 = vpop.f32.mrb[0].mxu0
        %v5369 = vadd.f32 %v5007, %v5368
        %v5370 = vpop.f32.mrb[0].mxu0
        %v5371 = vadd.f32 %v5011, %v5370
        %v5372 = vpop.f32.mrb[0].mxu0
        %v5373 = vadd.f32 %v5007, %v5372
        %v5374 = vpop.f32.mrb[0].mxu0
        %v5375 = vadd.f32 %v5011, %v5374
        %5376 = vmatprep.mubr.bf16.mxu0 %v4911
        %5377 = vmatmul.mubr.bf16.gmra.mrb[0].mxu0 %v4910
        %v5378 = vpop.f32.mrb[0].mxu0
        %v5379 = vadd.f32 %v5007, %v5378
        %v5380 = vpop.f32.mrb[0].mxu0
        %v5381 = vadd.f32 %v5011, %v5380
        %v5382 = vpop.f32.mrb[0].mxu0
        %v5383 = vadd.f32 %v5007, %v5382
        %v5384 = vpop.f32.mrb[0].mxu0
        %v5385 = vadd.f32 %v5011, %v5384
        %5386 = vmatprep.mubr.bf16.mxu0 %v4915
        %5387 = vmatmul.mubr.bf16.gmra.mrb[0].mxu0 %v4914
        %v5388 = vpop.f32.mrb[0].mxu0
        %v5389 = vadd.f32 %v5007, %v5388
        %v5390 = vpop.f32.mrb[0].mxu0
        %v5391 = vadd.f32 %v5011, %v5390
        %v5392 = vpop.f32.mrb[0].mxu0
        %v5393 = vadd.f32 %v5007, %v5392
        %v5394 = vpop.f32.mrb[0].mxu0
        %v5395 = vadd.f32 %v5011, %v5394
        %5396 = vmatprep.mubr.bf16.mxu0 %v4919
        %5397 = vmatmul.mubr.bf16.gmra.mrb[0].mxu0 %v4918
        %v5398 = vpop.f32.mrb[0].mxu0
        %v5399 = vadd.f32 %v5007, %v5398
        %v5400 = vpop.f32.mrb[0].mxu0
        %v5401 = vadd.f32 %v5011, %v5400
        %v5402 = vpop.f32.mrb[0].mxu0
        %v5403 = vadd.f32 %v5007, %v5402
        %v5404 = vpop.f32.mrb[0].mxu0
        %v5405 = vadd.f32 %v5011, %v5404
        %5406 = vmatprep.mubr.bf16.mxu0 %v4923
        %5407 = vmatmul.mubr.bf16.gmra.mrb[0].mxu0 %v4922
        %v5408 = vpop.f32.mrb[0].mxu0
        %v5409 = vadd.f32 %v5007, %v5408
        %v5410 = vpop.f32.mrb[0].mxu0
        %v5411 = vadd.f32 %v5011, %v5410
        %v5412 = vpop.f32.mrb[0].mxu0
        %v5413 = vadd.f32 %v5007, %v5412
        %v5414 = vpop.f32.mrb[0].mxu0
        %v5415 = vadd.f32 %v5011, %v5414
        %5416 = vmatprep.mubr.bf16.mxu0 %v4927
        %5417 = vmatmul.mubr.bf16.gmra.mrb[0].mxu0 %v4926
        %v5418 = vpop.f32.mrb[0].mxu0
        %v5419 = vadd.f32 %v5007, %v5418
        %v5420 = vpop.f32.mrb[0].mxu0
        %v5421 = vadd.f32 %v5011, %v5420
        %v5422 = vpop.f32.mrb[0].mxu0
        %v5423 = vadd.f32 %v5007, %v5422
        %v5424 = vpop.f32.mrb[0].mxu0
        %v5425 = vadd.f32 %v5011, %v5424
        %5426 = vmatprep.mubr.bf16.mxu0 %v4931
        %5427 = vmatmul.mubr.bf16.gmra.mrb[0].mxu0 %v4930
        %v5428 = vpop.f32.mrb[0].mxu0
        %v5429 = vadd.f32 %v5007, %v5428
        %v5430 = vpop.f32.mrb[0].mxu0
        %v5431 = vadd.f32 %v5011, %v5430
        %v5432 = vpop.f32.mrb[0].mxu0
        %v5433 = vadd.f32 %v5007, %v5432
        %v5434 = vpop.f32.mrb[0].mxu0
        %v5435 = vadd.f32 %v5011, %v5434
        %5436 = vmatprep.mubr.bf16.mxu0 %v4935
        %5437 = vmatmul.mubr.bf16.gmra.mrb[0].mxu0 %v4934
        %v5438 = vpop.f32.mrb[0].mxu0
        %v5439 = vadd.f32 %v5007, %v5438
        %v5440 = vpop.f32.mrb[0].mxu0
        %v5441 = vadd.f32 %v5011, %v5440
        %v5442 = vpop.f32.mrb[0].mxu0
        %v5443 = vadd.f32 %v5007, %v5442
        %v5444 = vpop.f32.mrb[0].mxu0
        %v5445 = vadd.f32 %v5011, %v5444
        %5446 = vdwg.mxu0
        %5447 = vmatprep.subr.bf16.mxu0 %v5239
        %5448 = vmatpush1.bf16.msra.mxu0 %v5238
        %5449 = vmatprep.subr.bf16.mxu0 %v5241
        %5450 = vmatpush1.bf16.msra.mxu0 %v5240
        %5451 = vmatprep.subr.bf16.mxu0 %v5243
        %5452 = vmatpush1.bf16.msra.mxu0 %v5242
        %5453 = vmatprep.subr.bf16.mxu0 %v5245
        %5454 = vmatpush1.bf16.msra.mxu0 %v5244
        %5455 = vmatprep.subr.bf16.mxu0 %v5247
        %5456 = vmatpush1.bf16.msra.mxu0 %v5246
        %5457 = vmatprep.subr.bf16.mxu0 %v5249
        %5458 = vmatpush1.bf16.msra.mxu0 %v5248
        %5459 = vmatprep.subr.bf16.mxu0 %v5251
        %5460 = vmatpush1.bf16.msra.mxu0 %v5250
        %5461 = vmatprep.subr.bf16.mxu0 %v5253
        %5462 = vmatpush1.bf16.msra.mxu0 %v5252
        %5463 = vmatprep.subr.bf16.mxu0 %v5255
        %5464 = vmatpush1.bf16.msra.mxu0 %v5254
        %5465 = vmatprep.subr.bf16.mxu0 %v5257
        %5466 = vmatpush1.bf16.msra.mxu0 %v5256
        %5467 = vmatprep.subr.bf16.mxu0 %v5259
        %5468 = vmatpush1.bf16.msra.mxu0 %v5258
        %5469 = vmatprep.subr.bf16.mxu0 %v5261
        %5470 = vmatpush1.bf16.msra.mxu0 %v5260
        %5471 = vmatprep.subr.bf16.mxu0 %v5263
        %5472 = vmatpush1.bf16.msra.mxu0 %v5262
        %5473 = vmatprep.subr.bf16.mxu0 %v5265
        %5474 = vmatpush1.bf16.msra.mxu0 %v5264
        %5475 = vmatprep.subr.bf16.mxu0 %v5267
        %5476 = vmatpush1.bf16.msra.mxu0 %v5266
        %5477 = vmatprep.subr.bf16.mxu0 %v5269
        %5478 = vmatpush1.bf16.msra.mxu0 %v5268
        %5479 = vmatprep.mubr.bf16.mxu0 %v4909
        %5480 = vmatmul.mubr.bf16.gmra.mrb[0].mxu0 %v4908
        %v5481 = vpop.f32.mrb[0].mxu0
        %v5482 = vadd.f32 %v5369, %v5481
        %v5483 = vpop.f32.mrb[0].mxu0
        %v5484 = vadd.f32 %v5371, %v5483
        %v5485 = vpop.f32.mrb[0].mxu0
        %v5486 = vadd.f32 %v5373, %v5485
        %v5487 = vpop.f32.mrb[0].mxu0
        %v5488 = vadd.f32 %v5375, %v5487
        %5489 = vmatprep.mubr.bf16.mxu0 %v4913
        %5490 = vmatmul.mubr.bf16.gmra.mrb[0].mxu0 %v4912
        %v5491 = vpop.f32.mrb[0].mxu0
        %v5492 = vadd.f32 %v5379, %v5491
        %v5493 = vpop.f32.mrb[0].mxu0
        %v5494 = vadd.f32 %v5381, %v5493
        %v5495 = vpop.f32.mrb[0].mxu0
        %v5496 = vadd.f32 %v5383, %v5495
        %v5497 = vpop.f32.mrb[0].mxu0
        %v5498 = vadd.f32 %v5385, %v5497
        %5499 = vmatprep.mubr.bf16.mxu0 %v4917
        %5500 = vmatmul.mubr.bf16.gmra.mrb[0].mxu0 %v4916
        %v5501 = vpop.f32.mrb[0].mxu0
        %v5502 = vadd.f32 %v5389, %v5501
        %v5503 = vpop.f32.mrb[0].mxu0
        %v5504 = vadd.f32 %v5391, %v5503
        %v5505 = vpop.f32.mrb[0].mxu0
        %v5506 = vadd.f32 %v5393, %v5505
        %v5507 = vpop.f32.mrb[0].mxu0
        %v5508 = vadd.f32 %v5395, %v5507
        %5509 = vmatprep.mubr.bf16.mxu0 %v4921
        %5510 = vmatmul.mubr.bf16.gmra.mrb[0].mxu0 %v4920
        %v5511 = vpop.f32.mrb[0].mxu0
        %v5512 = vadd.f32 %v5399, %v5511
        %v5513 = vpop.f32.mrb[0].mxu0
        %v5514 = vadd.f32 %v5401, %v5513
        %v5515 = vpop.f32.mrb[0].mxu0
        %v5516 = vadd.f32 %v5403, %v5515
        %v5517 = vpop.f32.mrb[0].mxu0
        %v5518 = vadd.f32 %v5405, %v5517
        %5519 = vmatprep.mubr.bf16.mxu0 %v4925
        %5520 = vmatmul.mubr.bf16.gmra.mrb[0].mxu0 %v4924
        %v5521 = vpop.f32.mrb[0].mxu0
        %v5522 = vadd.f32 %v5409, %v5521
        %v5523 = vpop.f32.mrb[0].mxu0
        %v5524 = vadd.f32 %v5411, %v5523
        %v5525 = vpop.f32.mrb[0].mxu0
        %v5526 = vadd.f32 %v5413, %v5525
        %v5527 = vpop.f32.mrb[0].mxu0
        %v5528 = vadd.f32 %v5415, %v5527
        %5529 = vmatprep.mubr.bf16.mxu0 %v4929
        %5530 = vmatmul.mubr.bf16.gmra.mrb[0].mxu0 %v4928
        %v5531 = vpop.f32.mrb[0].mxu0
        %v5532 = vadd.f32 %v5419, %v5531
        %v5533 = vpop.f32.mrb[0].mxu0
        %v5534 = vadd.f32 %v5421, %v5533
        %v5535 = vpop.f32.mrb[0].mxu0
        %v5536 = vadd.f32 %v5423, %v5535
        %v5537 = vpop.f32.mrb[0].mxu0
        %v5538 = vadd.f32 %v5425, %v5537
        %5539 = vmatprep.mubr.bf16.mxu0 %v4933
        %5540 = vmatmul.mubr.bf16.gmra.mrb[0].mxu0 %v4932
        %v5541 = vpop.f32.mrb[0].mxu0
        %v5542 = vadd.f32 %v5429, %v5541
        %v5543 = vpop.f32.mrb[0].mxu0
        %v5544 = vadd.f32 %v5431, %v5543
        %v5545 = vpop.f32.mrb[0].mxu0
        %v5546 = vadd.f32 %v5433, %v5545
        %v5547 = vpop.f32.mrb[0].mxu0
        %v5548 = vadd.f32 %v5435, %v5547
        %5549 = vmatprep.mubr.bf16.mxu0 %v4937
        %5550 = vmatmul.mubr.bf16.gmra.mrb[0].mxu0 %v4936
        %v5551 = vpop.f32.mrb[0].mxu0
        %v5552 = vadd.f32 %v5439, %v5551
        %v5553 = vpop.f32.mrb[0].mxu0
        %v5554 = vadd.f32 %v5441, %v5553
        %v5555 = vpop.f32.mrb[0].mxu0
        %v5556 = vadd.f32 %v5443, %v5555
        %v5557 = vpop.f32.mrb[0].mxu0
        %v5558 = vadd.f32 %v5445, %v5557
        %5559 = vdwg.mxu0
        %vm5560 = vcmp.gt.f32.partialorder %v5482, 0.0
        %vm5561 = vcmp.gt.f32.partialorder %v5484, 0.0
        %vm5562 = vcmp.gt.f32.partialorder %v5486, 0.0
        %vm5563 = vcmp.gt.f32.partialorder %v5488, 0.0
        %vm5564 = vcmp.gt.f32.partialorder %v5492, 0.0
        %vm5565 = vcmp.gt.f32.partialorder %v5494, 0.0
        %vm5566 = vcmp.gt.f32.partialorder %v5496, 0.0
        %vm5567 = vcmp.gt.f32.partialorder %v5498, 0.0
        %vm5568 = vcmp.gt.f32.partialorder %v5502, 0.0
        %vm5569 = vcmp.gt.f32.partialorder %v5504, 0.0
        %vm5570 = vcmp.gt.f32.partialorder %v5506, 0.0
        %vm5571 = vcmp.gt.f32.partialorder %v5508, 0.0
        %vm5572 = vcmp.gt.f32.partialorder %v5512, 0.0
        %vm5573 = vcmp.gt.f32.partialorder %v5514, 0.0
        %vm5574 = vcmp.gt.f32.partialorder %v5516, 0.0
        %vm5575 = vcmp.gt.f32.partialorder %v5518, 0.0
        %vm5576 = vcmp.gt.f32.partialorder %v5522, 0.0
        %vm5577 = vcmp.gt.f32.partialorder %v5524, 0.0
        %vm5578 = vcmp.gt.f32.partialorder %v5526, 0.0
        %vm5579 = vcmp.gt.f32.partialorder %v5528, 0.0
        %vm5580 = vcmp.gt.f32.partialorder %v5532, 0.0
        %vm5581 = vcmp.gt.f32.partialorder %v5534, 0.0
        %vm5582 = vcmp.gt.f32.partialorder %v5536, 0.0
        %vm5583 = vcmp.gt.f32.partialorder %v5538, 0.0
        %vm5584 = vcmp.gt.f32.partialorder %v5542, 0.0
        %vm5585 = vcmp.gt.f32.partialorder %v5544, 0.0
        %vm5586 = vcmp.gt.f32.partialorder %v5546, 0.0
        %vm5587 = vcmp.gt.f32.partialorder %v5548, 0.0
        %vm5588 = vcmp.gt.f32.partialorder %v5552, 0.0
        %vm5589 = vcmp.gt.f32.partialorder %v5554, 0.0
        %vm5590 = vcmp.gt.f32.partialorder %v5556, 0.0
        %vm5591 = vcmp.gt.f32.partialorder %v5558, 0.0
        %v5592 = vmul.f32 %v5482, 0.01
        %v5593 = vmul.f32 %v5484, 0.01
        %v5594 = vmul.f32 %v5486, 0.01
        %v5595 = vmul.f32 %v5488, 0.01
        %v5596 = vmul.f32 %v5492, 0.01
        %v5597 = vmul.f32 %v5494, 0.01
        %v5598 = vmul.f32 %v5496, 0.01
        %v5599 = vmul.f32 %v5498, 0.01
        %v5600 = vmul.f32 %v5502, 0.01
        %v5601 = vmul.f32 %v5504, 0.01
        %v5602 = vmul.f32 %v5506, 0.01
        %v5603 = vmul.f32 %v5508, 0.01
        %v5604 = vmul.f32 %v5512, 0.01
        %v5605 = vmul.f32 %v5514, 0.01
        %v5606 = vmul.f32 %v5516, 0.01
        %v5607 = vmul.f32 %v5518, 0.01
        %v5608 = vmul.f32 %v5522, 0.01
        %v5609 = vmul.f32 %v5524, 0.01
        %v5610 = vmul.f32 %v5526, 0.01
        %v5611 = vmul.f32 %v5528, 0.01
        %v5612 = vmul.f32 %v5532, 0.01
        %v5613 = vmul.f32 %v5534, 0.01
        %v5614 = vmul.f32 %v5536, 0.01
        %v5615 = vmul.f32 %v5538, 0.01
        %v5616 = vmul.f32 %v5542, 0.01
        %v5617 = vmul.f32 %v5544, 0.01
        %v5618 = vmul.f32 %v5546, 0.01
        %v5619 = vmul.f32 %v5548, 0.01
        %v5620 = vmul.f32 %v5552, 0.01
        %v5621 = vmul.f32 %v5554, 0.01
        %v5622 = vmul.f32 %v5556, 0.01
        %v5623 = vmul.f32 %v5558, 0.01
        %v5624 = vsel %vm5560, %v5482, %v5592
        %v5625 = vsel %vm5561, %v5484, %v5593
        %v5626 = vsel %vm5562, %v5486, %v5594
        %v5627 = vsel %vm5563, %v5488, %v5595
        %v5628 = vsel %vm5564, %v5492, %v5596
        %v5629 = vsel %vm5565, %v5494, %v5597
        %v5630 = vsel %vm5566, %v5496, %v5598
        %v5631 = vsel %vm5567, %v5498, %v5599
        %v5632 = vsel %vm5568, %v5502, %v5600
        %v5633 = vsel %vm5569, %v5504, %v5601
        %v5634 = vsel %vm5570, %v5506, %v5602
        %v5635 = vsel %vm5571, %v5508, %v5603
        %v5636 = vsel %vm5572, %v5512, %v5604
        %v5637 = vsel %vm5573, %v5514, %v5605
        %v5638 = vsel %vm5574, %v5516, %v5606
        %v5639 = vsel %vm5575, %v5518, %v5607
        %v5640 = vsel %vm5576, %v5522, %v5608
        %v5641 = vsel %vm5577, %v5524, %v5609
        %v5642 = vsel %vm5578, %v5526, %v5610
        %v5643 = vsel %vm5579, %v5528, %v5611
        %v5644 = vsel %vm5580, %v5532, %v5612
        %v5645 = vsel %vm5581, %v5534, %v5613
        %v5646 = vsel %vm5582, %v5536, %v5614
        %v5647 = vsel %vm5583, %v5538, %v5615
        %v5648 = vsel %vm5584, %v5542, %v5616
        %v5649 = vsel %vm5585, %v5544, %v5617
        %v5650 = vsel %vm5586, %v5546, %v5618
        %v5651 = vsel %vm5587, %v5548, %v5619
        %v5652 = vsel %vm5588, %v5552, %v5620
        %v5653 = vsel %vm5589, %v5554, %v5621
        %v5654 = vsel %vm5590, %v5556, %v5622
        %v5655 = vsel %vm5591, %v5558, %v5623
        %v5656 = vpack.c.bf16 %v5626, %v5624
        %v5657 = vpack.c.bf16 %v5627, %v5625
        %v5658 = vpack.c.bf16 %v5630, %v5628
        %v5659 = vpack.c.bf16 %v5631, %v5629
        %v5660 = vpack.c.bf16 %v5634, %v5632
        %v5661 = vpack.c.bf16 %v5635, %v5633
        %v5662 = vpack.c.bf16 %v5638, %v5636
        %v5663 = vpack.c.bf16 %v5639, %v5637
        %v5664 = vpack.c.bf16 %v5642, %v5640
        %v5665 = vpack.c.bf16 %v5643, %v5641
        %v5666 = vpack.c.bf16 %v5646, %v5644
        %v5667 = vpack.c.bf16 %v5647, %v5645
        %v5668 = vpack.c.bf16 %v5650, %v5648
        %v5669 = vpack.c.bf16 %v5651, %v5649
        %v5670 = vpack.c.bf16 %v5654, %v5652
        %v5671 = vpack.c.bf16 %v5655, %v5653
        %v5672 = vld [vmem:[#allocation11] sm:$0xf]
        %v5673 = vld [vmem:[#allocation11 + $0x4] sm:$0xf]
        %v5674 = vld [vmem:[#allocation11 + $0x8] sm:$0xf]
        %v5675 = vld [vmem:[#allocation11 + $0xc] sm:$0xf]
        %v5676 = vld [vmem:[#allocation11 + $0x10] sm:$0xf]
        %v5677 = vld [vmem:[#allocation11 + $0x14] sm:$0xf]
        %v5678 = vld [vmem:[#allocation11 + $0x18] sm:$0xf]
        %v5679 = vld [vmem:[#allocation11 + $0x1c] sm:$0xf]
        %v5680 = vld [vmem:[#allocation11 + $0x20] sm:$0xf]
        %v5681 = vld [vmem:[#allocation11 + $0x24] sm:$0xf]
        %v5682 = vld [vmem:[#allocation11 + $0x28] sm:$0xf]
        %v5683 = vld [vmem:[#allocation11 + $0x2c] sm:$0xf]
        %v5684 = vld [vmem:[#allocation11 + $0x30] sm:$0xf]
        %v5685 = vld [vmem:[#allocation11 + $0x34] sm:$0xf]
        %v5686 = vld [vmem:[#allocation11 + $0x38] sm:$0xf]
        %v5687 = vld [vmem:[#allocation11 + $0x3c] sm:$0xf]
        %v5688 = vld [vmem:[#allocation11 + $0x40] sm:$0xf]
        %v5689 = vld [vmem:[#allocation11 + $0x44] sm:$0xf]
        %v5690 = vld [vmem:[#allocation11 + $0x48] sm:$0xf]
        %v5691 = vld [vmem:[#allocation11 + $0x4c] sm:$0xf]
        %v5692 = vld [vmem:[#allocation11 + $0x50] sm:$0xf]
        %v5693 = vld [vmem:[#allocation11 + $0x54] sm:$0xf]
        %v5694 = vld [vmem:[#allocation11 + $0x58] sm:$0xf]
        %v5695 = vld [vmem:[#allocation11 + $0x5c] sm:$0xf]
        %v5696 = vld [vmem:[#allocation11 + $0x60] sm:$0xf]
        %v5697 = vld [vmem:[#allocation11 + $0x64] sm:$0xf]
        %v5698 = vld [vmem:[#allocation11 + $0x68] sm:$0xf]
        %v5699 = vld [vmem:[#allocation11 + $0x6c] sm:$0xf]
        %v5700 = vld [vmem:[#allocation11 + $0x70] sm:$0xf]
        %v5701 = vld [vmem:[#allocation11 + $0x74] sm:$0xf]
        %v5702 = vld [vmem:[#allocation11 + $0x78] sm:$0xf]
        %v5703 = vld [vmem:[#allocation11 + $0x7c] sm:$0xf]
        %v5704 = vld [vmem:[%s8] sm:$0x1]
        %v5706 = vlaneseq
        %v5707 = vshrl.u32 %v5706, 7
        %v5708 = vsub.s32 0, %v5707
        %v5709 = vrot.slane %v5704, %v5708
        %v5743 = vunpack.c.l.b16 %v5672
        %v5744 = vunpack.c.l.b16 %v5673
        %v5745 = vunpack.c.l.b16 %v5674
        %v5746 = vunpack.c.l.b16 %v5675
        %v5747 = vunpack.c.l.b16 %v5676
        %v5748 = vunpack.c.l.b16 %v5677
        %v5749 = vunpack.c.l.b16 %v5678
        %v5750 = vunpack.c.l.b16 %v5679
        %v5751 = vunpack.c.l.b16 %v5680
        %v5752 = vunpack.c.l.b16 %v5681
        %v5753 = vunpack.c.l.b16 %v5682
        %v5754 = vunpack.c.l.b16 %v5683
        %v5755 = vunpack.c.l.b16 %v5684
        %v5756 = vunpack.c.l.b16 %v5685
        %v5757 = vunpack.c.l.b16 %v5686
        %v5758 = vunpack.c.l.b16 %v5687
        %v5759 = vunpack.c.l.b16 %v5688
        %v5760 = vunpack.c.l.b16 %v5689
        %v5761 = vunpack.c.l.b16 %v5690
        %v5762 = vunpack.c.l.b16 %v5691
        %v5763 = vunpack.c.l.b16 %v5692
        %v5764 = vunpack.c.l.b16 %v5693
        %v5765 = vunpack.c.l.b16 %v5694
        %v5766 = vunpack.c.l.b16 %v5695
        %v5767 = vunpack.c.l.b16 %v5696
        %v5768 = vunpack.c.l.b16 %v5697
        %v5769 = vunpack.c.l.b16 %v5698
        %v5770 = vunpack.c.l.b16 %v5699
        %v5771 = vunpack.c.l.b16 %v5700
        %v5772 = vunpack.c.l.b16 %v5701
        %v5773 = vunpack.c.l.b16 %v5702
        %v5774 = vunpack.c.l.b16 %v5703
        %v5775 = vpack.c.b16 %v5744, %v5743
        %v5776 = vpack.c.b16 %v5746, %v5745
        %v5777 = vpack.c.b16 %v5748, %v5747
        %v5778 = vpack.c.b16 %v5750, %v5749
        %v5779 = vpack.c.b16 %v5752, %v5751
        %v5780 = vpack.c.b16 %v5754, %v5753
        %v5781 = vpack.c.b16 %v5756, %v5755
        %v5782 = vpack.c.b16 %v5758, %v5757
        %v5783 = vpack.c.b16 %v5760, %v5759
        %v5784 = vpack.c.b16 %v5762, %v5761
        %v5785 = vpack.c.b16 %v5764, %v5763
        %v5786 = vpack.c.b16 %v5766, %v5765
        %v5787 = vpack.c.b16 %v5768, %v5767
        %v5788 = vpack.c.b16 %v5770, %v5769
        %v5789 = vpack.c.b16 %v5772, %v5771
        %v5790 = vpack.c.b16 %v5774, %v5773
        %5807 = vmatprep.subr.bf16.mxu0 0
        %5808 = vmatpush1.bf16.msra.mxu0 %v5775
        %5809 = vmatprep.subr.bf16.mxu0 0
        %5810 = vmatpush1.bf16.msra.mxu0 %v5776
        %5811 = vmatprep.subr.bf16.mxu0 0
        %5812 = vmatpush1.bf16.msra.mxu0 %v5777
        %5813 = vmatprep.subr.bf16.mxu0 0
        %5814 = vmatpush1.bf16.msra.mxu0 %v5778
        %5815 = vmatprep.subr.bf16.mxu0 0
        %5816 = vmatpush1.bf16.msra.mxu0 %v5779
        %5817 = vmatprep.subr.bf16.mxu0 0
        %5818 = vmatpush1.bf16.msra.mxu0 %v5780
        %5819 = vmatprep.subr.bf16.mxu0 0
        %5820 = vmatpush1.bf16.msra.mxu0 %v5781
        %5821 = vmatprep.subr.bf16.mxu0 0
        %5822 = vmatpush1.bf16.msra.mxu0 %v5782
        %5823 = vmatprep.subr.bf16.mxu0 0
        %5824 = vmatpush1.bf16.msra.mxu0 %v5783
        %5825 = vmatprep.subr.bf16.mxu0 0
        %5826 = vmatpush1.bf16.msra.mxu0 %v5784
        %5827 = vmatprep.subr.bf16.mxu0 0
        %5828 = vmatpush1.bf16.msra.mxu0 %v5785
        %5829 = vmatprep.subr.bf16.mxu0 0
        %5830 = vmatpush1.bf16.msra.mxu0 %v5786
        %5831 = vmatprep.subr.bf16.mxu0 0
        %5832 = vmatpush1.bf16.msra.mxu0 %v5787
        %5833 = vmatprep.subr.bf16.mxu0 0
        %5834 = vmatpush1.bf16.msra.mxu0 %v5788
        %5835 = vmatprep.subr.bf16.mxu0 0
        %5836 = vmatpush1.bf16.msra.mxu0 %v5789
        %5837 = vmatprep.subr.bf16.mxu0 0
        %5838 = vmatpush1.bf16.msra.mxu0 %v5790
        %5839 = vmatprep.mubr.bf16.mxu0 %v5657
        %5840 = vmatmul.mubr.bf16.gmra.mrb[0].mxu0 %v5656
        %v5841 = vpop.f32.mrb[0].mxu0
        %v5842 = vadd.f32 %v5709, %v5841
        %v5843 = vpop.f32.mrb[0].mxu0
        %v5844 = vpop.f32.mrb[0].mxu0
        %v5845 = vadd.f32 %v5709, %v5844
        %v5846 = vpop.f32.mrb[0].mxu0
        %5847 = vmatprep.mubr.bf16.mxu0 %v5659
        %5848 = vmatmul.mubr.bf16.gmra.mrb[0].mxu0 %v5658
        %v5849 = vpop.f32.mrb[0].mxu0
        %v5850 = vadd.f32 %v5709, %v5849
        %v5851 = vpop.f32.mrb[0].mxu0
        %v5852 = vpop.f32.mrb[0].mxu0
        %v5853 = vadd.f32 %v5709, %v5852
        %v5854 = vpop.f32.mrb[0].mxu0
        %5855 = vmatprep.mubr.bf16.mxu0 %v5661
        %5856 = vmatmul.mubr.bf16.gmra.mrb[0].mxu0 %v5660
        %v5857 = vpop.f32.mrb[0].mxu0
        %v5858 = vadd.f32 %v5709, %v5857
        %v5859 = vpop.f32.mrb[0].mxu0
        %v5860 = vpop.f32.mrb[0].mxu0
        %v5861 = vadd.f32 %v5709, %v5860
        %v5862 = vpop.f32.mrb[0].mxu0
        %5863 = vmatprep.mubr.bf16.mxu0 %v5663
        %5864 = vmatmul.mubr.bf16.gmra.mrb[0].mxu0 %v5662
        %v5865 = vpop.f32.mrb[0].mxu0
        %v5866 = vadd.f32 %v5709, %v5865
        %v5867 = vpop.f32.mrb[0].mxu0
        %v5868 = vpop.f32.mrb[0].mxu0
        %v5869 = vadd.f32 %v5709, %v5868
        %v5870 = vpop.f32.mrb[0].mxu0
        %5871 = vmatprep.mubr.bf16.mxu0 %v5665
        %5872 = vmatmul.mubr.bf16.gmra.mrb[0].mxu0 %v5664
        %v5873 = vpop.f32.mrb[0].mxu0
        %v5874 = vadd.f32 %v5709, %v5873
        %v5875 = vpop.f32.mrb[0].mxu0
        %v5876 = vpop.f32.mrb[0].mxu0
        %v5877 = vadd.f32 %v5709, %v5876
        %v5878 = vpop.f32.mrb[0].mxu0
        %5879 = vmatprep.mubr.bf16.mxu0 %v5667
        %5880 = vmatmul.mubr.bf16.gmra.mrb[0].mxu0 %v5666
        %v5881 = vpop.f32.mrb[0].mxu0
        %v5882 = vadd.f32 %v5709, %v5881
        %v5883 = vpop.f32.mrb[0].mxu0
        %v5884 = vpop.f32.mrb[0].mxu0
        %v5885 = vadd.f32 %v5709, %v5884
        %v5886 = vpop.f32.mrb[0].mxu0
        %5887 = vmatprep.mubr.bf16.mxu0 %v5669
        %5888 = vmatmul.mubr.bf16.gmra.mrb[0].mxu0 %v5668
        %v5889 = vpop.f32.mrb[0].mxu0
        %v5890 = vadd.f32 %v5709, %v5889
        %v5891 = vpop.f32.mrb[0].mxu0
        %v5892 = vpop.f32.mrb[0].mxu0
        %v5893 = vadd.f32 %v5709, %v5892
        %v5894 = vpop.f32.mrb[0].mxu0
        %5895 = vmatprep.mubr.bf16.mxu0 %v5671
        %5896 = vmatmul.mubr.bf16.gmra.mrb[0].mxu0 %v5670
        %v5897 = vpop.f32.mrb[0].mxu0
        %v5898 = vadd.f32 %v5709, %v5897
        %v5899 = vpop.f32.mrb[0].mxu0
        %v5900 = vpop.f32.mrb[0].mxu0
        %v5901 = vadd.f32 %v5709, %v5900
        %v5902 = vpop.f32.mrb[0].mxu0
        %5903 = vdwg.mxu0
        %vm5904 = vcmp.gt.f32.partialorder %v5842, 0.0
        %vm5905 = vcmp.gt.f32.partialorder %v5845, 0.0
        %vm5906 = vcmp.gt.f32.partialorder %v5850, 0.0
        %vm5907 = vcmp.gt.f32.partialorder %v5853, 0.0
        %vm5908 = vcmp.gt.f32.partialorder %v5858, 0.0
        %vm5909 = vcmp.gt.f32.partialorder %v5861, 0.0
        %vm5910 = vcmp.gt.f32.partialorder %v5866, 0.0
        %vm5911 = vcmp.gt.f32.partialorder %v5869, 0.0
        %vm5912 = vcmp.gt.f32.partialorder %v5874, 0.0
        %vm5913 = vcmp.gt.f32.partialorder %v5877, 0.0
        %vm5914 = vcmp.gt.f32.partialorder %v5882, 0.0
        %vm5915 = vcmp.gt.f32.partialorder %v5885, 0.0
        %vm5916 = vcmp.gt.f32.partialorder %v5890, 0.0
        %vm5917 = vcmp.gt.f32.partialorder %v5893, 0.0
        %vm5918 = vcmp.gt.f32.partialorder %v5898, 0.0
        %vm5919 = vcmp.gt.f32.partialorder %v5901, 0.0
        %v5920 = vmul.f32 %v5842, 0.01
        %v5921 = vmul.f32 %v5845, 0.01
        %v5922 = vmul.f32 %v5850, 0.01
        %v5923 = vmul.f32 %v5853, 0.01
        %v5924 = vmul.f32 %v5858, 0.01
        %v5925 = vmul.f32 %v5861, 0.01
        %v5926 = vmul.f32 %v5866, 0.01
        %v5927 = vmul.f32 %v5869, 0.01
        %v5928 = vmul.f32 %v5874, 0.01
        %v5929 = vmul.f32 %v5877, 0.01
        %v5930 = vmul.f32 %v5882, 0.01
        %v5931 = vmul.f32 %v5885, 0.01
        %v5932 = vmul.f32 %v5890, 0.01
        %v5933 = vmul.f32 %v5893, 0.01
        %v5934 = vmul.f32 %v5898, 0.01
        %v5935 = vmul.f32 %v5901, 0.01
        %v5936 = vsel %vm5904, %v5842, %v5920
        %v5937 = vsel %vm5905, %v5845, %v5921
        %v5938 = vsel %vm5906, %v5850, %v5922
        %v5939 = vsel %vm5907, %v5853, %v5923
        %v5940 = vsel %vm5908, %v5858, %v5924
        %v5941 = vsel %vm5909, %v5861, %v5925
        %v5942 = vsel %vm5910, %v5866, %v5926
        %v5943 = vsel %vm5911, %v5869, %v5927
        %v5944 = vsel %vm5912, %v5874, %v5928
        %v5945 = vsel %vm5913, %v5877, %v5929
        %v5946 = vsel %vm5914, %v5882, %v5930
        %v5947 = vsel %vm5915, %v5885, %v5931
        %v5948 = vsel %vm5916, %v5890, %v5932
        %v5949 = vsel %vm5917, %v5893, %v5933
        %v5950 = vsel %vm5918, %v5898, %v5934
        %v5951 = vsel %vm5919, %v5901, %v5935
        %v5952 = vpack.c.bf16 %v5937, %v5936
        %v5953 = vpack.c.bf16 %v5939, %v5938
        %v5954 = vpack.c.bf16 %v5941, %v5940
        %v5955 = vpack.c.bf16 %v5943, %v5942
        %v5956 = vpack.c.bf16 %v5945, %v5944
        %v5957 = vpack.c.bf16 %v5947, %v5946
        %v5958 = vpack.c.bf16 %v5949, %v5948
        %v5959 = vpack.c.bf16 %v5951, %v5950
        %v5960 = vld [vmem:[#allocation13] sm:$0xf]
        %v5961 = vld [vmem:[#allocation13 + $0x4] sm:$0xf]
        %v5962 = vld [vmem:[#allocation13 + $0x8] sm:$0xf]
        %v5963 = vld [vmem:[#allocation13 + $0xc] sm:$0xf]
        %v5964 = vld [vmem:[#allocation13 + $0x10] sm:$0xf]
        %v5965 = vld [vmem:[#allocation13 + $0x14] sm:$0xf]
        %v5966 = vld [vmem:[#allocation13 + $0x18] sm:$0xf]
        %v5967 = vld [vmem:[#allocation13 + $0x1c] sm:$0xf]
        %v5968 = vld [vmem:[#allocation13 + $0x20] sm:$0xf]
        %v5969 = vld [vmem:[#allocation13 + $0x24] sm:$0xf]
        %v5970 = vld [vmem:[#allocation13 + $0x28] sm:$0xf]
        %v5971 = vld [vmem:[#allocation13 + $0x2c] sm:$0xf]
        %v5972 = vld [vmem:[#allocation13 + $0x30] sm:$0xf]
        %v5973 = vld [vmem:[#allocation13 + $0x34] sm:$0xf]
        %v5974 = vld [vmem:[#allocation13 + $0x38] sm:$0xf]
        %v5975 = vld [vmem:[#allocation13 + $0x3c] sm:$0xf]
        %v5976 = vld [vmem:[%s10] sm:$0x1]
        %v5978 = vlaneseq
        %v5979 = vshrl.u32 %v5978, 7
        %v5980 = vsub.s32 0, %v5979
        %v5981 = vrot.slane %v5976, %v5980
        %v5999 = vunpack.c.l.b16 %v5960
        %v6000 = vunpack.c.l.b16 %v5961
        %v6001 = vunpack.c.l.b16 %v5962
        %v6002 = vunpack.c.l.b16 %v5963
        %v6003 = vunpack.c.l.b16 %v5964
        %v6004 = vunpack.c.l.b16 %v5965
        %v6005 = vunpack.c.l.b16 %v5966
        %v6006 = vunpack.c.l.b16 %v5967
        %v6007 = vunpack.c.l.b16 %v5968
        %v6008 = vunpack.c.l.b16 %v5969
        %v6009 = vunpack.c.l.b16 %v5970
        %v6010 = vunpack.c.l.b16 %v5971
        %v6011 = vunpack.c.l.b16 %v5972
        %v6012 = vunpack.c.l.b16 %v5973
        %v6013 = vunpack.c.l.b16 %v5974
        %v6014 = vunpack.c.l.b16 %v5975
        %v6015 = vpack.c.b16 %v6000, %v5999
        %v6016 = vpack.c.b16 %v6002, %v6001
        %v6017 = vpack.c.b16 %v6004, %v6003
        %v6018 = vpack.c.b16 %v6006, %v6005
        %v6019 = vpack.c.b16 %v6008, %v6007
        %v6020 = vpack.c.b16 %v6010, %v6009
        %v6021 = vpack.c.b16 %v6012, %v6011
        %v6022 = vpack.c.b16 %v6014, %v6013
        %6031 = vmatprep.subr.bf16.mxu0 0
        %6032 = vmatpush1.bf16.msra.mxu0 %v6015
        %6033 = vmatprep.subr.bf16.mxu0 0
        %6034 = vmatpush1.bf16.msra.mxu0 %v6016
        %6035 = vmatprep.subr.bf16.mxu0 0
        %6036 = vmatpush1.bf16.msra.mxu0 %v6017
        %6037 = vmatprep.subr.bf16.mxu0 0
        %6038 = vmatpush1.bf16.msra.mxu0 %v6018
        %6039 = vmatprep.subr.bf16.mxu0 0
        %6040 = vmatpush1.bf16.msra.mxu0 %v6019
        %6041 = vmatprep.subr.bf16.mxu0 0
        %6042 = vmatpush1.bf16.msra.mxu0 %v6020
        %6043 = vmatprep.subr.bf16.mxu0 0
        %6044 = vmatpush1.bf16.msra.mxu0 %v6021
        %6045 = vmatprep.subr.bf16.mxu0 0
        %6046 = vmatpush1.bf16.msra.mxu0 %v6022
        %6047 = vmatprep.subr.bf16.mxu0 0
        %6048 = vmatpush1.bf16.msra.mxu0 0
        %6049 = vmatprep.subr.bf16.mxu0 0
        %6050 = vmatpush1.bf16.msra.mxu0 0
        %6051 = vmatprep.subr.bf16.mxu0 0
        %6052 = vmatpush1.bf16.msra.mxu0 0
        %6053 = vmatprep.subr.bf16.mxu0 0
        %6054 = vmatpush1.bf16.msra.mxu0 0
        %6055 = vmatprep.subr.bf16.mxu0 0
        %6056 = vmatpush1.bf16.msra.mxu0 0
        %6057 = vmatprep.subr.bf16.mxu0 0
        %6058 = vmatpush1.bf16.msra.mxu0 0
        %6059 = vmatprep.subr.bf16.mxu0 0
        %6060 = vmatpush1.bf16.msra.mxu0 0
        %6061 = vmatprep.subr.bf16.mxu0 0
        %6062 = vmatpush1.bf16.msra.mxu0 0
        %6063 = vmatprep.mubr.bf16.mxu0 0
        %6064 = vmatmul.mubr.bf16.gmra.mrb[0].mxu0 %v5952
        %v6065 = vpop.f32.mrb[0].mxu0
        %v6066 = vadd.f32 %v5981, %v6065
        %v6067 = vpop.f32.mrb[0].mxu0
        %v6068 = vpop.f32.mrb[0].mxu0
        %v6069 = vadd.f32 %v5981, %v6068
        %v6070 = vpop.f32.mrb[0].mxu0
        %6071 = vmatprep.mubr.bf16.mxu0 0
        %6072 = vmatmul.mubr.bf16.gmra.mrb[0].mxu0 %v5953
        %v6073 = vpop.f32.mrb[0].mxu0
        %v6074 = vadd.f32 %v5981, %v6073
        %v6075 = vpop.f32.mrb[0].mxu0
        %v6076 = vpop.f32.mrb[0].mxu0
        %v6077 = vadd.f32 %v5981, %v6076
        %v6078 = vpop.f32.mrb[0].mxu0
        %6079 = vmatprep.mubr.bf16.mxu0 0
        %6080 = vmatmul.mubr.bf16.gmra.mrb[0].mxu0 %v5954
        %v6081 = vpop.f32.mrb[0].mxu0
        %v6082 = vadd.f32 %v5981, %v6081
        %v6083 = vpop.f32.mrb[0].mxu0
        %v6084 = vpop.f32.mrb[0].mxu0
        %v6085 = vadd.f32 %v5981, %v6084
        %v6086 = vpop.f32.mrb[0].mxu0
        %6087 = vmatprep.mubr.bf16.mxu0 0
        %6088 = vmatmul.mubr.bf16.gmra.mrb[0].mxu0 %v5955
        %v6089 = vpop.f32.mrb[0].mxu0
        %v6090 = vadd.f32 %v5981, %v6089
        %v6091 = vpop.f32.mrb[0].mxu0
        %v6092 = vpop.f32.mrb[0].mxu0
        %v6093 = vadd.f32 %v5981, %v6092
        %v6094 = vpop.f32.mrb[0].mxu0
        %6095 = vmatprep.mubr.bf16.mxu0 0
        %6096 = vmatmul.mubr.bf16.gmra.mrb[0].mxu0 %v5956
        %v6097 = vpop.f32.mrb[0].mxu0
        %v6098 = vadd.f32 %v5981, %v6097
        %v6099 = vpop.f32.mrb[0].mxu0
        %v6100 = vpop.f32.mrb[0].mxu0
        %v6101 = vadd.f32 %v5981, %v6100
        %v6102 = vpop.f32.mrb[0].mxu0
        %6103 = vmatprep.mubr.bf16.mxu0 0
        %6104 = vmatmul.mubr.bf16.gmra.mrb[0].mxu0 %v5957
        %v6105 = vpop.f32.mrb[0].mxu0
        %v6106 = vadd.f32 %v5981, %v6105
        %v6107 = vpop.f32.mrb[0].mxu0
        %v6108 = vpop.f32.mrb[0].mxu0
        %v6109 = vadd.f32 %v5981, %v6108
        %v6110 = vpop.f32.mrb[0].mxu0
        %6111 = vmatprep.mubr.bf16.mxu0 0
        %6112 = vmatmul.mubr.bf16.gmra.mrb[0].mxu0 %v5958
        %v6113 = vpop.f32.mrb[0].mxu0
        %v6114 = vadd.f32 %v5981, %v6113
        %v6115 = vpop.f32.mrb[0].mxu0
        %v6116 = vpop.f32.mrb[0].mxu0
        %v6117 = vadd.f32 %v5981, %v6116
        %v6118 = vpop.f32.mrb[0].mxu0
        %6119 = vmatprep.mubr.bf16.mxu0 0
        %6120 = vmatmul.mubr.bf16.gmra.mrb[0].mxu0 %v5959
        %v6121 = vpop.f32.mrb[0].mxu0
        %v6122 = vadd.f32 %v5981, %v6121
        %v6123 = vpop.f32.mrb[0].mxu0
        %v6124 = vpop.f32.mrb[0].mxu0
        %v6125 = vadd.f32 %v5981, %v6124
        %v6126 = vpop.f32.mrb[0].mxu0
        %6127 = vdwg.mxu0
        %v6128 = vlaneseq
        %v6129 = vand.u32 %v6128, 127
        %vm6130 = vcmp.lt.s32.totalorder %v6129, 10
        %v6131 = vsel %vm6130, %v6066, -inf
        %v6132 = vsel %vm6130, %v6069, -inf
        %v6133 = vsel %vm6130, %v6074, -inf
        %v6134 = vsel %vm6130, %v6077, -inf
        %v6135 = vsel %vm6130, %v6082, -inf
        %v6136 = vsel %vm6130, %v6085, -inf
        %v6137 = vsel %vm6130, %v6090, -inf
        %v6138 = vsel %vm6130, %v6093, -inf
        %v6139 = vsel %vm6130, %v6098, -inf
        %v6140 = vsel %vm6130, %v6101, -inf
        %v6141 = vsel %vm6130, %v6106, -inf
        %v6142 = vsel %vm6130, %v6109, -inf
        %v6143 = vsel %vm6130, %v6114, -inf
        %v6144 = vsel %vm6130, %v6117, -inf
        %v6145 = vsel %vm6130, %v6122, -inf
        %v6146 = vsel %vm6130, %v6125, -inf
        %6147 = vmax.xlane.f32.xlu0 %v6131
        %v6148 = vpop.xlane.xlu0 %6147
        %6149 = vmax.xlane.f32.xlu0 %v6132
        %v6150 = vpop.xlane.xlu0 %6149
        %6151 = vmax.xlane.f32.xlu0 %v6133
        %v6152 = vpop.xlane.xlu0 %6151
        %6153 = vmax.xlane.f32.xlu0 %v6134
        %v6154 = vpop.xlane.xlu0 %6153
        %6155 = vmax.xlane.f32.xlu0 %v6135
        %v6156 = vpop.xlane.xlu0 %6155
        %6157 = vmax.xlane.f32.xlu0 %v6136
        %v6158 = vpop.xlane.xlu0 %6157
        %6159 = vmax.xlane.f32.xlu0 %v6137
        %v6160 = vpop.xlane.xlu0 %6159
        %6161 = vmax.xlane.f32.xlu0 %v6138
        %v6162 = vpop.xlane.xlu0 %6161
        %6163 = vmax.xlane.f32.xlu0 %v6139
        %v6164 = vpop.xlane.xlu0 %6163
        %6165 = vmax.xlane.f32.xlu0 %v6140
        %v6166 = vpop.xlane.xlu0 %6165
        %6167 = vmax.xlane.f32.xlu0 %v6141
        %v6168 = vpop.xlane.xlu0 %6167
        %6169 = vmax.xlane.f32.xlu0 %v6142
        %v6170 = vpop.xlane.xlu0 %6169
        %6171 = vmax.xlane.f32.xlu0 %v6143
        %v6172 = vpop.xlane.xlu0 %6171
        %6173 = vmax.xlane.f32.xlu0 %v6144
        %v6174 = vpop.xlane.xlu0 %6173
        %6175 = vmax.xlane.f32.xlu0 %v6145
        %v6176 = vpop.xlane.xlu0 %6175
        %6177 = vmax.xlane.f32.xlu0 %v6146
        %v6178 = vpop.xlane.xlu0 %6177
        %v6179 = vsub.f32 %v6131, %v6148
        %v6180 = vsub.f32 %v6132, %v6150
        %v6181 = vsub.f32 %v6133, %v6152
        %v6182 = vsub.f32 %v6134, %v6154
        %v6183 = vsub.f32 %v6135, %v6156
        %v6184 = vsub.f32 %v6136, %v6158
        %v6185 = vsub.f32 %v6137, %v6160
        %v6186 = vsub.f32 %v6138, %v6162
        %v6187 = vsub.f32 %v6139, %v6164
        %v6188 = vsub.f32 %v6140, %v6166
        %v6189 = vsub.f32 %v6141, %v6168
        %v6190 = vsub.f32 %v6142, %v6170
        %v6191 = vsub.f32 %v6143, %v6172
        %v6192 = vsub.f32 %v6144, %v6174
        %v6193 = vsub.f32 %v6145, %v6176
        %v6194 = vsub.f32 %v6146, %v6178
        %v6195 = vmul.f32 %v6179, 1.442695
        %v6196 = vpow.pop %v6195
        %v6197 = vmul.f32 %v6180, 1.442695
        %v6198 = vpow.pop %v6197
        %v6199 = vmul.f32 %v6181, 1.442695
        %v6200 = vpow.pop %v6199
        %v6201 = vmul.f32 %v6182, 1.442695
        %v6202 = vpow.pop %v6201
        %v6203 = vmul.f32 %v6183, 1.442695
        %v6204 = vpow.pop %v6203
        %v6205 = vmul.f32 %v6184, 1.442695
        %v6206 = vpow.pop %v6205
        %v6207 = vmul.f32 %v6185, 1.442695
        %v6208 = vpow.pop %v6207
        %v6209 = vmul.f32 %v6186, 1.442695
        %v6210 = vpow.pop %v6209
        %v6211 = vmul.f32 %v6187, 1.442695
        %v6212 = vpow.pop %v6211
        %v6213 = vmul.f32 %v6188, 1.442695
        %v6214 = vpow.pop %v6213
        %v6215 = vmul.f32 %v6189, 1.442695
        %v6216 = vpow.pop %v6215
        %v6217 = vmul.f32 %v6190, 1.442695
        %v6218 = vpow.pop %v6217
        %v6219 = vmul.f32 %v6191, 1.442695
        %v6220 = vpow.pop %v6219
        %v6221 = vmul.f32 %v6192, 1.442695
        %v6222 = vpow.pop %v6221
        %v6223 = vmul.f32 %v6193, 1.442695
        %v6224 = vpow.pop %v6223
        %v6225 = vmul.f32 %v6194, 1.442695
        %v6226 = vpow.pop %v6225
        %6227 = vadd.xlane.f32.xlu0 %v6196
        %v6228 = vpop.xlane.xlu0 %6227
        %6229 = vadd.xlane.f32.xlu0 %v6198
        %v6230 = vpop.xlane.xlu0 %6229
        %6231 = vadd.xlane.f32.xlu0 %v6200
        %v6232 = vpop.xlane.xlu0 %6231
        %6233 = vadd.xlane.f32.xlu0 %v6202
        %v6234 = vpop.xlane.xlu0 %6233
        %6235 = vadd.xlane.f32.xlu0 %v6204
        %v6236 = vpop.xlane.xlu0 %6235
        %6237 = vadd.xlane.f32.xlu0 %v6206
        %v6238 = vpop.xlane.xlu0 %6237
        %6239 = vadd.xlane.f32.xlu0 %v6208
        %v6240 = vpop.xlane.xlu0 %6239
        %6241 = vadd.xlane.f32.xlu0 %v6210
        %v6242 = vpop.xlane.xlu0 %6241
        %6243 = vadd.xlane.f32.xlu0 %v6212
        %v6244 = vpop.xlane.xlu0 %6243
        %6245 = vadd.xlane.f32.xlu0 %v6214
        %v6246 = vpop.xlane.xlu0 %6245
        %6247 = vadd.xlane.f32.xlu0 %v6216
        %v6248 = vpop.xlane.xlu0 %6247
        %6249 = vadd.xlane.f32.xlu0 %v6218
        %v6250 = vpop.xlane.xlu0 %6249
        %6251 = vadd.xlane.f32.xlu0 %v6220
        %v6252 = vpop.xlane.xlu0 %6251
        %6253 = vadd.xlane.f32.xlu0 %v6222
        %v6254 = vpop.xlane.xlu0 %6253
        %6255 = vadd.xlane.f32.xlu0 %v6224
        %v6256 = vpop.xlane.xlu0 %6255
        %6257 = vadd.xlane.f32.xlu0 %v6226
        %v6258 = vpop.xlane.xlu0 %6257
        %v6259 = vrcp.pop %v6228
        %v6260 = vmul.f32 %v6196, %v6259
        %v6261 = vrcp.pop %v6230
        %v6262 = vmul.f32 %v6198, %v6261
        %v6263 = vrcp.pop %v6232
        %v6264 = vmul.f32 %v6200, %v6263
        %v6265 = vrcp.pop %v6234
        %v6266 = vmul.f32 %v6202, %v6265
        %v6267 = vrcp.pop %v6236
        %v6268 = vmul.f32 %v6204, %v6267
        %v6269 = vrcp.pop %v6238
        %v6270 = vmul.f32 %v6206, %v6269
        %v6271 = vrcp.pop %v6240
        %v6272 = vmul.f32 %v6208, %v6271
        %v6273 = vrcp.pop %v6242
        %v6274 = vmul.f32 %v6210, %v6273
        %v6275 = vrcp.pop %v6244
        %v6276 = vmul.f32 %v6212, %v6275
        %v6277 = vrcp.pop %v6246
        %v6278 = vmul.f32 %v6214, %v6277
        %v6279 = vrcp.pop %v6248
        %v6280 = vmul.f32 %v6216, %v6279
        %v6281 = vrcp.pop %v6250
        %v6282 = vmul.f32 %v6218, %v6281
        %v6283 = vrcp.pop %v6252
        %v6284 = vmul.f32 %v6220, %v6283
        %v6285 = vrcp.pop %v6254
        %v6286 = vmul.f32 %v6222, %v6285
        %v6287 = vrcp.pop %v6256
        %v6288 = vmul.f32 %v6224, %v6287
        %v6289 = vrcp.pop %v6258
        %v6290 = vmul.f32 %v6226, %v6289
        %6291 = vst [vmem:[%s490] sm:$0xff] %v6260
        %6292 = vst [vmem:[%s490 + $0x8] sm:$0xff] %v6262
        %6293 = vst [vmem:[%s490 + $0x10] sm:$0xff] %v6264
        %6294 = vst [vmem:[%s490 + $0x18] sm:$0xff] %v6266
        %6295 = vst [vmem:[%s490 + $0x20] sm:$0xff] %v6268
        %6296 = vst [vmem:[%s490 + $0x28] sm:$0xff] %v6270
        %6297 = vst [vmem:[%s490 + $0x30] sm:$0xff] %v6272
        %6298 = vst [vmem:[%s490 + $0x38] sm:$0xff] %v6274
        %6299 = vst [vmem:[%s490 + $0x40] sm:$0xff] %v6276
        %6300 = vst [vmem:[%s490 + $0x48] sm:$0xff] %v6278
        %6301 = vst [vmem:[%s490 + $0x50] sm:$0xff] %v6280
        %6302 = vst [vmem:[%s490 + $0x58] sm:$0xff] %v6282
        %6303 = vst [vmem:[%s490 + $0x60] sm:$0xff] %v6284
        %6304 = vst [vmem:[%s490 + $0x68] sm:$0xff] %v6286
        %6305 = vst [vmem:[%s490 + $0x70] sm:$0xff] %v6288
        %6306 = vst [vmem:[%s490 + $0x78] sm:$0xff] %v6290
        %s6307 = sand.u32 %s275, 1
        %s6308 = scalar_lea.sflag [#allocation4], %s6307
        %s6309 = sand.u32 %s275, 1
        %s6310 = smul.addr %s6309, 128
        %s6311 = scalar_lea.vmem [#allocation14], %s6310
        // Predicated region
        $region93: #{tpu_custom_call.1} parent=63 // pred_check
          %p6312 = pneg %p285
        $region94: #{tpu_custom_call.1} parent=63 // pred_check_branch
          %6314 = sbr.rel (%p6312) target = $region96
        $region95: #{tpu_custom_call.1} parent=63 // pred_region
          %s6315 = smul.u32 16, %s31
          %s6317 = ssub.s32 2048, 2048
          %6318 = vsyncadd %s6308, %s6317
          %s6319 = smul.addr %s6315, 128
          %s6320 = scalar_lea.hbm %s11, %s6319
          %s6321 = sshll.u32 %s6311, 4
          %s6322 = int_to_ptr.vmem [resolvable:$true] %s6321
          %6327 = dma.vmem_to_hbm [thread:$0]  %s6322, 2048, %s6320, %s6308, 128, 128, 8
        $region96: #{tpu_custom_call.1} parent=63 // pred_fallthru
          _
      $region64: #{tpu_custom_call.1} parent=5 // pred_fallthru
        _
      %p6328 = scmp.le.s32.totalorder 2, %s26
      // Predicated region
      $region97: #{tpu_custom_call.1} parent=5 // pred_check
        %p6329 = pneg %p6328
      $region98: #{tpu_custom_call.1} parent=5 // pred_check_branch
        %6331 = sbr.rel (%p6329) target = $region100
      $region99: #{tpu_custom_call.1} parent=5 // pred_region
        %s6332 = ssub.s32 %s26, 2
        // Predicated region
        $region101: #{tpu_custom_call.1} parent=99 // pred_check
          %p6333 = pneg %p291
        $region102: #{tpu_custom_call.1} parent=99 // pred_check_branch
          %6335 = sbr.rel (%p6333) target = $region104
        $region103: #{tpu_custom_call.1} parent=99 // pred_region
          %s6336 = sand.u32 %s276, 1
          %s6337 = scalar_lea.sflag [#allocation4], %s6336
          %s6338 = sand.u32 %s276, 1
          %s6339 = smul.addr %s6338, 128
          %s6340 = scalar_lea.vmem [#allocation14], %s6339
          %6341 = dma.done %s6337, 2048
        $region104: #{tpu_custom_call.1} parent=99 // pred_fallthru
          _
      $region100: #{tpu_custom_call.1} parent=5 // pred_fallthru
        _
    $region6: #{tpu_custom_call.1} parent=1 // loop_footer
      %s30 = sadd.s32 1, %s26
    $region7: #{tpu_custom_call.1} parent=1 // loop_footer_branch
      %25 = sbr.rel target = $region3
    $region8: #{tpu_custom_call.1} parent=1 // loop_exit
      _
    %6342 = vsyncpa [#allocation3], 1
    %s6343 = scalar_lea.sflag [#allocation3], 1
    %6344 = vsyncpa %s6343, 1
    %6345 = vsyncpa [#allocation6], 1
    %6346 = vsyncpa [#allocation9], 1
    %6347 = vsyncpa [#allocation12], 1
    %6348 = vsyncpa [#allocation4], 1
    %s6349 = scalar_lea.sflag [#allocation4], 1
    %6350 = vsyncpa %s6349, 1

</llo_original>
